<compile_context>
chip_gen: v5e
topology: v5e:2x2
jax: 0.10.0
libtpu: 0.0.40
codegen_flags: <defaults>
</compile_context>

<pallas_src>
import functools

import jax
import jax.numpy as jnp
from jax.experimental import pallas as pl
from jax.experimental.pallas import tpu as pltpu


# ----------------------------- Pallas kernel ---------------------------------
def _conv_bn_silu_kernel(x_ref, w_ref, b_ref, o_ref, acc_ref, *,
                         KH, KW, TH, Wo, stride, C1):
    """One (batch, output-row-tile, C2-tile) grid step.

    x_ref:   (Hp, Wp, C1)     bf16  padded input image (resident per batch elem)
    w_ref:   (KH*KW, C1, tn)  bf16  conv weight with BN scale folded in
    b_ref:   (1, tn)          f32   folded BN bias
    o_ref:   (TH, Wo, tn)     f32   activated output tile (lane-dense)
    acc_ref: (TH*Wo, tn)      f32   VMEM accumulator scratch
    """
    r = pl.program_id(1)
    row0 = pl.multiple_of(r * (TH * stride), TH * stride)
    tn = o_ref.shape[-1]

    # Fused im2col: accumulate one small matmul per conv tap (unrolled).
    for t in range(KH * KW):
        dy, dx = divmod(t, KW)
        if stride == 1:
            rows = pl.ds(row0 + dy, TH)
            cols = pl.ds(dx, Wo)
        else:
            rows = pl.ds(row0 + dy, TH, stride)
            cols = pl.ds(dx, Wo, stride)
        lhs = x_ref[rows, cols, :].reshape(TH * Wo, C1)            # bf16
        part = jnp.dot(lhs, w_ref[t], preferred_element_type=jnp.float32)
        if t == 0:
            acc_ref[...] = part
        else:
            acc_ref[...] += part

    y = acc_ref[...] + b_ref[...]          # BN (scale already folded into weight)
    y = y * jax.nn.sigmoid(y)              # SiLU (numerically stable)
    o_ref[...] = y.reshape(TH, Wo, tn).astype(o_ref.dtype)


# ------------------------------- wrapper --------------------------------------
def _round_up(x, m):
    return ((x + m - 1) // m) * m


def conv_bn_silu(x_nchw, weight, gamma, beta, running_mean, running_var, *,
                 stride=1, padding=None, eps=1e-5, out_dtype=jnp.float32):
    """act(bn(conv(x))): bias-free Conv2d + eval-mode BatchNorm2d + SiLU.

    x_nchw: (N, C1, H, W);  weight: (C2, C1, KH, KW)  (PyTorch layouts).
    Returns NCHW.  groups=1, dilation=1 path of the module.
    """
    # TODO(synk): groups>1 / dilation>1 Conv variants are not implemented.
    # TODO(synk): BN uses running stats (inference semantics); training-mode batch
    #             statistics are not computed here.
    N, C1, H, W = x_nchw.shape
    C2, C1w, KH, KW = weight.shape
    assert C1w == C1, "groups != 1 not supported"
    if padding is None:
        padding = KH // 2                                  # autopad

    Ho = (H + 2 * padding - KH) // stride + 1
    Wo = (W + 2 * padding - KW) // stride + 1
    Wp = W + 2 * padding

    # ---- tile selection ------------------------------------------------------
    C2p = _round_up(C2, 128)                               # pad C2 to lane multiple only
    tn = 256 if C2p % 256 == 0 else 128                    # 256-aligned when possible
    th = max(1, min(Ho, pl.cdiv(512, Wo)))                 # target ~512 matmul rows/step
    max_rows = max(1, (8 << 20) // (Wo * tn * 4))          # keep output block <= ~8 MiB
    th = max(1, min(th, max_rows))
    Ho_pad = pl.cdiv(Ho, th) * th

    # padded input rows needed so the last row tile never reads out of bounds
    pad_top = padding
    pad_bot = max(padding, (Ho_pad - 1) * stride + KH - H - padding)
    Hp = H + pad_top + pad_bot

    # ---- host-side prep (one fused pass each; no im2col blow-up) -------------
    x = jnp.transpose(x_nchw, (0, 2, 3, 1)).astype(jnp.float32)       # NCHW -> NHWC
    x = jnp.pad(x, ((0, 0), (pad_top, pad_bot), (padding, padding), (0, 0)))
    x = x.astype(jnp.bfloat16)                                        # bf16 stream

    scale = gamma / jnp.sqrt(running_var + eps)                       # (C2,)
    bias = beta - running_mean * scale                                # (C2,)
    w = jnp.transpose(weight.astype(jnp.float32), (2, 3, 1, 0))       # (KH,KW,C1,C2)
    w = (w * scale[None, None, None, :]).reshape(KH * KW, C1, C2)     # fold BN scale
    w_p = jnp.zeros((KH * KW, C1, C2p), jnp.bfloat16)
    w_p = w_p.at[:, :, :C2].set(w.astype(jnp.bfloat16))
    b_p = jnp.zeros((1, C2p), jnp.float32).at[0, :C2].set(bias)

    # ---- explicit VMEM budget (safe on v5e/v6e and v7x's 64 MiB/core) --------
    in_blk = Hp * Wp * C1 * 2
    out_blk = th * Wo * tn * jnp.dtype(out_dtype).itemsize
    w_blk = KH * KW * C1 * tn * 2 + tn * 4
    acc_blk = th * Wo * tn * 4
    need = 2 * (in_blk + out_blk + w_blk) + acc_blk        # double-buffered blocks
    vmem_limit = int(min(max(2 * need + (8 << 20), 32 << 20), 56 << 20))

    grid = (N, Ho_pad // th, C2p // tn)
    kernel = functools.partial(_conv_bn_silu_kernel, KH=KH, KW=KW, TH=th,
                               Wo=Wo, stride=stride, C1=C1)

    out = pl.pallas_call(
        kernel,
        out_shape=jax.ShapeDtypeStruct((N, Ho_pad, Wo, C2p), out_dtype),
        grid_spec=pltpu.PrefetchScalarGridSpec(
            num_scalar_prefetch=0,
            grid=grid,
            in_specs=[
                # whole padded image for batch n, resident across row / C2 tiles
                pl.BlockSpec((None, Hp, Wp, C1), lambda n, r, c: (n, 0, 0, 0)),
                pl.BlockSpec((KH * KW, C1, tn), lambda n, r, c: (0, 0, c)),
                pl.BlockSpec((1, tn), lambda n, r, c: (0, c)),
            ],
            out_specs=pl.BlockSpec((None, th, Wo, tn),
                                   lambda n, r, c: (n, r, 0, c)),
            scratch_shapes=[pltpu.VMEM((th * Wo, tn), jnp.float32)],
        ),
        compiler_params=pltpu.CompilerParams(
            dimension_semantics=("parallel", "parallel", "parallel"),
            vmem_limit_bytes=vmem_limit),
    )(x, w_p, b_p)

    # TODO(synk): for very large feature maps (padded image too big for VMEM),
    #             switch the input to memory_space=pl.ANY with manual halo-row DMA.

    # un-pad, back to NCHW (PyTorch interface)
    y = out[:, :Ho, :, :C2]
    return jnp.transpose(y, (0, 3, 1, 2)).astype(jnp.float32)


# ----------------------------- reference (pure JAX) ---------------------------
def _reference(x_nchw, weight, gamma, beta, mean, var, *, stride=1, padding=1,
               eps=1e-5):
    """Matches the kernel's numerics: BN scale folded into weight, bf16 operands."""
    scale = gamma / jnp.sqrt(var + eps)
    bias = beta - mean * scale
    w = weight.astype(jnp.float32) * scale[:, None, None, None]
    w = w.astype(jnp.bfloat16).astype(jnp.float32)          # same rounding point
    x = x_nchw.astype(jnp.bfloat16).astype(jnp.float32)
    y = jax.lax.conv_general_dilated(
        x, w, window_strides=(stride, stride),
        padding=((padding, padding), (padding, padding)),
        dimension_numbers=("NCHW", "OIHW", "NCHW"),
        precision=jax.lax.Precision.HIGHEST)
    y = y + bias[None, :, None, None]
    return y * jax.nn.sigmoid(y)


# ---------------------------------- main ---------------------------------------
if __name__ == "__main__":
    key = jax.random.PRNGKey(0)
    k_x, k_w, k_g, k_b, k_m, k_v = jax.random.split(key, 6)

    # Conv(c1=4, c2=8, k=3, s=1) -> autopad p=1
    N, C1, H, W = 2, 4, 16, 16
    C2, KH, KW = 8, 3, 3
    stride, padding = 1, 1

    x = jax.random.normal(k_x, (N, C1, H, W), jnp.float32)
    weight = jax.random.normal(k_w, (C2, C1, KH, KW), jnp.float32) * 0.1
    gamma = jax.random.uniform(k_g, (C2,), jnp.float32, 0.5, 1.5)
    beta = jax.random.normal(k_b, (C2,), jnp.float32) * 0.1
    running_mean = jax.random.normal(k_m, (C2,), jnp.float32) * 0.1
    running_var = jax.random.uniform(k_v, (C2,), jnp.float32, 0.5, 1.5)

    out = conv_bn_silu(x, weight, gamma, beta, running_mean, running_var,
                       stride=stride, padding=padding)
    out = jax.block_until_ready(out)

    ref = _reference(x, weight, gamma, beta, running_mean, running_var,
                     stride=stride, padding=padding)
    assert out.shape == (N, C2, H, W), out.shape
    assert jnp.allclose(out, ref, atol=1e-3, rtol=1e-3), \
        float(jnp.max(jnp.abs(out - ref)))

    print("KERNEL_OK")
</pallas_src>

<mosaic_0001>
module attributes {stable_mosaic.version = 11 : i64} {
  func.func @_conv_bn_silu_kernel(%arg0: i32, %arg1: i32, %arg2: i32, %arg3: memref<1x18x18x4xbf16, #tpu.memory_space<vmem>>, %arg4: memref<9x4x128xbf16, #tpu.memory_space<vmem>>, %arg5: memref<1x128xf32, #tpu.memory_space<vmem>>, %arg6: memref<1x16x16x128xf32, #tpu.memory_space<vmem>>, %arg7: memref<256x128xf32, #tpu.memory_space<vmem>>) attributes {dimension_semantics = [#tpu.dimension_semantics<parallel>, #tpu.dimension_semantics<parallel>, #tpu.dimension_semantics<parallel>], iteration_bounds = array<i64: 2, 1, 1>, scalar_prefetch = 0 : i64, scratch_operands = 1 : i64, tpu.core_type = #tpu.core_type<tc>, window_params = [{transform_indices = @transform_0, window_bounds = array<i64: 1, 18, 18, 4>}, {transform_indices = @transform_1, window_bounds = array<i64: 9, 4, 128>}, {transform_indices = @transform_2, window_bounds = array<i64: 1, 128>}, {transform_indices = @transform_3, window_bounds = array<i64: 1, 16, 16, 128>}]} {
    %c16_i32 = arith.constant 16 : i32
    %0 = arith.muli %arg1, %c16_i32 : i32
    %1 = tpu.assume_multiple %0, 16 : i32
    %c0_i32 = arith.constant 0 : i32
    %2 = arith.addi %1, %c0_i32 : i32
    %c0 = arith.constant 0 : index
    %3 = arith.index_cast %2 : i32 to index
    %c0_0 = arith.constant 0 : index
    %c0_1 = arith.constant 0 : index
    %4 = vector.load %arg3[%c0, %3, %c0_0, %c0_1] : memref<1x18x18x4xbf16, #tpu.memory_space<vmem>>, vector<1x16x16x4xbf16>
    %5 = vector.shape_cast %4 : vector<1x16x16x4xbf16> to vector<16x16x4xbf16>
    %6 = vector.shape_cast %5 : vector<16x16x4xbf16> to vector<256x4xbf16>
    %c0_2 = arith.constant 0 : index
    %c0_3 = arith.constant 0 : index
    %c0_4 = arith.constant 0 : index
    %7 = vector.load %arg4[%c0_2, %c0_3, %c0_4] : memref<9x4x128xbf16, #tpu.memory_space<vmem>>, vector<1x4x128xbf16>
    %8 = vector.shape_cast %7 : vector<1x4x128xbf16> to vector<4x128xbf16>
    %cst = arith.constant dense<0.000000e+00> : vector<256x128xf32>
    %9 = tpu.matmul %6, %8, %cst {dimension_numbers = #tpu.dot_dimension_numbers<[1], [0], [0], [1], [0, 0, 1, 1], [], []>} : vector<256x4xbf16>, vector<4x128xbf16>, vector<256x128xf32> -> vector<256x128xf32>
    %c0_5 = arith.constant 0 : index
    %c0_6 = arith.constant 0 : index
    %10 = vector.load %arg7[%c0_5, %c0_6] : memref<256x128xf32, #tpu.memory_space<vmem>>, vector<256x128xf32>
    tpu.vector_store %arg7[%c0_5, %c0_6], %9 {strides = array<i32>} : memref<256x128xf32, #tpu.memory_space<vmem>>, vector<256x128xf32>,
    %c0_i32_7 = arith.constant 0 : i32
    %11 = arith.addi %1, %c0_i32_7 : i32
    %c0_8 = arith.constant 0 : index
    %12 = arith.index_cast %11 : i32 to index
    %c1 = arith.constant 1 : index
    %c0_9 = arith.constant 0 : index
    %13 = vector.load %arg3[%c0_8, %12, %c1, %c0_9] : memref<1x18x18x4xbf16, #tpu.memory_space<vmem>>, vector<1x16x16x4xbf16>
    %14 = vector.shape_cast %13 : vector<1x16x16x4xbf16> to vector<16x16x4xbf16>
    %15 = vector.shape_cast %14 : vector<16x16x4xbf16> to vector<256x4xbf16>
    %c1_10 = arith.constant 1 : index
    %c0_11 = arith.constant 0 : index
    %c0_12 = arith.constant 0 : index
    %16 = vector.load %arg4[%c1_10, %c0_11, %c0_12] : memref<9x4x128xbf16, #tpu.memory_space<vmem>>, vector<1x4x128xbf16>
    %17 = vector.shape_cast %16 : vector<1x4x128xbf16> to vector<4x128xbf16>
    %cst_13 = arith.constant dense<0.000000e+00> : vector<256x128xf32>
    %18 = tpu.matmul %15, %17, %cst_13 {dimension_numbers = #tpu.dot_dimension_numbers<[1], [0], [0], [1], [0, 0, 1, 1], [], []>} : vector<256x4xbf16>, vector<4x128xbf16>, vector<256x128xf32> -> vector<256x128xf32>
    %c0_14 = arith.constant 0 : index
    %c0_15 = arith.constant 0 : index
    %19 = vector.load %arg7[%c0_14, %c0_15] : memref<256x128xf32, #tpu.memory_space<vmem>>, vector<256x128xf32>
    %20 = arith.addf %19, %18 : vector<256x128xf32>
    %c0_16 = arith.constant 0 : index
    %c0_17 = arith.constant 0 : index
    %21 = vector.load %arg7[%c0_16, %c0_17] : memref<256x128xf32, #tpu.memory_space<vmem>>, vector<256x128xf32>
    tpu.vector_store %arg7[%c0_16, %c0_17], %20 {strides = array<i32>} : memref<256x128xf32, #tpu.memory_space<vmem>>, vector<256x128xf32>,
    %c0_i32_18 = arith.constant 0 : i32
    %22 = arith.addi %1, %c0_i32_18 : i32
    %c0_19 = arith.constant 0 : index
    %23 = arith.index_cast %22 : i32 to index
    %c2 = arith.constant 2 : index
    %c0_20 = arith.constant 0 : index
    %24 = vector.load %arg3[%c0_19, %23, %c2, %c0_20] : memref<1x18x18x4xbf16, #tpu.memory_space<vmem>>, vector<1x16x16x4xbf16>
    %25 = vector.shape_cast %24 : vector<1x16x16x4xbf16> to vector<16x16x4xbf16>
    %26 = vector.shape_cast %25 : vector<16x16x4xbf16> to vector<256x4xbf16>
    %c2_21 = arith.constant 2 : index
    %c0_22 = arith.constant 0 : index
    %c0_23 = arith.constant 0 : index
    %27 = vector.load %arg4[%c2_21, %c0_22, %c0_23] : memref<9x4x128xbf16, #tpu.memory_space<vmem>>, vector<1x4x128xbf16>
    %28 = vector.shape_cast %27 : vector<1x4x128xbf16> to vector<4x128xbf16>
    %cst_24 = arith.constant dense<0.000000e+00> : vector<256x128xf32>
    %29 = tpu.matmul %26, %28, %cst_24 {dimension_numbers = #tpu.dot_dimension_numbers<[1], [0], [0], [1], [0, 0, 1, 1], [], []>} : vector<256x4xbf16>, vector<4x128xbf16>, vector<256x128xf32> -> vector<256x128xf32>
    %c0_25 = arith.constant 0 : index
    %c0_26 = arith.constant 0 : index
    %30 = vector.load %arg7[%c0_25, %c0_26] : memref<256x128xf32, #tpu.memory_space<vmem>>, vector<256x128xf32>
    %31 = arith.addf %30, %29 : vector<256x128xf32>
    %c0_27 = arith.constant 0 : index
    %c0_28 = arith.constant 0 : index
    %32 = vector.load %arg7[%c0_27, %c0_28] : memref<256x128xf32, #tpu.memory_space<vmem>>, vector<256x128xf32>
    tpu.vector_store %arg7[%c0_27, %c0_28], %31 {strides = array<i32>} : memref<256x128xf32, #tpu.memory_space<vmem>>, vector<256x128xf32>,
    %c1_i32 = arith.constant 1 : i32
    %33 = arith.addi %1, %c1_i32 : i32
    %c0_29 = arith.constant 0 : index
    %34 = arith.index_cast %33 : i32 to index
    %c0_30 = arith.constant 0 : index
    %c0_31 = arith.constant 0 : index
    %35 = vector.load %arg3[%c0_29, %34, %c0_30, %c0_31] : memref<1x18x18x4xbf16, #tpu.memory_space<vmem>>, vector<1x16x16x4xbf16>
    %36 = vector.shape_cast %35 : vector<1x16x16x4xbf16> to vector<16x16x4xbf16>
    %37 = vector.shape_cast %36 : vector<16x16x4xbf16> to vector<256x4xbf16>
    %c3 = arith.constant 3 : index
    %c0_32 = arith.constant 0 : index
    %c0_33 = arith.constant 0 : index
    %38 = vector.load %arg4[%c3, %c0_32, %c0_33] : memref<9x4x128xbf16, #tpu.memory_space<vmem>>, vector<1x4x128xbf16>
    %39 = vector.shape_cast %38 : vector<1x4x128xbf16> to vector<4x128xbf16>
    %cst_34 = arith.constant dense<0.000000e+00> : vector<256x128xf32>
    %40 = tpu.matmul %37, %39, %cst_34 {dimension_numbers = #tpu.dot_dimension_numbers<[1], [0], [0], [1], [0, 0, 1, 1], [], []>} : vector<256x4xbf16>, vector<4x128xbf16>, vector<256x128xf32> -> vector<256x128xf32>
    %c0_35 = arith.constant 0 : index
    %c0_36 = arith.constant 0 : index
    %41 = vector.load %arg7[%c0_35, %c0_36] : memref<256x128xf32, #tpu.memory_space<vmem>>, vector<256x128xf32>
    %42 = arith.addf %41, %40 : vector<256x128xf32>
    %c0_37 = arith.constant 0 : index
    %c0_38 = arith.constant 0 : index
    %43 = vector.load %arg7[%c0_37, %c0_38] : memref<256x128xf32, #tpu.memory_space<vmem>>, vector<256x128xf32>
    tpu.vector_store %arg7[%c0_37, %c0_38], %42 {strides = array<i32>} : memref<256x128xf32, #tpu.memory_space<vmem>>, vector<256x128xf32>,
    %c1_i32_39 = arith.constant 1 : i32
    %44 = arith.addi %1, %c1_i32_39 : i32
    %c0_40 = arith.constant 0 : index
    %45 = arith.index_cast %44 : i32 to index
    %c1_41 = arith.constant 1 : index
    %c0_42 = arith.constant 0 : index
    %46 = vector.load %arg3[%c0_40, %45, %c1_41, %c0_42] : memref<1x18x18x4xbf16, #tpu.memory_space<vmem>>, vector<1x16x16x4xbf16>
    %47 = vector.shape_cast %46 : vector<1x16x16x4xbf16> to vector<16x16x4xbf16>
    %48 = vector.shape_cast %47 : vector<16x16x4xbf16> to vector<256x4xbf16>
    %c4 = arith.constant 4 : index
    %c0_43 = arith.constant 0 : index
    %c0_44 = arith.constant 0 : index
    %49 = vector.load %arg4[%c4, %c0_43, %c0_44] : memref<9x4x128xbf16, #tpu.memory_space<vmem>>, vector<1x4x128xbf16>
    %50 = vector.shape_cast %49 : vector<1x4x128xbf16> to vector<4x128xbf16>
    %cst_45 = arith.constant dense<0.000000e+00> : vector<256x128xf32>
    %51 = tpu.matmul %48, %50, %cst_45 {dimension_numbers = #tpu.dot_dimension_numbers<[1], [0], [0], [1], [0, 0, 1, 1], [], []>} : vector<256x4xbf16>, vector<4x128xbf16>, vector<256x128xf32> -> vector<256x128xf32>
    %c0_46 = arith.constant 0 : index
    %c0_47 = arith.constant 0 : index
    %52 = vector.load %arg7[%c0_46, %c0_47] : memref<256x128xf32, #tpu.memory_space<vmem>>, vector<256x128xf32>
    %53 = arith.addf %52, %51 : vector<256x128xf32>
    %c0_48 = arith.constant 0 : index
    %c0_49 = arith.constant 0 : index
    %54 = vector.load %arg7[%c0_48, %c0_49] : memref<256x128xf32, #tpu.memory_space<vmem>>, vector<256x128xf32>
    tpu.vector_store %arg7[%c0_48, %c0_49], %53 {strides = array<i32>} : memref<256x128xf32, #tpu.memory_space<vmem>>, vector<256x128xf32>,
    %c1_i32_50 = arith.constant 1 : i32
    %55 = arith.addi %1, %c1_i32_50 : i32
    %c0_51 = arith.constant 0 : index
    %56 = arith.index_cast %55 : i32 to index
    %c2_52 = arith.constant 2 : index
    %c0_53 = arith.constant 0 : index
    %57 = vector.load %arg3[%c0_51, %56, %c2_52, %c0_53] : memref<1x18x18x4xbf16, #tpu.memory_space<vmem>>, vector<1x16x16x4xbf16>
    %58 = vector.shape_cast %57 : vector<1x16x16x4xbf16> to vector<16x16x4xbf16>
    %59 = vector.shape_cast %58 : vector<16x16x4xbf16> to vector<256x4xbf16>
    %c5 = arith.constant 5 : index
    %c0_54 = arith.constant 0 : index
    %c0_55 = arith.constant 0 : index
    %60 = vector.load %arg4[%c5, %c0_54, %c0_55] : memref<9x4x128xbf16, #tpu.memory_space<vmem>>, vector<1x4x128xbf16>
    %61 = vector.shape_cast %60 : vector<1x4x128xbf16> to vector<4x128xbf16>
    %cst_56 = arith.constant dense<0.000000e+00> : vector<256x128xf32>
    %62 = tpu.matmul %59, %61, %cst_56 {dimension_numbers = #tpu.dot_dimension_numbers<[1], [0], [0], [1], [0, 0, 1, 1], [], []>} : vector<256x4xbf16>, vector<4x128xbf16>, vector<256x128xf32> -> vector<256x128xf32>
    %c0_57 = arith.constant 0 : index
    %c0_58 = arith.constant 0 : index
    %63 = vector.load %arg7[%c0_57, %c0_58] : memref<256x128xf32, #tpu.memory_space<vmem>>, vector<256x128xf32>
    %64 = arith.addf %63, %62 : vector<256x128xf32>
    %c0_59 = arith.constant 0 : index
    %c0_60 = arith.constant 0 : index
    %65 = vector.load %arg7[%c0_59, %c0_60] : memref<256x128xf32, #tpu.memory_space<vmem>>, vector<256x128xf32>
    tpu.vector_store %arg7[%c0_59, %c0_60], %64 {strides = array<i32>} : memref<256x128xf32, #tpu.memory_space<vmem>>, vector<256x128xf32>,
    %c2_i32 = arith.constant 2 : i32
    %66 = arith.addi %1, %c2_i32 : i32
    %c0_61 = arith.constant 0 : index
    %67 = arith.index_cast %66 : i32 to index
    %c0_62 = arith.constant 0 : index
    %c0_63 = arith.constant 0 : index
    %68 = vector.load %arg3[%c0_61, %67, %c0_62, %c0_63] : memref<1x18x18x4xbf16, #tpu.memory_space<vmem>>, vector<1x16x16x4xbf16>
    %69 = vector.shape_cast %68 : vector<1x16x16x4xbf16> to vector<16x16x4xbf16>
    %70 = vector.shape_cast %69 : vector<16x16x4xbf16> to vector<256x4xbf16>
    %c6 = arith.constant 6 : index
    %c0_64 = arith.constant 0 : index
    %c0_65 = arith.constant 0 : index
    %71 = vector.load %arg4[%c6, %c0_64, %c0_65] : memref<9x4x128xbf16, #tpu.memory_space<vmem>>, vector<1x4x128xbf16>
    %72 = vector.shape_cast %71 : vector<1x4x128xbf16> to vector<4x128xbf16>
    %cst_66 = arith.constant dense<0.000000e+00> : vector<256x128xf32>
    %73 = tpu.matmul %70, %72, %cst_66 {dimension_numbers = #tpu.dot_dimension_numbers<[1], [0], [0], [1], [0, 0, 1, 1], [], []>} : vector<256x4xbf16>, vector<4x128xbf16>, vector<256x128xf32> -> vector<256x128xf32>
    %c0_67 = arith.constant 0 : index
    %c0_68 = arith.constant 0 : index
    %74 = vector.load %arg7[%c0_67, %c0_68] : memref<256x128xf32, #tpu.memory_space<vmem>>, vector<256x128xf32>
    %75 = arith.addf %74, %73 : vector<256x128xf32>
    %c0_69 = arith.constant 0 : index
    %c0_70 = arith.constant 0 : index
    %76 = vector.load %arg7[%c0_69, %c0_70] : memref<256x128xf32, #tpu.memory_space<vmem>>, vector<256x128xf32>
    tpu.vector_store %arg7[%c0_69, %c0_70], %75 {strides = array<i32>} : memref<256x128xf32, #tpu.memory_space<vmem>>, vector<256x128xf32>,
    %c2_i32_71 = arith.constant 2 : i32
    %77 = arith.addi %1, %c2_i32_71 : i32
    %c0_72 = arith.constant 0 : index
    %78 = arith.index_cast %77 : i32 to index
    %c1_73 = arith.constant 1 : index
    %c0_74 = arith.constant 0 : index
    %79 = vector.load %arg3[%c0_72, %78, %c1_73, %c0_74] : memref<1x18x18x4xbf16, #tpu.memory_space<vmem>>, vector<1x16x16x4xbf16>
    %80 = vector.shape_cast %79 : vector<1x16x16x4xbf16> to vector<16x16x4xbf16>
    %81 = vector.shape_cast %80 : vector<16x16x4xbf16> to vector<256x4xbf16>
    %c7 = arith.constant 7 : index
    %c0_75 = arith.constant 0 : index
    %c0_76 = arith.constant 0 : index
    %82 = vector.load %arg4[%c7, %c0_75, %c0_76] : memref<9x4x128xbf16, #tpu.memory_space<vmem>>, vector<1x4x128xbf16>
    %83 = vector.shape_cast %82 : vector<1x4x128xbf16> to vector<4x128xbf16>
    %cst_77 = arith.constant dense<0.000000e+00> : vector<256x128xf32>
    %84 = tpu.matmul %81, %83, %cst_77 {dimension_numbers = #tpu.dot_dimension_numbers<[1], [0], [0], [1], [0, 0, 1, 1], [], []>} : vector<256x4xbf16>, vector<4x128xbf16>, vector<256x128xf32> -> vector<256x128xf32>
    %c0_78 = arith.constant 0 : index
    %c0_79 = arith.constant 0 : index
    %85 = vector.load %arg7[%c0_78, %c0_79] : memref<256x128xf32, #tpu.memory_space<vmem>>, vector<256x128xf32>
    %86 = arith.addf %85, %84 : vector<256x128xf32>
    %c0_80 = arith.constant 0 : index
    %c0_81 = arith.constant 0 : index
    %87 = vector.load %arg7[%c0_80, %c0_81] : memref<256x128xf32, #tpu.memory_space<vmem>>, vector<256x128xf32>
    tpu.vector_store %arg7[%c0_80, %c0_81], %86 {strides = array<i32>} : memref<256x128xf32, #tpu.memory_space<vmem>>, vector<256x128xf32>,
    %c2_i32_82 = arith.constant 2 : i32
    %88 = arith.addi %1, %c2_i32_82 : i32
    %c0_83 = arith.constant 0 : index
    %89 = arith.index_cast %88 : i32 to index
    %c2_84 = arith.constant 2 : index
    %c0_85 = arith.constant 0 : index
    %90 = vector.load %arg3[%c0_83, %89, %c2_84, %c0_85] : memref<1x18x18x4xbf16, #tpu.memory_space<vmem>>, vector<1x16x16x4xbf16>
    %91 = vector.shape_cast %90 : vector<1x16x16x4xbf16> to vector<16x16x4xbf16>
    %92 = vector.shape_cast %91 : vector<16x16x4xbf16> to vector<256x4xbf16>
    %c8 = arith.constant 8 : index
    %c0_86 = arith.constant 0 : index
    %c0_87 = arith.constant 0 : index
    %93 = vector.load %arg4[%c8, %c0_86, %c0_87] : memref<9x4x128xbf16, #tpu.memory_space<vmem>>, vector<1x4x128xbf16>
    %94 = vector.shape_cast %93 : vector<1x4x128xbf16> to vector<4x128xbf16>
    %cst_88 = arith.constant dense<0.000000e+00> : vector<256x128xf32>
    %95 = tpu.matmul %92, %94, %cst_88 {dimension_numbers = #tpu.dot_dimension_numbers<[1], [0], [0], [1], [0, 0, 1, 1], [], []>} : vector<256x4xbf16>, vector<4x128xbf16>, vector<256x128xf32> -> vector<256x128xf32>
    %c0_89 = arith.constant 0 : index
    %c0_90 = arith.constant 0 : index
    %96 = vector.load %arg7[%c0_89, %c0_90] : memref<256x128xf32, #tpu.memory_space<vmem>>, vector<256x128xf32>
    %97 = arith.addf %96, %95 : vector<256x128xf32>
    %c0_91 = arith.constant 0 : index
    %c0_92 = arith.constant 0 : index
    %98 = vector.load %arg7[%c0_91, %c0_92] : memref<256x128xf32, #tpu.memory_space<vmem>>, vector<256x128xf32>
    tpu.vector_store %arg7[%c0_91, %c0_92], %97 {strides = array<i32>} : memref<256x128xf32, #tpu.memory_space<vmem>>, vector<256x128xf32>,
    %c0_93 = arith.constant 0 : index
    %c0_94 = arith.constant 0 : index
    %99 = vector.load %arg7[%c0_93, %c0_94] : memref<256x128xf32, #tpu.memory_space<vmem>>, vector<256x128xf32>
    %c0_95 = arith.constant 0 : index
    %c0_96 = arith.constant 0 : index
    %100 = vector.load %arg5[%c0_95, %c0_96] : memref<1x128xf32, #tpu.memory_space<vmem>>, vector<1x128xf32>
    %101 = vector.broadcast %100 : vector<1x128xf32> to vector<256x128xf32>
    %102 = arith.addf %99, %101 : vector<256x128xf32>
    %103 = arith.negf %102 : vector<256x128xf32>
    %104 = math.exp %103 : vector<256x128xf32>
    %cst_97 = arith.constant 1.000000e+00 : f32
    %105 = vector.broadcast %cst_97 : f32 to vector<256x128xf32>
    %106 = arith.addf %105, %104 : vector<256x128xf32>
    %107 = arith.divf %105, %106 : vector<256x128xf32>
    %108 = arith.mulf %102, %107 : vector<256x128xf32>
    %109 = vector.shape_cast %108 : vector<256x128xf32> to vector<16x16x128xf32>
    %c0_98 = arith.constant 0 : index
    %c0_99 = arith.constant 0 : index
    %c0_100 = arith.constant 0 : index
    %c0_101 = arith.constant 0 : index
    %110 = vector.load %arg6[%c0_98, %c0_99, %c0_100, %c0_101] : memref<1x16x16x128xf32, #tpu.memory_space<vmem>>, vector<1x16x16x128xf32>
    %111 = vector.shape_cast %110 : vector<1x16x16x128xf32> to vector<16x16x128xf32>
    %112 = vector.shape_cast %109 : vector<16x16x128xf32> to vector<1x16x16x128xf32>
    tpu.vector_store %arg6[%c0_98, %c0_99, %c0_100, %c0_101], %112 {strides = array<i32>} : memref<1x16x16x128xf32, #tpu.memory_space<vmem>>, vector<1x16x16x128xf32>,
    return
  }
  func.func @transform_0(%arg0: i32, %arg1: i32, %arg2: i32) -> (i32, i32, i32, i32) {
    %c0_i32 = arith.constant 0 : i32
    %c0_i32_0 = arith.constant 0 : i32
    %c0_i32_1 = arith.constant 0 : i32
    %c0_i32_2 = arith.constant 0 : i32
    return %arg0, %c0_i32, %c0_i32_0, %c0_i32_1 : i32, i32, i32, i32
  }
  func.func @transform_1(%arg0: i32, %arg1: i32, %arg2: i32) -> (i32, i32, i32) {
    %c0_i32 = arith.constant 0 : i32
    %c0_i32_0 = arith.constant 0 : i32
    %c0_i32_1 = arith.constant 0 : i32
    return %c0_i32, %c0_i32_0, %arg2 : i32, i32, i32
  }
  func.func @transform_2(%arg0: i32, %arg1: i32, %arg2: i32) -> (i32, i32) {
    %c0_i32 = arith.constant 0 : i32
    %c0_i32_0 = arith.constant 0 : i32
    return %c0_i32, %arg2 : i32, i32
  }
  func.func @transform_3(%arg0: i32, %arg1: i32, %arg2: i32) -> (i32, i32, i32, i32) {
    %c0_i32 = arith.constant 0 : i32
    %c0_i32_0 = arith.constant 0 : i32
    return %arg0, %arg1, %c0_i32, %arg2 : i32, i32, i32, i32
  }
}

</mosaic_0001>

<llo_original>
// kernel: tpu_custom_call.1
$region0: #{tpu_custom_call.1}
  #allocation0 [shape = 'u32[]', space=smem, size = 0x4, offset = 0x4, fixed_abs, tag = 'smem constant byte address 0x4 - core index']
  #allocation1 [shape = 'u32[72,128]{1,0:T(1,128)}', space=vmem, size = 0x9000, scoped, tag = 'internal scratch']
  #allocation2 [shape = 'f32[256,128]{1,0:T(8,128)}', space=vmem, size = 0x20000, scoped, tag = 'scratch operand']
  %s0 = inlined_call_operand.vmem [shape: bf16[2,18,18,4], index: 0, kind: input, shape index: {}]
  %s1 = inlined_call_operand.vmem [shape: bf16[9,4,128], index: 1, kind: input, shape index: {}]
  %s2 = inlined_call_operand.vmem [shape: f32[1,128], index: 2, kind: input, shape index: {}]
  %s3 = inlined_call_operand.hbm [shape: f32[2,16,16,128], index: 3, kind: output, shape index: {}]
  %s4 = sld [smem:[#allocation0]]
  $region45: #{tpu_custom_call.1} parent=0
    _
  %s6 = ssub.s32 1, %s4
  %s7 = scalar_select 0, %s6, %s4
  $region1: #{tpu_custom_call.1} parent=0
    #allocation3 [shape = 'u8[262144]{0}', space=vmem, size = 0x40000, scoped, tag = 'output window, operand 0']
    #allocation4 [shape = 's32[2]{0}', space=sflag, size = 0x8, scoped, tag = 'scoped memory for tpu_custom_call.1']
    %8 = vsyncpa [#allocation4], 0
    %s9 = scalar_lea.sflag [#allocation4], 1
    %10 = vsyncpa %s9, 0
    loop: start=0, step=1, limit=4
    $region2: #{tpu_custom_call.1} parent=1 // loop_pre_header
      _
    $region3: #{tpu_custom_call.1} parent=1 // loop_header
      %s12 = sphi 0, %s16
      %p13 = scmp.ge.s32.totalorder %s12, 4
      %s19 = sphi 0, %s38
      %s20 = sphi 0, %s34
      %s21 = sphi 0, %s30
      %s22 = sphi 0, %s19
      %s23 = sphi 0, %s20
      %s24 = sphi 0, %s21
      %s25 = sphi 0, %s22
      %s26 = sphi 0, %s23
      %s27 = sphi 0, %s24
      %s41 = sphi 0, %s43
      %s44 = sphi 0, %s41
      %s45 = sphi 0, %s44
      %s61 = sphi 0, %s45
      %s67 = sphi 0, %s69
      %s70 = sphi 0, %s67
      %s71 = sphi 0, %s70
      %s87 = sphi 0, %s71
      %s93 = sphi 0, %s95
      %s96 = sphi 0, %s93
      %s97 = sphi 0, %s96
      %s113 = sphi 0, %s97
      %s123 = sphi 0, %s125
      %s126 = sphi 0, %s123
      %s127 = sphi 0, %s126
      %s143 = sphi 0, %s127
    $region4: #{tpu_custom_call.1} parent=1 // loop_header_branch
      %15 = sbr.rel (%p13) target = $region8
    $region5: #{tpu_custom_call.1} parent=1 // loop_body
      %s17 = ssub.s32 %s12, 1
      %s18 = ssub.s32 %s12, 2
      %s28 = sadd.s32 1, %s21
      %p29 = scmp.ge.s32.totalorder %s28, 1
      %s30 = scalar_select %p29, 0, %s28
      %s31 = sadd.s32 1, %s20
      %s32 = scalar_select %p29, %s31, %s20
      %p33 = scmp.ge.s32.totalorder %s32, 1
      %s34 = scalar_select %p33, 0, %s32
      %s35 = sadd.s32 1, %s19
      %s36 = scalar_select %p33, %s35, %s19
      %p37 = scmp.ge.s32.totalorder %s36, 2
      %s38 = scalar_select %p37, 0, %s36
      %s39 = ssub.s32 %s19, %s38
      %p40 = scmp.eq.s32.totalorder %s39, 0
      %s42 = sadd.s32 %s41, 1
      %s43 = scalar_select %p40, %s41, %s42
      %p46 = pneg %p40
      %p47 = scmp.eq.s32.totalorder %s12, 1
      %p48 = por %p46, %p47
      %p49 = scmp.ne.s32.totalorder %s41, %s44
      %p50 = scmp.eq.s32.totalorder %s12, 0
      %p51 = por %p49, %p50
      %p52 = scmp.ne.s32.totalorder %s41, %s44
      %p53 = scmp.eq.s32.totalorder %s17, 1
      %p54 = por %p52, %p53
      %p55 = scmp.ne.s32.totalorder %s44, %s45
      %p56 = scmp.eq.s32.totalorder %s17, 0
      %p57 = por %p55, %p56
      %p58 = scmp.ne.s32.totalorder %s44, %s45
      %p59 = scmp.eq.s32.totalorder %s18, 1
      %p60 = por %p58, %p59
      %p62 = scmp.ne.s32.totalorder %s45, %s61
      %p63 = scmp.eq.s32.totalorder %s18, 0
      %p64 = por %p62, %p63
      %s65 = ssub.s32 %s21, %s30
      %p66 = scmp.eq.s32.totalorder %s65, 0
      %s68 = sadd.s32 %s67, 1
      %s69 = scalar_select %p66, %s67, %s68
      %p72 = pneg %p66
      %p73 = scmp.eq.s32.totalorder %s12, 1
      %p74 = por %p72, %p73
      %p75 = scmp.ne.s32.totalorder %s67, %s70
      %p76 = scmp.eq.s32.totalorder %s12, 0
      %p77 = por %p75, %p76
      %p78 = scmp.ne.s32.totalorder %s67, %s70
      %p79 = scmp.eq.s32.totalorder %s17, 1
      %p80 = por %p78, %p79
      %p81 = scmp.ne.s32.totalorder %s70, %s71
      %p82 = scmp.eq.s32.totalorder %s17, 0
      %p83 = por %p81, %p82
      %p84 = scmp.ne.s32.totalorder %s70, %s71
      %p85 = scmp.eq.s32.totalorder %s18, 1
      %p86 = por %p84, %p85
      %p88 = scmp.ne.s32.totalorder %s71, %s87
      %p89 = scmp.eq.s32.totalorder %s18, 0
      %p90 = por %p88, %p89
      %s91 = ssub.s32 %s21, %s30
      %p92 = scmp.eq.s32.totalorder %s91, 0
      %s94 = sadd.s32 %s93, 1
      %s95 = scalar_select %p92, %s93, %s94
      %p98 = pneg %p92
      %p99 = scmp.eq.s32.totalorder %s12, 1
      %p100 = por %p98, %p99
      %p101 = scmp.ne.s32.totalorder %s93, %s96
      %p102 = scmp.eq.s32.totalorder %s12, 0
      %p103 = por %p101, %p102
      %p104 = scmp.ne.s32.totalorder %s93, %s96
      %p105 = scmp.eq.s32.totalorder %s17, 1
      %p106 = por %p104, %p105
      %p107 = scmp.ne.s32.totalorder %s96, %s97
      %p108 = scmp.eq.s32.totalorder %s17, 0
      %p109 = por %p107, %p108
      %p110 = scmp.ne.s32.totalorder %s96, %s97
      %p111 = scmp.eq.s32.totalorder %s18, 1
      %p112 = por %p110, %p111
      %p114 = scmp.ne.s32.totalorder %s97, %s113
      %p115 = scmp.eq.s32.totalorder %s18, 0
      %p116 = por %p114, %p115
      %s117 = ssub.s32 %s19, %s38
      %s118 = ssub.s32 %s20, %s34
      %s119 = sor.u32 %s117, %s118
      %s120 = ssub.s32 %s21, %s30
      %s121 = sor.u32 %s119, %s120
      %p122 = scmp.eq.s32.totalorder %s121, 0
      %s124 = sadd.s32 %s123, 1
      %s125 = scalar_select %p122, %s123, %s124
      %p128 = pneg %p122
      %p129 = scmp.eq.s32.totalorder %s12, 1
      %p130 = por %p128, %p129
      %p131 = scmp.ne.s32.totalorder %s123, %s126
      %p132 = scmp.eq.s32.totalorder %s12, 0
      %p133 = por %p131, %p132
      %p134 = scmp.ne.s32.totalorder %s123, %s126
      %p135 = scmp.eq.s32.totalorder %s17, 1
      %p136 = por %p134, %p135
      %p137 = scmp.ne.s32.totalorder %s126, %s127
      %p138 = scmp.eq.s32.totalorder %s17, 0
      %p139 = por %p137, %p138
      %p140 = scmp.ne.s32.totalorder %s126, %s127
      %p141 = scmp.eq.s32.totalorder %s18, 1
      %p142 = por %p140, %p141
      %p144 = scmp.ne.s32.totalorder %s127, %s143
      %p145 = scmp.eq.s32.totalorder %s18, 0
      %p146 = por %p144, %p145
      %p147 = scmp.le.s32.totalorder 1, %s12
      %p148 = scmp.lt.s32.totalorder %s12, 3
      %p149 = pnand %p147, %p148
      %p150 = pneg %p149
      // Predicated region
      $region9: #{tpu_custom_call.1} parent=5 // pred_check
        _
      $region10: #{tpu_custom_call.1} parent=5 // pred_check_branch
        %152 = sbr.rel (%p149) target = $region12
      $region11: #{tpu_custom_call.1} parent=5 // pred_region
        %s153 = ssub.s32 %s12, 1
        // Predicated region
        $region13: #{tpu_custom_call.1} parent=11 // pred_check
          %p154 = pneg %p83
        $region14: #{tpu_custom_call.1} parent=11 // pred_check_branch
          %156 = sbr.rel (%p154) target = $region16
        $region15: #{tpu_custom_call.1} parent=11 // pred_region
          %p157 = scmp.lt.s32.totalorder %s24, 0
          %s158 = scalar_select %p157, %s24, 0
          %s159 = smul.addr %s158, 2
          %s160 = scalar_lea.vmem %s1, %s159
        $region16: #{tpu_custom_call.1} parent=11 // pred_fallthru
          _
        // Predicated region
        $region17: #{tpu_custom_call.1} parent=11 // pred_check
          %p161 = pneg %p109
        $region18: #{tpu_custom_call.1} parent=11 // pred_check_branch
          %163 = sbr.rel (%p161) target = $region20
        $region19: #{tpu_custom_call.1} parent=11 // pred_region
          %p164 = scmp.lt.s32.totalorder %s24, 0
          %s165 = scalar_select %p164, %s24, 0
          %s166 = scalar_lea.vmem %s2, %s165
        $region20: #{tpu_custom_call.1} parent=11 // pred_fallthru
          _
      $region12: #{tpu_custom_call.1} parent=5 // pred_fallthru
        _
      %p167 = scmp.lt.s32.totalorder %s12, 2
      // Predicated region
      $region21: #{tpu_custom_call.1} parent=5 // pred_check
        %p168 = pneg %p167
      $region22: #{tpu_custom_call.1} parent=5 // pred_check_branch
        %170 = sbr.rel (%p168) target = $region24
      $region23: #{tpu_custom_call.1} parent=5 // pred_region
        // Predicated region
        $region25: #{tpu_custom_call.1} parent=23 // pred_check
          %p171 = pneg %p51
        $region26: #{tpu_custom_call.1} parent=23 // pred_check_branch
          %173 = sbr.rel (%p171) target = $region28
        $region27: #{tpu_custom_call.1} parent=23 // pred_region
          %p174 = scmp.lt.s32.totalorder %s19, 1
          %s175 = scalar_select %p174, %s19, 1
          %s176 = smul.addr %s175, 54
          %s177 = smul.addr %s176, 4
          %s178 = scalar_lea.vmem %s0, %s177
        $region28: #{tpu_custom_call.1} parent=23 // pred_fallthru
          _
      $region24: #{tpu_custom_call.1} parent=5 // pred_fallthru
        _
      %p179 = scmp.le.s32.totalorder 1, %s12
      %p180 = scmp.lt.s32.totalorder %s12, 3
      %p181 = pnand %p179, %p180
      %p182 = pneg %p181
      // Predicated region
      $region29: #{tpu_custom_call.1} parent=5 // pred_check
        _
      $region30: #{tpu_custom_call.1} parent=5 // pred_check_branch
        %184 = sbr.rel (%p181) target = $region32
      $region31: #{tpu_custom_call.1} parent=5 // pred_region
        %s185 = ssub.s32 %s12, 1
        %p186 = scmp.lt.s32.totalorder %s22, 1
        %s187 = scalar_select %p186, %s22, 1
        %s188 = smul.addr %s187, 54
        %s189 = smul.addr %s188, 4
        %s190 = scalar_lea.vmem %s0, %s189
        %p191 = pneg %p57
        %p192 = pneg %p54
        %p193 = scmp.lt.s32.totalorder %s24, 0
        %s194 = scalar_select %p193, %s24, 0
        %s195 = smul.addr %s194, 2
        %s196 = scalar_lea.vmem %s1, %s195
        %p197 = pneg %p83
        %p198 = pneg %p80
        %p199 = scmp.lt.s32.totalorder %s24, 0
        %s200 = scalar_select %p199, %s24, 0
        %s201 = scalar_lea.vmem %s2, %s200
        %p202 = pneg %p109
        %p203 = pneg %p106
        %p204 = pneg %p139
        %p205 = pneg %p136
        %s206 = sand.u32 %s126, 1
        %s207 = scalar_lea.sflag [#allocation4], %s206
        %s208 = sand.u32 %s126, 1
        %s209 = smul.addr %s208, 256
        %s210 = scalar_lea.vmem [#allocation3], %s209
        %p211 = scmp.lt.s32.totalorder %s22, 1
        %s212 = scalar_select %p211, %s22, 1
        %s213 = smul.addr %s212, 54
        %s214 = smul.addr %s213, 4
        %s215 = scalar_lea.vmem %s0, %s214
        %p216 = scmp.lt.s32.totalorder %s24, 0
        %s217 = scalar_select %p216, %s24, 0
        %s218 = smul.addr %s217, 2
        %s219 = scalar_lea.vmem %s1, %s218
        %p220 = scmp.lt.s32.totalorder %s24, 0
        %s221 = scalar_select %p220, %s24, 0
        %s222 = scalar_lea.vmem %s2, %s221
        %s223 = smul.u32 16, %s23
        %s225 = smul.u32 %s23, 16
        %s226 = smul.u32 %s225, 3
        %s227 = smul.addr %s226, 4
        %s228 = scalar_lea.vmem %s215, %s227
        %v229 = vld [vmem:[%s228] sm:$0xf]
        %v230 = vld [vmem:[%s228 + $0x4] sm:$0xf]
        %v231 = vld [vmem:[%s228 + $0xc] sm:$0xf]
        %v232 = vld [vmem:[%s228 + $0x10] sm:$0xf]
        %v233 = vld [vmem:[%s228 + $0x18] sm:$0xf]
        %v234 = vld [vmem:[%s228 + $0x1c] sm:$0xf]
        %v235 = vld [vmem:[%s228 + $0x24] sm:$0xf]
        %v236 = vld [vmem:[%s228 + $0x28] sm:$0xf]
        %v237 = vld [vmem:[%s228 + $0x30] sm:$0xf]
        %v238 = vld [vmem:[%s228 + $0x34] sm:$0xf]
        %v239 = vld [vmem:[%s228 + $0x3c] sm:$0xf]
        %v240 = vld [vmem:[%s228 + $0x40] sm:$0xf]
        %v241 = vld [vmem:[%s228 + $0x48] sm:$0xf]
        %v242 = vld [vmem:[%s228 + $0x4c] sm:$0xf]
        %v243 = vld [vmem:[%s228 + $0x54] sm:$0xf]
        %v244 = vld [vmem:[%s228 + $0x58] sm:$0xf]
        %v245 = vld [vmem:[%s228 + $0x60] sm:$0xf]
        %v246 = vld [vmem:[%s228 + $0x64] sm:$0xf]
        %v247 = vld [vmem:[%s228 + $0x6c] sm:$0xf]
        %v248 = vld [vmem:[%s228 + $0x70] sm:$0xf]
        %v249 = vld [vmem:[%s228 + $0x78] sm:$0xf]
        %v250 = vld [vmem:[%s228 + $0x7c] sm:$0xf]
        %v251 = vld [vmem:[%s228 + $0x84] sm:$0xf]
        %v252 = vld [vmem:[%s228 + $0x88] sm:$0xf]
        %v253 = vld [vmem:[%s228 + $0x90] sm:$0xf]
        %v254 = vld [vmem:[%s228 + $0x94] sm:$0xf]
        %v255 = vld [vmem:[%s228 + $0x9c] sm:$0xf]
        %v256 = vld [vmem:[%s228 + $0xa0] sm:$0xf]
        %v257 = vld [vmem:[%s228 + $0xa8] sm:$0xf]
        %v258 = vld [vmem:[%s228 + $0xac] sm:$0xf]
        %v259 = vld [vmem:[%s228 + $0xb4] sm:$0xf]
        %v260 = vld [vmem:[%s228 + $0xb8] sm:$0xf]
        %v261 = vld [vmem:[%s219] sm:$0x3]
        %v294 = vunpack.c.l.b16 %v229
        %v295 = vunpack.c.l.b16 %v230
        %v296 = vunpack.c.l.b16 %v231
        %v297 = vunpack.c.l.b16 %v232
        %v298 = vunpack.c.l.b16 %v233
        %v299 = vunpack.c.l.b16 %v234
        %v300 = vunpack.c.l.b16 %v235
        %v301 = vunpack.c.l.b16 %v236
        %v302 = vunpack.c.l.b16 %v237
        %v303 = vunpack.c.l.b16 %v238
        %v304 = vunpack.c.l.b16 %v239
        %v305 = vunpack.c.l.b16 %v240
        %v306 = vunpack.c.l.b16 %v241
        %v307 = vunpack.c.l.b16 %v242
        %v308 = vunpack.c.l.b16 %v243
        %v309 = vunpack.c.l.b16 %v244
        %v310 = vunpack.c.l.b16 %v245
        %v311 = vunpack.c.l.b16 %v246
        %v312 = vunpack.c.l.b16 %v247
        %v313 = vunpack.c.l.b16 %v248
        %v314 = vunpack.c.l.b16 %v249
        %v315 = vunpack.c.l.b16 %v250
        %v316 = vunpack.c.l.b16 %v251
        %v317 = vunpack.c.l.b16 %v252
        %v318 = vunpack.c.l.b16 %v253
        %v319 = vunpack.c.l.b16 %v254
        %v320 = vunpack.c.l.b16 %v255
        %v321 = vunpack.c.l.b16 %v256
        %v322 = vunpack.c.l.b16 %v257
        %v323 = vunpack.c.l.b16 %v258
        %v324 = vunpack.c.l.b16 %v259
        %v325 = vunpack.c.l.b16 %v260
        %v326 = vpack.c.b16 %v295, %v294
        %v327 = vpack.c.b16 %v297, %v296
        %v328 = vpack.c.b16 %v299, %v298
        %v329 = vpack.c.b16 %v301, %v300
        %v330 = vpack.c.b16 %v303, %v302
        %v331 = vpack.c.b16 %v305, %v304
        %v332 = vpack.c.b16 %v307, %v306
        %v333 = vpack.c.b16 %v309, %v308
        %v334 = vpack.c.b16 %v311, %v310
        %v335 = vpack.c.b16 %v313, %v312
        %v336 = vpack.c.b16 %v315, %v314
        %v337 = vpack.c.b16 %v317, %v316
        %v338 = vpack.c.b16 %v319, %v318
        %v339 = vpack.c.b16 %v321, %v320
        %v340 = vpack.c.b16 %v323, %v322
        %v341 = vpack.c.b16 %v325, %v324
        %vm342 = vcmask 31744
        %v344 = vsel %vm342, %v326, 0
        %v347 = vsel %vm342, %v327, 0
        %v350 = vsel %vm342, %v328, 0
        %v353 = vsel %vm342, %v329, 0
        %v356 = vsel %vm342, %v330, 0
        %v359 = vsel %vm342, %v331, 0
        %v362 = vsel %vm342, %v332, 0
        %v365 = vsel %vm342, %v333, 0
        %v368 = vsel %vm342, %v334, 0
        %v371 = vsel %vm342, %v335, 0
        %v374 = vsel %vm342, %v336, 0
        %v377 = vsel %vm342, %v337, 0
        %v380 = vsel %vm342, %v338, 0
        %v383 = vsel %vm342, %v339, 0
        %v386 = vsel %vm342, %v340, 0
        %v389 = vsel %vm342, %v341, 0
        %vm391 = vcmask 1041408
        %v393 = vsel %vm391, %v261, 0
        %395 = vmatpush.bf16.msra.mxu0 0
        %396 = vmatpush.bf16.msra.mxu0 0
        %397 = vmatpush.bf16.msra.mxu0 0
        %398 = vmatpush.bf16.msra.mxu0 0
        %399 = vmatpush.bf16.msra.mxu0 0
        %400 = vmatpush.bf16.msra.mxu0 0
        %401 = vmatpush.bf16.msra.mxu0 0
        %402 = vmatpush.bf16.msra.mxu0 %v393
        %403 = vmatmul.bf16.gmra.mxu0 %v344
        %v404 = vpop.f32.mrf.mxu0
        %v405 = vadd.f32 0.0, %v404
        %v406 = vpop.f32.mrf.mxu0
        %v407 = vadd.f32 0.0, %v406
        %408 = vmatmul.bf16.gmra.mxu0 %v347
        %v409 = vpop.f32.mrf.mxu0
        %v410 = vadd.f32 0.0, %v409
        %v411 = vpop.f32.mrf.mxu0
        %v412 = vadd.f32 0.0, %v411
        %413 = vmatmul.bf16.gmra.mxu0 %v350
        %v414 = vpop.f32.mrf.mxu0
        %v415 = vadd.f32 0.0, %v414
        %v416 = vpop.f32.mrf.mxu0
        %v417 = vadd.f32 0.0, %v416
        %418 = vmatmul.bf16.gmra.mxu0 %v353
        %v419 = vpop.f32.mrf.mxu0
        %v420 = vadd.f32 0.0, %v419
        %v421 = vpop.f32.mrf.mxu0
        %v422 = vadd.f32 0.0, %v421
        %423 = vmatmul.bf16.gmra.mxu0 %v356
        %v424 = vpop.f32.mrf.mxu0
        %v425 = vadd.f32 0.0, %v424
        %v426 = vpop.f32.mrf.mxu0
        %v427 = vadd.f32 0.0, %v426
        %428 = vmatmul.bf16.gmra.mxu0 %v359
        %v429 = vpop.f32.mrf.mxu0
        %v430 = vadd.f32 0.0, %v429
        %v431 = vpop.f32.mrf.mxu0
        %v432 = vadd.f32 0.0, %v431
        %433 = vmatmul.bf16.gmra.mxu0 %v362
        %v434 = vpop.f32.mrf.mxu0
        %v435 = vadd.f32 0.0, %v434
        %v436 = vpop.f32.mrf.mxu0
        %v437 = vadd.f32 0.0, %v436
        %438 = vmatmul.bf16.gmra.mxu0 %v365
        %v439 = vpop.f32.mrf.mxu0
        %v440 = vadd.f32 0.0, %v439
        %v441 = vpop.f32.mrf.mxu0
        %v442 = vadd.f32 0.0, %v441
        %443 = vmatmul.bf16.gmra.mxu0 %v368
        %v444 = vpop.f32.mrf.mxu0
        %v445 = vadd.f32 0.0, %v444
        %v446 = vpop.f32.mrf.mxu0
        %v447 = vadd.f32 0.0, %v446
        %448 = vmatmul.bf16.gmra.mxu0 %v371
        %v449 = vpop.f32.mrf.mxu0
        %v450 = vadd.f32 0.0, %v449
        %v451 = vpop.f32.mrf.mxu0
        %v452 = vadd.f32 0.0, %v451
        %453 = vmatmul.bf16.gmra.mxu0 %v374
        %v454 = vpop.f32.mrf.mxu0
        %v455 = vadd.f32 0.0, %v454
        %v456 = vpop.f32.mrf.mxu0
        %v457 = vadd.f32 0.0, %v456
        %458 = vmatmul.bf16.gmra.mxu0 %v377
        %v459 = vpop.f32.mrf.mxu0
        %v460 = vadd.f32 0.0, %v459
        %v461 = vpop.f32.mrf.mxu0
        %v462 = vadd.f32 0.0, %v461
        %463 = vmatmul.bf16.gmra.mxu0 %v380
        %v464 = vpop.f32.mrf.mxu0
        %v465 = vadd.f32 0.0, %v464
        %v466 = vpop.f32.mrf.mxu0
        %v467 = vadd.f32 0.0, %v466
        %468 = vmatmul.bf16.gmra.mxu0 %v383
        %v469 = vpop.f32.mrf.mxu0
        %v470 = vadd.f32 0.0, %v469
        %v471 = vpop.f32.mrf.mxu0
        %v472 = vadd.f32 0.0, %v471
        %473 = vmatmul.bf16.gmra.mxu0 %v386
        %v474 = vpop.f32.mrf.mxu0
        %v475 = vadd.f32 0.0, %v474
        %v476 = vpop.f32.mrf.mxu0
        %v477 = vadd.f32 0.0, %v476
        %478 = vmatmul.bf16.gmra.mxu0 %v389
        %v479 = vpop.f32.mrf.mxu0
        %v480 = vadd.f32 0.0, %v479
        %v481 = vpop.f32.mrf.mxu0
        %v482 = vadd.f32 0.0, %v481
        %483 = vdwg.mxu0
        %484 = vst [vmem:[#allocation2] sm:$0xff] %v405
        %485 = vst [vmem:[#allocation2 + $0x8] sm:$0xff] %v407
        %486 = vst [vmem:[#allocation2 + $0x10] sm:$0xff] %v410
        %487 = vst [vmem:[#allocation2 + $0x18] sm:$0xff] %v412
        %488 = vst [vmem:[#allocation2 + $0x20] sm:$0xff] %v415
        %489 = vst [vmem:[#allocation2 + $0x28] sm:$0xff] %v417
        %490 = vst [vmem:[#allocation2 + $0x30] sm:$0xff] %v420
        %491 = vst [vmem:[#allocation2 + $0x38] sm:$0xff] %v422
        %492 = vst [vmem:[#allocation2 + $0x40] sm:$0xff] %v425
        %493 = vst [vmem:[#allocation2 + $0x48] sm:$0xff] %v427
        %494 = vst [vmem:[#allocation2 + $0x50] sm:$0xff] %v430
        %495 = vst [vmem:[#allocation2 + $0x58] sm:$0xff] %v432
        %496 = vst [vmem:[#allocation2 + $0x60] sm:$0xff] %v435
        %497 = vst [vmem:[#allocation2 + $0x68] sm:$0xff] %v437
        %498 = vst [vmem:[#allocation2 + $0x70] sm:$0xff] %v440
        %499 = vst [vmem:[#allocation2 + $0x78] sm:$0xff] %v442
        %500 = vst [vmem:[#allocation2 + $0x80] sm:$0xff] %v445
        %501 = vst [vmem:[#allocation2 + $0x88] sm:$0xff] %v447
        %502 = vst [vmem:[#allocation2 + $0x90] sm:$0xff] %v450
        %503 = vst [vmem:[#allocation2 + $0x98] sm:$0xff] %v452
        %504 = vst [vmem:[#allocation2 + $0xa0] sm:$0xff] %v455
        %505 = vst [vmem:[#allocation2 + $0xa8] sm:$0xff] %v457
        %506 = vst [vmem:[#allocation2 + $0xb0] sm:$0xff] %v460
        %507 = vst [vmem:[#allocation2 + $0xb8] sm:$0xff] %v462
        %508 = vst [vmem:[#allocation2 + $0xc0] sm:$0xff] %v465
        %509 = vst [vmem:[#allocation2 + $0xc8] sm:$0xff] %v467
        %510 = vst [vmem:[#allocation2 + $0xd0] sm:$0xff] %v470
        %511 = vst [vmem:[#allocation2 + $0xd8] sm:$0xff] %v472
        %512 = vst [vmem:[#allocation2 + $0xe0] sm:$0xff] %v475
        %513 = vst [vmem:[#allocation2 + $0xe8] sm:$0xff] %v477
        %514 = vst [vmem:[#allocation2 + $0xf0] sm:$0xff] %v480
        %515 = vst [vmem:[#allocation2 + $0xf8] sm:$0xff] %v482
        %v516 = vld [vmem:[%s228] sm:$0xf]
        %v517 = vld [vmem:[%s228 + $0x4] sm:$0xf]
        %v518 = vld [vmem:[%s228 + $0x8] sm:$0x1]
        %v519 = vld [vmem:[%s228 + $0xc] sm:$0xf]
        %v520 = vld [vmem:[%s228 + $0x10] sm:$0xf]
        %v521 = vld [vmem:[%s228 + $0x14] sm:$0x1]
        %v522 = vld [vmem:[%s228 + $0x18] sm:$0xf]
        %v523 = vld [vmem:[%s228 + $0x1c] sm:$0xf]
        %v524 = vld [vmem:[%s228 + $0x20] sm:$0x1]
        %v525 = vld [vmem:[%s228 + $0x24] sm:$0xf]
        %v526 = vld [vmem:[%s228 + $0x28] sm:$0xf]
        %v527 = vld [vmem:[%s228 + $0x2c] sm:$0x1]
        %v528 = vld [vmem:[%s228 + $0x30] sm:$0xf]
        %v529 = vld [vmem:[%s228 + $0x34] sm:$0xf]
        %v530 = vld [vmem:[%s228 + $0x38] sm:$0x1]
        %v531 = vld [vmem:[%s228 + $0x3c] sm:$0xf]
        %v532 = vld [vmem:[%s228 + $0x40] sm:$0xf]
        %v533 = vld [vmem:[%s228 + $0x44] sm:$0x1]
        %v534 = vld [vmem:[%s228 + $0x48] sm:$0xf]
        %v535 = vld [vmem:[%s228 + $0x4c] sm:$0xf]
        %v536 = vld [vmem:[%s228 + $0x50] sm:$0x1]
        %v537 = vld [vmem:[%s228 + $0x54] sm:$0xf]
        %v538 = vld [vmem:[%s228 + $0x58] sm:$0xf]
        %v539 = vld [vmem:[%s228 + $0x5c] sm:$0x1]
        %v540 = vld [vmem:[%s228 + $0x60] sm:$0xf]
        %v541 = vld [vmem:[%s228 + $0x64] sm:$0xf]
        %v542 = vld [vmem:[%s228 + $0x68] sm:$0x1]
        %v543 = vld [vmem:[%s228 + $0x6c] sm:$0xf]
        %v544 = vld [vmem:[%s228 + $0x70] sm:$0xf]
        %v545 = vld [vmem:[%s228 + $0x74] sm:$0x1]
        %v546 = vld [vmem:[%s228 + $0x78] sm:$0xf]
        %v547 = vld [vmem:[%s228 + $0x7c] sm:$0xf]
        %v548 = vld [vmem:[%s228 + $0x80] sm:$0x1]
        %v549 = vld [vmem:[%s228 + $0x84] sm:$0xf]
        %v550 = vld [vmem:[%s228 + $0x88] sm:$0xf]
        %v551 = vld [vmem:[%s228 + $0x8c] sm:$0x1]
        %v552 = vld [vmem:[%s228 + $0x90] sm:$0xf]
        %v553 = vld [vmem:[%s228 + $0x94] sm:$0xf]
        %v554 = vld [vmem:[%s228 + $0x98] sm:$0x1]
        %v555 = vld [vmem:[%s228 + $0x9c] sm:$0xf]
        %v556 = vld [vmem:[%s228 + $0xa0] sm:$0xf]
        %v557 = vld [vmem:[%s228 + $0xa4] sm:$0x1]
        %v558 = vld [vmem:[%s228 + $0xa8] sm:$0xf]
        %v559 = vld [vmem:[%s228 + $0xac] sm:$0xf]
        %v560 = vld [vmem:[%s228 + $0xb0] sm:$0x1]
        %v561 = vld [vmem:[%s228 + $0xb4] sm:$0xf]
        %v562 = vld [vmem:[%s228 + $0xb8] sm:$0xf]
        %v563 = vld [vmem:[%s228 + $0xbc] sm:$0x1]
        %vm564 = vsmask.f32 3328
        %vm565 = vsmask.f32 7440
        %vm566 = vmor %vm564, %vm565
        %v568 = vshrl.u32 %v516, 16
        %v570 = vrot.slane %v568, 4
        %v571 = vshll.u32 %v516, 16
        %v573 = vrot.slane %v571, 5
        %v574 = vor.u32 %v570, %v573
        %v575 = vrot.slane %v574, 4
        %v577 = vshll.u32 %v517, 16
        %v579 = vrot.slane %v577, 5
        %v580 = vsel %vm566, %v575, %v579
        %v581 = vshrl.u32 %v517, 16
        %v583 = vrot.slane %v581, 4
        %v584 = vor.u32 %v583, %v579
        %v585 = vrot.slane %v584, 4
        %v587 = vshll.u32 %v518, 16
        %v589 = vrot.slane %v587, 5
        %v590 = vsel %vm566, %v585, %v589
        %v592 = vshrl.u32 %v519, 16
        %v594 = vrot.slane %v592, 4
        %v595 = vshll.u32 %v519, 16
        %v597 = vrot.slane %v595, 5
        %v598 = vor.u32 %v594, %v597
        %v599 = vrot.slane %v598, 4
        %v601 = vshll.u32 %v520, 16
        %v603 = vrot.slane %v601, 5
        %v604 = vsel %vm566, %v599, %v603
        %v605 = vshrl.u32 %v520, 16
        %v607 = vrot.slane %v605, 4
        %v608 = vor.u32 %v607, %v603
        %v609 = vrot.slane %v608, 4
        %v611 = vshll.u32 %v521, 16
        %v613 = vrot.slane %v611, 5
        %v614 = vsel %vm566, %v609, %v613
        %v616 = vshrl.u32 %v522, 16
        %v618 = vrot.slane %v616, 4
        %v619 = vshll.u32 %v522, 16
        %v621 = vrot.slane %v619, 5
        %v622 = vor.u32 %v618, %v621
        %v623 = vrot.slane %v622, 4
        %v625 = vshll.u32 %v523, 16
        %v627 = vrot.slane %v625, 5
        %v628 = vsel %vm566, %v623, %v627
        %v629 = vshrl.u32 %v523, 16
        %v631 = vrot.slane %v629, 4
        %v632 = vor.u32 %v631, %v627
        %v633 = vrot.slane %v632, 4
        %v635 = vshll.u32 %v524, 16
        %v637 = vrot.slane %v635, 5
        %v638 = vsel %vm566, %v633, %v637
        %v640 = vshrl.u32 %v525, 16
        %v642 = vrot.slane %v640, 4
        %v643 = vshll.u32 %v525, 16
        %v645 = vrot.slane %v643, 5
        %v646 = vor.u32 %v642, %v645
        %v647 = vrot.slane %v646, 4
        %v649 = vshll.u32 %v526, 16
        %v651 = vrot.slane %v649, 5
        %v652 = vsel %vm566, %v647, %v651
        %v653 = vshrl.u32 %v526, 16
        %v655 = vrot.slane %v653, 4
        %v656 = vor.u32 %v655, %v651
        %v657 = vrot.slane %v656, 4
        %v659 = vshll.u32 %v527, 16
        %v661 = vrot.slane %v659, 5
        %v662 = vsel %vm566, %v657, %v661
        %v664 = vshrl.u32 %v528, 16
        %v666 = vrot.slane %v664, 4
        %v667 = vshll.u32 %v528, 16
        %v669 = vrot.slane %v667, 5
        %v670 = vor.u32 %v666, %v669
        %v671 = vrot.slane %v670, 4
        %v673 = vshll.u32 %v529, 16
        %v675 = vrot.slane %v673, 5
        %v676 = vsel %vm566, %v671, %v675
        %v677 = vshrl.u32 %v529, 16
        %v679 = vrot.slane %v677, 4
        %v680 = vor.u32 %v679, %v675
        %v681 = vrot.slane %v680, 4
        %v683 = vshll.u32 %v530, 16
        %v685 = vrot.slane %v683, 5
        %v686 = vsel %vm566, %v681, %v685
        %v688 = vshrl.u32 %v531, 16
        %v690 = vrot.slane %v688, 4
        %v691 = vshll.u32 %v531, 16
        %v693 = vrot.slane %v691, 5
        %v694 = vor.u32 %v690, %v693
        %v695 = vrot.slane %v694, 4
        %v697 = vshll.u32 %v532, 16
        %v699 = vrot.slane %v697, 5
        %v700 = vsel %vm566, %v695, %v699
        %v701 = vshrl.u32 %v532, 16
        %v703 = vrot.slane %v701, 4
        %v704 = vor.u32 %v703, %v699
        %v705 = vrot.slane %v704, 4
        %v707 = vshll.u32 %v533, 16
        %v709 = vrot.slane %v707, 5
        %v710 = vsel %vm566, %v705, %v709
        %v712 = vshrl.u32 %v534, 16
        %v714 = vrot.slane %v712, 4
        %v715 = vshll.u32 %v534, 16
        %v717 = vrot.slane %v715, 5
        %v718 = vor.u32 %v714, %v717
        %v719 = vrot.slane %v718, 4
        %v721 = vshll.u32 %v535, 16
        %v723 = vrot.slane %v721, 5
        %v724 = vsel %vm566, %v719, %v723
        %v725 = vshrl.u32 %v535, 16
        %v727 = vrot.slane %v725, 4
        %v728 = vor.u32 %v727, %v723
        %v729 = vrot.slane %v728, 4
        %v731 = vshll.u32 %v536, 16
        %v733 = vrot.slane %v731, 5
        %v734 = vsel %vm566, %v729, %v733
        %v736 = vshrl.u32 %v537, 16
        %v738 = vrot.slane %v736, 4
        %v739 = vshll.u32 %v537, 16
        %v741 = vrot.slane %v739, 5
        %v742 = vor.u32 %v738, %v741
        %v743 = vrot.slane %v742, 4
        %v745 = vshll.u32 %v538, 16
        %v747 = vrot.slane %v745, 5
        %v748 = vsel %vm566, %v743, %v747
        %v749 = vshrl.u32 %v538, 16
        %v751 = vrot.slane %v749, 4
        %v752 = vor.u32 %v751, %v747
        %v753 = vrot.slane %v752, 4
        %v755 = vshll.u32 %v539, 16
        %v757 = vrot.slane %v755, 5
        %v758 = vsel %vm566, %v753, %v757
        %v760 = vshrl.u32 %v540, 16
        %v762 = vrot.slane %v760, 4
        %v763 = vshll.u32 %v540, 16
        %v765 = vrot.slane %v763, 5
        %v766 = vor.u32 %v762, %v765
        %v767 = vrot.slane %v766, 4
        %v769 = vshll.u32 %v541, 16
        %v771 = vrot.slane %v769, 5
        %v772 = vsel %vm566, %v767, %v771
        %v773 = vshrl.u32 %v541, 16
        %v775 = vrot.slane %v773, 4
        %v776 = vor.u32 %v775, %v771
        %v777 = vrot.slane %v776, 4
        %v779 = vshll.u32 %v542, 16
        %v781 = vrot.slane %v779, 5
        %v782 = vsel %vm566, %v777, %v781
        %v784 = vshrl.u32 %v543, 16
        %v786 = vrot.slane %v784, 4
        %v787 = vshll.u32 %v543, 16
        %v789 = vrot.slane %v787, 5
        %v790 = vor.u32 %v786, %v789
        %v791 = vrot.slane %v790, 4
        %v793 = vshll.u32 %v544, 16
        %v795 = vrot.slane %v793, 5
        %v796 = vsel %vm566, %v791, %v795
        %v797 = vshrl.u32 %v544, 16
        %v799 = vrot.slane %v797, 4
        %v800 = vor.u32 %v799, %v795
        %v801 = vrot.slane %v800, 4
        %v803 = vshll.u32 %v545, 16
        %v805 = vrot.slane %v803, 5
        %v806 = vsel %vm566, %v801, %v805
        %v808 = vshrl.u32 %v546, 16
        %v810 = vrot.slane %v808, 4
        %v811 = vshll.u32 %v546, 16
        %v813 = vrot.slane %v811, 5
        %v814 = vor.u32 %v810, %v813
        %v815 = vrot.slane %v814, 4
        %v817 = vshll.u32 %v547, 16
        %v819 = vrot.slane %v817, 5
        %v820 = vsel %vm566, %v815, %v819
        %v821 = vshrl.u32 %v547, 16
        %v823 = vrot.slane %v821, 4
        %v824 = vor.u32 %v823, %v819
        %v825 = vrot.slane %v824, 4
        %v827 = vshll.u32 %v548, 16
        %v829 = vrot.slane %v827, 5
        %v830 = vsel %vm566, %v825, %v829
        %v832 = vshrl.u32 %v549, 16
        %v834 = vrot.slane %v832, 4
        %v835 = vshll.u32 %v549, 16
        %v837 = vrot.slane %v835, 5
        %v838 = vor.u32 %v834, %v837
        %v839 = vrot.slane %v838, 4
        %v841 = vshll.u32 %v550, 16
        %v843 = vrot.slane %v841, 5
        %v844 = vsel %vm566, %v839, %v843
        %v845 = vshrl.u32 %v550, 16
        %v847 = vrot.slane %v845, 4
        %v848 = vor.u32 %v847, %v843
        %v849 = vrot.slane %v848, 4
        %v851 = vshll.u32 %v551, 16
        %v853 = vrot.slane %v851, 5
        %v854 = vsel %vm566, %v849, %v853
        %v856 = vshrl.u32 %v552, 16
        %v858 = vrot.slane %v856, 4
        %v859 = vshll.u32 %v552, 16
        %v861 = vrot.slane %v859, 5
        %v862 = vor.u32 %v858, %v861
        %v863 = vrot.slane %v862, 4
        %v865 = vshll.u32 %v553, 16
        %v867 = vrot.slane %v865, 5
        %v868 = vsel %vm566, %v863, %v867
        %v869 = vshrl.u32 %v553, 16
        %v871 = vrot.slane %v869, 4
        %v872 = vor.u32 %v871, %v867
        %v873 = vrot.slane %v872, 4
        %v875 = vshll.u32 %v554, 16
        %v877 = vrot.slane %v875, 5
        %v878 = vsel %vm566, %v873, %v877
        %v880 = vshrl.u32 %v555, 16
        %v882 = vrot.slane %v880, 4
        %v883 = vshll.u32 %v555, 16
        %v885 = vrot.slane %v883, 5
        %v886 = vor.u32 %v882, %v885
        %v887 = vrot.slane %v886, 4
        %v889 = vshll.u32 %v556, 16
        %v891 = vrot.slane %v889, 5
        %v892 = vsel %vm566, %v887, %v891
        %v893 = vshrl.u32 %v556, 16
        %v895 = vrot.slane %v893, 4
        %v896 = vor.u32 %v895, %v891
        %v897 = vrot.slane %v896, 4
        %v899 = vshll.u32 %v557, 16
        %v901 = vrot.slane %v899, 5
        %v902 = vsel %vm566, %v897, %v901
        %v904 = vshrl.u32 %v558, 16
        %v906 = vrot.slane %v904, 4
        %v907 = vshll.u32 %v558, 16
        %v909 = vrot.slane %v907, 5
        %v910 = vor.u32 %v906, %v909
        %v911 = vrot.slane %v910, 4
        %v913 = vshll.u32 %v559, 16
        %v915 = vrot.slane %v913, 5
        %v916 = vsel %vm566, %v911, %v915
        %v917 = vshrl.u32 %v559, 16
        %v919 = vrot.slane %v917, 4
        %v920 = vor.u32 %v919, %v915
        %v921 = vrot.slane %v920, 4
        %v923 = vshll.u32 %v560, 16
        %v925 = vrot.slane %v923, 5
        %v926 = vsel %vm566, %v921, %v925
        %v928 = vshrl.u32 %v561, 16
        %v930 = vrot.slane %v928, 4
        %v931 = vshll.u32 %v561, 16
        %v933 = vrot.slane %v931, 5
        %v934 = vor.u32 %v930, %v933
        %v935 = vrot.slane %v934, 4
        %v937 = vshll.u32 %v562, 16
        %v939 = vrot.slane %v937, 5
        %v940 = vsel %vm566, %v935, %v939
        %v941 = vshrl.u32 %v562, 16
        %v943 = vrot.slane %v941, 4
        %v944 = vor.u32 %v943, %v939
        %v945 = vrot.slane %v944, 4
        %v947 = vshll.u32 %v563, 16
        %v949 = vrot.slane %v947, 5
        %v950 = vsel %vm566, %v945, %v949
        %s951 = scalar_lea.vmem %s219, 2
        %v952 = vld [vmem:[%s951] sm:$0x3]
        %v953 = vunpack.c.l.b16 %v580
        %v954 = vunpack.c.l.b16 %v590
        %v955 = vunpack.c.l.b16 %v604
        %v956 = vunpack.c.l.b16 %v614
        %v957 = vunpack.c.l.b16 %v628
        %v958 = vunpack.c.l.b16 %v638
        %v959 = vunpack.c.l.b16 %v652
        %v960 = vunpack.c.l.b16 %v662
        %v961 = vunpack.c.l.b16 %v676
        %v962 = vunpack.c.l.b16 %v686
        %v963 = vunpack.c.l.b16 %v700
        %v964 = vunpack.c.l.b16 %v710
        %v965 = vunpack.c.l.b16 %v724
        %v966 = vunpack.c.l.b16 %v734
        %v967 = vunpack.c.l.b16 %v748
        %v968 = vunpack.c.l.b16 %v758
        %v969 = vunpack.c.l.b16 %v772
        %v970 = vunpack.c.l.b16 %v782
        %v971 = vunpack.c.l.b16 %v796
        %v972 = vunpack.c.l.b16 %v806
        %v973 = vunpack.c.l.b16 %v820
        %v974 = vunpack.c.l.b16 %v830
        %v975 = vunpack.c.l.b16 %v844
        %v976 = vunpack.c.l.b16 %v854
        %v977 = vunpack.c.l.b16 %v868
        %v978 = vunpack.c.l.b16 %v878
        %v979 = vunpack.c.l.b16 %v892
        %v980 = vunpack.c.l.b16 %v902
        %v981 = vunpack.c.l.b16 %v916
        %v982 = vunpack.c.l.b16 %v926
        %v983 = vunpack.c.l.b16 %v940
        %v984 = vunpack.c.l.b16 %v950
        %v985 = vpack.c.b16 %v954, %v953
        %v986 = vpack.c.b16 %v956, %v955
        %v987 = vpack.c.b16 %v958, %v957
        %v988 = vpack.c.b16 %v960, %v959
        %v989 = vpack.c.b16 %v962, %v961
        %v990 = vpack.c.b16 %v964, %v963
        %v991 = vpack.c.b16 %v966, %v965
        %v992 = vpack.c.b16 %v968, %v967
        %v993 = vpack.c.b16 %v970, %v969
        %v994 = vpack.c.b16 %v972, %v971
        %v995 = vpack.c.b16 %v974, %v973
        %v996 = vpack.c.b16 %v976, %v975
        %v997 = vpack.c.b16 %v978, %v977
        %v998 = vpack.c.b16 %v980, %v979
        %v999 = vpack.c.b16 %v982, %v981
        %v1000 = vpack.c.b16 %v984, %v983
        %v1002 = vsel %vm342, %v985, 0
        %v1005 = vsel %vm342, %v986, 0
        %v1008 = vsel %vm342, %v987, 0
        %v1011 = vsel %vm342, %v988, 0
        %v1014 = vsel %vm342, %v989, 0
        %v1017 = vsel %vm342, %v990, 0
        %v1020 = vsel %vm342, %v991, 0
        %v1023 = vsel %vm342, %v992, 0
        %v1026 = vsel %vm342, %v993, 0
        %v1029 = vsel %vm342, %v994, 0
        %v1032 = vsel %vm342, %v995, 0
        %v1035 = vsel %vm342, %v996, 0
        %v1038 = vsel %vm342, %v997, 0
        %v1041 = vsel %vm342, %v998, 0
        %v1044 = vsel %vm342, %v999, 0
        %v1047 = vsel %vm342, %v1000, 0
        %v1050 = vsel %vm391, %v952, 0
        %1052 = vmatpush.bf16.msra.mxu0 0
        %1053 = vmatpush.bf16.msra.mxu0 0
        %1054 = vmatpush.bf16.msra.mxu0 0
        %1055 = vmatpush.bf16.msra.mxu0 0
        %1056 = vmatpush.bf16.msra.mxu0 0
        %1057 = vmatpush.bf16.msra.mxu0 0
        %1058 = vmatpush.bf16.msra.mxu0 0
        %1059 = vmatpush.bf16.msra.mxu0 %v1050
        %1060 = vmatmul.bf16.gmra.mxu0 %v1002
        %v1061 = vpop.f32.mrf.mxu0
        %v1062 = vadd.f32 0.0, %v1061
        %v1063 = vpop.f32.mrf.mxu0
        %v1064 = vadd.f32 0.0, %v1063
        %1065 = vmatmul.bf16.gmra.mxu0 %v1005
        %v1066 = vpop.f32.mrf.mxu0
        %v1067 = vadd.f32 0.0, %v1066
        %v1068 = vpop.f32.mrf.mxu0
        %v1069 = vadd.f32 0.0, %v1068
        %1070 = vmatmul.bf16.gmra.mxu0 %v1008
        %v1071 = vpop.f32.mrf.mxu0
        %v1072 = vadd.f32 0.0, %v1071
        %v1073 = vpop.f32.mrf.mxu0
        %v1074 = vadd.f32 0.0, %v1073
        %1075 = vmatmul.bf16.gmra.mxu0 %v1011
        %v1076 = vpop.f32.mrf.mxu0
        %v1077 = vadd.f32 0.0, %v1076
        %v1078 = vpop.f32.mrf.mxu0
        %v1079 = vadd.f32 0.0, %v1078
        %1080 = vmatmul.bf16.gmra.mxu0 %v1014
        %v1081 = vpop.f32.mrf.mxu0
        %v1082 = vadd.f32 0.0, %v1081
        %v1083 = vpop.f32.mrf.mxu0
        %v1084 = vadd.f32 0.0, %v1083
        %1085 = vmatmul.bf16.gmra.mxu0 %v1017
        %v1086 = vpop.f32.mrf.mxu0
        %v1087 = vadd.f32 0.0, %v1086
        %v1088 = vpop.f32.mrf.mxu0
        %v1089 = vadd.f32 0.0, %v1088
        %1090 = vmatmul.bf16.gmra.mxu0 %v1020
        %v1091 = vpop.f32.mrf.mxu0
        %v1092 = vadd.f32 0.0, %v1091
        %v1093 = vpop.f32.mrf.mxu0
        %v1094 = vadd.f32 0.0, %v1093
        %1095 = vmatmul.bf16.gmra.mxu0 %v1023
        %v1096 = vpop.f32.mrf.mxu0
        %v1097 = vadd.f32 0.0, %v1096
        %v1098 = vpop.f32.mrf.mxu0
        %v1099 = vadd.f32 0.0, %v1098
        %1100 = vmatmul.bf16.gmra.mxu0 %v1026
        %v1101 = vpop.f32.mrf.mxu0
        %v1102 = vadd.f32 0.0, %v1101
        %v1103 = vpop.f32.mrf.mxu0
        %v1104 = vadd.f32 0.0, %v1103
        %1105 = vmatmul.bf16.gmra.mxu0 %v1029
        %v1106 = vpop.f32.mrf.mxu0
        %v1107 = vadd.f32 0.0, %v1106
        %v1108 = vpop.f32.mrf.mxu0
        %v1109 = vadd.f32 0.0, %v1108
        %1110 = vmatmul.bf16.gmra.mxu0 %v1032
        %v1111 = vpop.f32.mrf.mxu0
        %v1112 = vadd.f32 0.0, %v1111
        %v1113 = vpop.f32.mrf.mxu0
        %v1114 = vadd.f32 0.0, %v1113
        %1115 = vmatmul.bf16.gmra.mxu0 %v1035
        %v1116 = vpop.f32.mrf.mxu0
        %v1117 = vadd.f32 0.0, %v1116
        %v1118 = vpop.f32.mrf.mxu0
        %v1119 = vadd.f32 0.0, %v1118
        %1120 = vmatmul.bf16.gmra.mxu0 %v1038
        %v1121 = vpop.f32.mrf.mxu0
        %v1122 = vadd.f32 0.0, %v1121
        %v1123 = vpop.f32.mrf.mxu0
        %v1124 = vadd.f32 0.0, %v1123
        %1125 = vmatmul.bf16.gmra.mxu0 %v1041
        %v1126 = vpop.f32.mrf.mxu0
        %v1127 = vadd.f32 0.0, %v1126
        %v1128 = vpop.f32.mrf.mxu0
        %v1129 = vadd.f32 0.0, %v1128
        %1130 = vmatmul.bf16.gmra.mxu0 %v1044
        %v1131 = vpop.f32.mrf.mxu0
        %v1132 = vadd.f32 0.0, %v1131
        %v1133 = vpop.f32.mrf.mxu0
        %v1134 = vadd.f32 0.0, %v1133
        %1135 = vmatmul.bf16.gmra.mxu0 %v1047
        %v1136 = vpop.f32.mrf.mxu0
        %v1137 = vadd.f32 0.0, %v1136
        %v1138 = vpop.f32.mrf.mxu0
        %v1139 = vadd.f32 0.0, %v1138
        %1140 = vdwg.mxu0
        %v1141 = vld [vmem:[#allocation2] sm:$0xff]
        %v1142 = vld [vmem:[#allocation2 + $0x8] sm:$0xff]
        %v1143 = vld [vmem:[#allocation2 + $0x10] sm:$0xff]
        %v1144 = vld [vmem:[#allocation2 + $0x18] sm:$0xff]
        %v1145 = vld [vmem:[#allocation2 + $0x20] sm:$0xff]
        %v1146 = vld [vmem:[#allocation2 + $0x28] sm:$0xff]
        %v1147 = vld [vmem:[#allocation2 + $0x30] sm:$0xff]
        %v1148 = vld [vmem:[#allocation2 + $0x38] sm:$0xff]
        %v1149 = vld [vmem:[#allocation2 + $0x40] sm:$0xff]
        %v1150 = vld [vmem:[#allocation2 + $0x48] sm:$0xff]
        %v1151 = vld [vmem:[#allocation2 + $0x50] sm:$0xff]
        %v1152 = vld [vmem:[#allocation2 + $0x58] sm:$0xff]
        %v1153 = vld [vmem:[#allocation2 + $0x60] sm:$0xff]
        %v1154 = vld [vmem:[#allocation2 + $0x68] sm:$0xff]
        %v1155 = vld [vmem:[#allocation2 + $0x70] sm:$0xff]
        %v1156 = vld [vmem:[#allocation2 + $0x78] sm:$0xff]
        %v1157 = vld [vmem:[#allocation2 + $0x80] sm:$0xff]
        %v1158 = vld [vmem:[#allocation2 + $0x88] sm:$0xff]
        %v1159 = vld [vmem:[#allocation2 + $0x90] sm:$0xff]
        %v1160 = vld [vmem:[#allocation2 + $0x98] sm:$0xff]
        %v1161 = vld [vmem:[#allocation2 + $0xa0] sm:$0xff]
        %v1162 = vld [vmem:[#allocation2 + $0xa8] sm:$0xff]
        %v1163 = vld [vmem:[#allocation2 + $0xb0] sm:$0xff]
        %v1164 = vld [vmem:[#allocation2 + $0xb8] sm:$0xff]
        %v1165 = vld [vmem:[#allocation2 + $0xc0] sm:$0xff]
        %v1166 = vld [vmem:[#allocation2 + $0xc8] sm:$0xff]
        %v1167 = vld [vmem:[#allocation2 + $0xd0] sm:$0xff]
        %v1168 = vld [vmem:[#allocation2 + $0xd8] sm:$0xff]
        %v1169 = vld [vmem:[#allocation2 + $0xe0] sm:$0xff]
        %v1170 = vld [vmem:[#allocation2 + $0xe8] sm:$0xff]
        %v1171 = vld [vmem:[#allocation2 + $0xf0] sm:$0xff]
        %v1172 = vld [vmem:[#allocation2 + $0xf8] sm:$0xff]
        %v1173 = vadd.f32 %v1141, %v1062
        %v1174 = vadd.f32 %v1142, %v1064
        %v1175 = vadd.f32 %v1143, %v1067
        %v1176 = vadd.f32 %v1144, %v1069
        %v1177 = vadd.f32 %v1145, %v1072
        %v1178 = vadd.f32 %v1146, %v1074
        %v1179 = vadd.f32 %v1147, %v1077
        %v1180 = vadd.f32 %v1148, %v1079
        %v1181 = vadd.f32 %v1149, %v1082
        %v1182 = vadd.f32 %v1150, %v1084
        %v1183 = vadd.f32 %v1151, %v1087
        %v1184 = vadd.f32 %v1152, %v1089
        %v1185 = vadd.f32 %v1153, %v1092
        %v1186 = vadd.f32 %v1154, %v1094
        %v1187 = vadd.f32 %v1155, %v1097
        %v1188 = vadd.f32 %v1156, %v1099
        %v1189 = vadd.f32 %v1157, %v1102
        %v1190 = vadd.f32 %v1158, %v1104
        %v1191 = vadd.f32 %v1159, %v1107
        %v1192 = vadd.f32 %v1160, %v1109
        %v1193 = vadd.f32 %v1161, %v1112
        %v1194 = vadd.f32 %v1162, %v1114
        %v1195 = vadd.f32 %v1163, %v1117
        %v1196 = vadd.f32 %v1164, %v1119
        %v1197 = vadd.f32 %v1165, %v1122
        %v1198 = vadd.f32 %v1166, %v1124
        %v1199 = vadd.f32 %v1167, %v1127
        %v1200 = vadd.f32 %v1168, %v1129
        %v1201 = vadd.f32 %v1169, %v1132
        %v1202 = vadd.f32 %v1170, %v1134
        %v1203 = vadd.f32 %v1171, %v1137
        %v1204 = vadd.f32 %v1172, %v1139
        %1205 = vst [vmem:[#allocation2] sm:$0xff] %v1173
        %1206 = vst [vmem:[#allocation2 + $0x8] sm:$0xff] %v1174
        %1207 = vst [vmem:[#allocation2 + $0x10] sm:$0xff] %v1175
        %1208 = vst [vmem:[#allocation2 + $0x18] sm:$0xff] %v1176
        %1209 = vst [vmem:[#allocation2 + $0x20] sm:$0xff] %v1177
        %1210 = vst [vmem:[#allocation2 + $0x28] sm:$0xff] %v1178
        %1211 = vst [vmem:[#allocation2 + $0x30] sm:$0xff] %v1179
        %1212 = vst [vmem:[#allocation2 + $0x38] sm:$0xff] %v1180
        %1213 = vst [vmem:[#allocation2 + $0x40] sm:$0xff] %v1181
        %1214 = vst [vmem:[#allocation2 + $0x48] sm:$0xff] %v1182
        %1215 = vst [vmem:[#allocation2 + $0x50] sm:$0xff] %v1183
        %1216 = vst [vmem:[#allocation2 + $0x58] sm:$0xff] %v1184
        %1217 = vst [vmem:[#allocation2 + $0x60] sm:$0xff] %v1185
        %1218 = vst [vmem:[#allocation2 + $0x68] sm:$0xff] %v1186
        %1219 = vst [vmem:[#allocation2 + $0x70] sm:$0xff] %v1187
        %1220 = vst [vmem:[#allocation2 + $0x78] sm:$0xff] %v1188
        %1221 = vst [vmem:[#allocation2 + $0x80] sm:$0xff] %v1189
        %1222 = vst [vmem:[#allocation2 + $0x88] sm:$0xff] %v1190
        %1223 = vst [vmem:[#allocation2 + $0x90] sm:$0xff] %v1191
        %1224 = vst [vmem:[#allocation2 + $0x98] sm:$0xff] %v1192
        %1225 = vst [vmem:[#allocation2 + $0xa0] sm:$0xff] %v1193
        %1226 = vst [vmem:[#allocation2 + $0xa8] sm:$0xff] %v1194
        %1227 = vst [vmem:[#allocation2 + $0xb0] sm:$0xff] %v1195
        %1228 = vst [vmem:[#allocation2 + $0xb8] sm:$0xff] %v1196
        %1229 = vst [vmem:[#allocation2 + $0xc0] sm:$0xff] %v1197
        %1230 = vst [vmem:[#allocation2 + $0xc8] sm:$0xff] %v1198
        %1231 = vst [vmem:[#allocation2 + $0xd0] sm:$0xff] %v1199
        %1232 = vst [vmem:[#allocation2 + $0xd8] sm:$0xff] %v1200
        %1233 = vst [vmem:[#allocation2 + $0xe0] sm:$0xff] %v1201
        %1234 = vst [vmem:[#allocation2 + $0xe8] sm:$0xff] %v1202
        %1235 = vst [vmem:[#allocation2 + $0xf0] sm:$0xff] %v1203
        %1236 = vst [vmem:[#allocation2 + $0xf8] sm:$0xff] %v1204
        %v1237 = vld [vmem:[%s228] sm:$0xe]
        %v1238 = vld [vmem:[%s228 + $0x4] sm:$0xf]
        %v1239 = vld [vmem:[%s228 + $0x8] sm:$0x1]
        %v1240 = vld [vmem:[%s228 + $0xc] sm:$0xe]
        %v1241 = vld [vmem:[%s228 + $0x10] sm:$0xf]
        %v1242 = vld [vmem:[%s228 + $0x14] sm:$0x1]
        %v1243 = vld [vmem:[%s228 + $0x18] sm:$0xe]
        %v1244 = vld [vmem:[%s228 + $0x1c] sm:$0xf]
        %v1245 = vld [vmem:[%s228 + $0x20] sm:$0x1]
        %v1246 = vld [vmem:[%s228 + $0x24] sm:$0xe]
        %v1247 = vld [vmem:[%s228 + $0x28] sm:$0xf]
        %v1248 = vld [vmem:[%s228 + $0x2c] sm:$0x1]
        %v1249 = vld [vmem:[%s228 + $0x30] sm:$0xe]
        %v1250 = vld [vmem:[%s228 + $0x34] sm:$0xf]
        %v1251 = vld [vmem:[%s228 + $0x38] sm:$0x1]
        %v1252 = vld [vmem:[%s228 + $0x3c] sm:$0xe]
        %v1253 = vld [vmem:[%s228 + $0x40] sm:$0xf]
        %v1254 = vld [vmem:[%s228 + $0x44] sm:$0x1]
        %v1255 = vld [vmem:[%s228 + $0x48] sm:$0xe]
        %v1256 = vld [vmem:[%s228 + $0x4c] sm:$0xf]
        %v1257 = vld [vmem:[%s228 + $0x50] sm:$0x1]
        %v1258 = vld [vmem:[%s228 + $0x54] sm:$0xe]
        %v1259 = vld [vmem:[%s228 + $0x58] sm:$0xf]
        %v1260 = vld [vmem:[%s228 + $0x5c] sm:$0x1]
        %v1261 = vld [vmem:[%s228 + $0x60] sm:$0xe]
        %v1262 = vld [vmem:[%s228 + $0x64] sm:$0xf]
        %v1263 = vld [vmem:[%s228 + $0x68] sm:$0x1]
        %v1264 = vld [vmem:[%s228 + $0x6c] sm:$0xe]
        %v1265 = vld [vmem:[%s228 + $0x70] sm:$0xf]
        %v1266 = vld [vmem:[%s228 + $0x74] sm:$0x1]
        %v1267 = vld [vmem:[%s228 + $0x78] sm:$0xe]
        %v1268 = vld [vmem:[%s228 + $0x7c] sm:$0xf]
        %v1269 = vld [vmem:[%s228 + $0x80] sm:$0x1]
        %v1270 = vld [vmem:[%s228 + $0x84] sm:$0xe]
        %v1271 = vld [vmem:[%s228 + $0x88] sm:$0xf]
        %v1272 = vld [vmem:[%s228 + $0x8c] sm:$0x1]
        %v1273 = vld [vmem:[%s228 + $0x90] sm:$0xe]
        %v1274 = vld [vmem:[%s228 + $0x94] sm:$0xf]
        %v1275 = vld [vmem:[%s228 + $0x98] sm:$0x1]
        %v1276 = vld [vmem:[%s228 + $0x9c] sm:$0xe]
        %v1277 = vld [vmem:[%s228 + $0xa0] sm:$0xf]
        %v1278 = vld [vmem:[%s228 + $0xa4] sm:$0x1]
        %v1279 = vld [vmem:[%s228 + $0xa8] sm:$0xe]
        %v1280 = vld [vmem:[%s228 + $0xac] sm:$0xf]
        %v1281 = vld [vmem:[%s228 + $0xb0] sm:$0x1]
        %v1282 = vld [vmem:[%s228 + $0xb4] sm:$0xe]
        %v1283 = vld [vmem:[%s228 + $0xb8] sm:$0xf]
        %v1284 = vld [vmem:[%s228 + $0xbc] sm:$0x1]
        %vm1333 = vcmask 1042432
        %vm1334 = vcmask 1046532
        %vm1335 = vmor %vm1333, %vm1334
        %v1336 = vrot.slane %v1237, 5
        %v1337 = vrot.slane %v1336, 4
        %v1338 = vrot.slane %v1238, 5
        %v1339 = vsel %vm1335, %v1337, %v1338
        %v1340 = vrot.slane %v1338, 4
        %v1341 = vrot.slane %v1239, 5
        %v1342 = vsel %vm1335, %v1340, %v1341
        %v1343 = vrot.slane %v1240, 5
        %v1344 = vrot.slane %v1343, 4
        %v1345 = vrot.slane %v1241, 5
        %v1346 = vsel %vm1335, %v1344, %v1345
        %v1347 = vrot.slane %v1345, 4
        %v1348 = vrot.slane %v1242, 5
        %v1349 = vsel %vm1335, %v1347, %v1348
        %v1350 = vrot.slane %v1243, 5
        %v1351 = vrot.slane %v1350, 4
        %v1352 = vrot.slane %v1244, 5
        %v1353 = vsel %vm1335, %v1351, %v1352
        %v1354 = vrot.slane %v1352, 4
        %v1355 = vrot.slane %v1245, 5
        %v1356 = vsel %vm1335, %v1354, %v1355
        %v1357 = vrot.slane %v1246, 5
        %v1358 = vrot.slane %v1357, 4
        %v1359 = vrot.slane %v1247, 5
        %v1360 = vsel %vm1335, %v1358, %v1359
        %v1361 = vrot.slane %v1359, 4
        %v1362 = vrot.slane %v1248, 5
        %v1363 = vsel %vm1335, %v1361, %v1362
        %v1364 = vrot.slane %v1249, 5
        %v1365 = vrot.slane %v1364, 4
        %v1366 = vrot.slane %v1250, 5
        %v1367 = vsel %vm1335, %v1365, %v1366
        %v1368 = vrot.slane %v1366, 4
        %v1369 = vrot.slane %v1251, 5
        %v1370 = vsel %vm1335, %v1368, %v1369
        %v1371 = vrot.slane %v1252, 5
        %v1372 = vrot.slane %v1371, 4
        %v1373 = vrot.slane %v1253, 5
        %v1374 = vsel %vm1335, %v1372, %v1373
        %v1375 = vrot.slane %v1373, 4
        %v1376 = vrot.slane %v1254, 5
        %v1377 = vsel %vm1335, %v1375, %v1376
        %v1378 = vrot.slane %v1255, 5
        %v1379 = vrot.slane %v1378, 4
        %v1380 = vrot.slane %v1256, 5
        %v1381 = vsel %vm1335, %v1379, %v1380
        %v1382 = vrot.slane %v1380, 4
        %v1383 = vrot.slane %v1257, 5
        %v1384 = vsel %vm1335, %v1382, %v1383
        %v1385 = vrot.slane %v1258, 5
        %v1386 = vrot.slane %v1385, 4
        %v1387 = vrot.slane %v1259, 5
        %v1388 = vsel %vm1335, %v1386, %v1387
        %v1389 = vrot.slane %v1387, 4
        %v1390 = vrot.slane %v1260, 5
        %v1391 = vsel %vm1335, %v1389, %v1390
        %v1392 = vrot.slane %v1261, 5
        %v1393 = vrot.slane %v1392, 4
        %v1394 = vrot.slane %v1262, 5
        %v1395 = vsel %vm1335, %v1393, %v1394
        %v1396 = vrot.slane %v1394, 4
        %v1397 = vrot.slane %v1263, 5
        %v1398 = vsel %vm1335, %v1396, %v1397
        %v1399 = vrot.slane %v1264, 5
        %v1400 = vrot.slane %v1399, 4
        %v1401 = vrot.slane %v1265, 5
        %v1402 = vsel %vm1335, %v1400, %v1401
        %v1403 = vrot.slane %v1401, 4
        %v1404 = vrot.slane %v1266, 5
        %v1405 = vsel %vm1335, %v1403, %v1404
        %v1406 = vrot.slane %v1267, 5
        %v1407 = vrot.slane %v1406, 4
        %v1408 = vrot.slane %v1268, 5
        %v1409 = vsel %vm1335, %v1407, %v1408
        %v1410 = vrot.slane %v1408, 4
        %v1411 = vrot.slane %v1269, 5
        %v1412 = vsel %vm1335, %v1410, %v1411
        %v1413 = vrot.slane %v1270, 5
        %v1414 = vrot.slane %v1413, 4
        %v1415 = vrot.slane %v1271, 5
        %v1416 = vsel %vm1335, %v1414, %v1415
        %v1417 = vrot.slane %v1415, 4
        %v1418 = vrot.slane %v1272, 5
        %v1419 = vsel %vm1335, %v1417, %v1418
        %v1420 = vrot.slane %v1273, 5
        %v1421 = vrot.slane %v1420, 4
        %v1422 = vrot.slane %v1274, 5
        %v1423 = vsel %vm1335, %v1421, %v1422
        %v1424 = vrot.slane %v1422, 4
        %v1425 = vrot.slane %v1275, 5
        %v1426 = vsel %vm1335, %v1424, %v1425
        %v1427 = vrot.slane %v1276, 5
        %v1428 = vrot.slane %v1427, 4
        %v1429 = vrot.slane %v1277, 5
        %v1430 = vsel %vm1335, %v1428, %v1429
        %v1431 = vrot.slane %v1429, 4
        %v1432 = vrot.slane %v1278, 5
        %v1433 = vsel %vm1335, %v1431, %v1432
        %v1434 = vrot.slane %v1279, 5
        %v1435 = vrot.slane %v1434, 4
        %v1436 = vrot.slane %v1280, 5
        %v1437 = vsel %vm1335, %v1435, %v1436
        %v1438 = vrot.slane %v1436, 4
        %v1439 = vrot.slane %v1281, 5
        %v1440 = vsel %vm1335, %v1438, %v1439
        %v1441 = vrot.slane %v1282, 5
        %v1442 = vrot.slane %v1441, 4
        %v1443 = vrot.slane %v1283, 5
        %v1444 = vsel %vm1335, %v1442, %v1443
        %v1445 = vrot.slane %v1443, 4
        %v1446 = vrot.slane %v1284, 5
        %v1447 = vsel %vm1335, %v1445, %v1446
        %s1448 = scalar_lea.vmem %s219, 4
        %v1449 = vld [vmem:[%s1448] sm:$0x3]
        %v1450 = vunpack.c.l.b16 %v1339
        %v1451 = vunpack.c.l.b16 %v1342
        %v1452 = vunpack.c.l.b16 %v1346
        %v1453 = vunpack.c.l.b16 %v1349
        %v1454 = vunpack.c.l.b16 %v1353
        %v1455 = vunpack.c.l.b16 %v1356
        %v1456 = vunpack.c.l.b16 %v1360
        %v1457 = vunpack.c.l.b16 %v1363
        %v1458 = vunpack.c.l.b16 %v1367
        %v1459 = vunpack.c.l.b16 %v1370
        %v1460 = vunpack.c.l.b16 %v1374
        %v1461 = vunpack.c.l.b16 %v1377
        %v1462 = vunpack.c.l.b16 %v1381
        %v1463 = vunpack.c.l.b16 %v1384
        %v1464 = vunpack.c.l.b16 %v1388
        %v1465 = vunpack.c.l.b16 %v1391
        %v1466 = vunpack.c.l.b16 %v1395
        %v1467 = vunpack.c.l.b16 %v1398
        %v1468 = vunpack.c.l.b16 %v1402
        %v1469 = vunpack.c.l.b16 %v1405
        %v1470 = vunpack.c.l.b16 %v1409
        %v1471 = vunpack.c.l.b16 %v1412
        %v1472 = vunpack.c.l.b16 %v1416
        %v1473 = vunpack.c.l.b16 %v1419
        %v1474 = vunpack.c.l.b16 %v1423
        %v1475 = vunpack.c.l.b16 %v1426
        %v1476 = vunpack.c.l.b16 %v1430
        %v1477 = vunpack.c.l.b16 %v1433
        %v1478 = vunpack.c.l.b16 %v1437
        %v1479 = vunpack.c.l.b16 %v1440
        %v1480 = vunpack.c.l.b16 %v1444
        %v1481 = vunpack.c.l.b16 %v1447
        %v1482 = vpack.c.b16 %v1451, %v1450
        %v1483 = vpack.c.b16 %v1453, %v1452
        %v1484 = vpack.c.b16 %v1455, %v1454
        %v1485 = vpack.c.b16 %v1457, %v1456
        %v1486 = vpack.c.b16 %v1459, %v1458
        %v1487 = vpack.c.b16 %v1461, %v1460
        %v1488 = vpack.c.b16 %v1463, %v1462
        %v1489 = vpack.c.b16 %v1465, %v1464
        %v1490 = vpack.c.b16 %v1467, %v1466
        %v1491 = vpack.c.b16 %v1469, %v1468
        %v1492 = vpack.c.b16 %v1471, %v1470
        %v1493 = vpack.c.b16 %v1473, %v1472
        %v1494 = vpack.c.b16 %v1475, %v1474
        %v1495 = vpack.c.b16 %v1477, %v1476
        %v1496 = vpack.c.b16 %v1479, %v1478
        %v1497 = vpack.c.b16 %v1481, %v1480
        %v1499 = vsel %vm342, %v1482, 0
        %v1502 = vsel %vm342, %v1483, 0
        %v1505 = vsel %vm342, %v1484, 0
        %v1508 = vsel %vm342, %v1485, 0
        %v1511 = vsel %vm342, %v1486, 0
        %v1514 = vsel %vm342, %v1487, 0
        %v1517 = vsel %vm342, %v1488, 0
        %v1520 = vsel %vm342, %v1489, 0
        %v1523 = vsel %vm342, %v1490, 0
        %v1526 = vsel %vm342, %v1491, 0
        %v1529 = vsel %vm342, %v1492, 0
        %v1532 = vsel %vm342, %v1493, 0
        %v1535 = vsel %vm342, %v1494, 0
        %v1538 = vsel %vm342, %v1495, 0
        %v1541 = vsel %vm342, %v1496, 0
        %v1544 = vsel %vm342, %v1497, 0
        %v1547 = vsel %vm391, %v1449, 0
        %1549 = vmatpush.bf16.msra.mxu0 0
        %1550 = vmatpush.bf16.msra.mxu0 0
        %1551 = vmatpush.bf16.msra.mxu0 0
        %1552 = vmatpush.bf16.msra.mxu0 0
        %1553 = vmatpush.bf16.msra.mxu0 0
        %1554 = vmatpush.bf16.msra.mxu0 0
        %1555 = vmatpush.bf16.msra.mxu0 0
        %1556 = vmatpush.bf16.msra.mxu0 %v1547
        %1557 = vmatmul.bf16.gmra.mxu0 %v1499
        %v1558 = vpop.f32.mrf.mxu0
        %v1559 = vadd.f32 0.0, %v1558
        %v1560 = vpop.f32.mrf.mxu0
        %v1561 = vadd.f32 0.0, %v1560
        %1562 = vmatmul.bf16.gmra.mxu0 %v1502
        %v1563 = vpop.f32.mrf.mxu0
        %v1564 = vadd.f32 0.0, %v1563
        %v1565 = vpop.f32.mrf.mxu0
        %v1566 = vadd.f32 0.0, %v1565
        %1567 = vmatmul.bf16.gmra.mxu0 %v1505
        %v1568 = vpop.f32.mrf.mxu0
        %v1569 = vadd.f32 0.0, %v1568
        %v1570 = vpop.f32.mrf.mxu0
        %v1571 = vadd.f32 0.0, %v1570
        %1572 = vmatmul.bf16.gmra.mxu0 %v1508
        %v1573 = vpop.f32.mrf.mxu0
        %v1574 = vadd.f32 0.0, %v1573
        %v1575 = vpop.f32.mrf.mxu0
        %v1576 = vadd.f32 0.0, %v1575
        %1577 = vmatmul.bf16.gmra.mxu0 %v1511
        %v1578 = vpop.f32.mrf.mxu0
        %v1579 = vadd.f32 0.0, %v1578
        %v1580 = vpop.f32.mrf.mxu0
        %v1581 = vadd.f32 0.0, %v1580
        %1582 = vmatmul.bf16.gmra.mxu0 %v1514
        %v1583 = vpop.f32.mrf.mxu0
        %v1584 = vadd.f32 0.0, %v1583
        %v1585 = vpop.f32.mrf.mxu0
        %v1586 = vadd.f32 0.0, %v1585
        %1587 = vmatmul.bf16.gmra.mxu0 %v1517
        %v1588 = vpop.f32.mrf.mxu0
        %v1589 = vadd.f32 0.0, %v1588
        %v1590 = vpop.f32.mrf.mxu0
        %v1591 = vadd.f32 0.0, %v1590
        %1592 = vmatmul.bf16.gmra.mxu0 %v1520
        %v1593 = vpop.f32.mrf.mxu0
        %v1594 = vadd.f32 0.0, %v1593
        %v1595 = vpop.f32.mrf.mxu0
        %v1596 = vadd.f32 0.0, %v1595
        %1597 = vmatmul.bf16.gmra.mxu0 %v1523
        %v1598 = vpop.f32.mrf.mxu0
        %v1599 = vadd.f32 0.0, %v1598
        %v1600 = vpop.f32.mrf.mxu0
        %v1601 = vadd.f32 0.0, %v1600
        %1602 = vmatmul.bf16.gmra.mxu0 %v1526
        %v1603 = vpop.f32.mrf.mxu0
        %v1604 = vadd.f32 0.0, %v1603
        %v1605 = vpop.f32.mrf.mxu0
        %v1606 = vadd.f32 0.0, %v1605
        %1607 = vmatmul.bf16.gmra.mxu0 %v1529
        %v1608 = vpop.f32.mrf.mxu0
        %v1609 = vadd.f32 0.0, %v1608
        %v1610 = vpop.f32.mrf.mxu0
        %v1611 = vadd.f32 0.0, %v1610
        %1612 = vmatmul.bf16.gmra.mxu0 %v1532
        %v1613 = vpop.f32.mrf.mxu0
        %v1614 = vadd.f32 0.0, %v1613
        %v1615 = vpop.f32.mrf.mxu0
        %v1616 = vadd.f32 0.0, %v1615
        %1617 = vmatmul.bf16.gmra.mxu0 %v1535
        %v1618 = vpop.f32.mrf.mxu0
        %v1619 = vadd.f32 0.0, %v1618
        %v1620 = vpop.f32.mrf.mxu0
        %v1621 = vadd.f32 0.0, %v1620
        %1622 = vmatmul.bf16.gmra.mxu0 %v1538
        %v1623 = vpop.f32.mrf.mxu0
        %v1624 = vadd.f32 0.0, %v1623
        %v1625 = vpop.f32.mrf.mxu0
        %v1626 = vadd.f32 0.0, %v1625
        %1627 = vmatmul.bf16.gmra.mxu0 %v1541
        %v1628 = vpop.f32.mrf.mxu0
        %v1629 = vadd.f32 0.0, %v1628
        %v1630 = vpop.f32.mrf.mxu0
        %v1631 = vadd.f32 0.0, %v1630
        %1632 = vmatmul.bf16.gmra.mxu0 %v1544
        %v1633 = vpop.f32.mrf.mxu0
        %v1634 = vadd.f32 0.0, %v1633
        %v1635 = vpop.f32.mrf.mxu0
        %v1636 = vadd.f32 0.0, %v1635
        %1637 = vdwg.mxu0
        %v1638 = vld [vmem:[#allocation2] sm:$0xff]
        %v1639 = vld [vmem:[#allocation2 + $0x8] sm:$0xff]
        %v1640 = vld [vmem:[#allocation2 + $0x10] sm:$0xff]
        %v1641 = vld [vmem:[#allocation2 + $0x18] sm:$0xff]
        %v1642 = vld [vmem:[#allocation2 + $0x20] sm:$0xff]
        %v1643 = vld [vmem:[#allocation2 + $0x28] sm:$0xff]
        %v1644 = vld [vmem:[#allocation2 + $0x30] sm:$0xff]
        %v1645 = vld [vmem:[#allocation2 + $0x38] sm:$0xff]
        %v1646 = vld [vmem:[#allocation2 + $0x40] sm:$0xff]
        %v1647 = vld [vmem:[#allocation2 + $0x48] sm:$0xff]
        %v1648 = vld [vmem:[#allocation2 + $0x50] sm:$0xff]
        %v1649 = vld [vmem:[#allocation2 + $0x58] sm:$0xff]
        %v1650 = vld [vmem:[#allocation2 + $0x60] sm:$0xff]
        %v1651 = vld [vmem:[#allocation2 + $0x68] sm:$0xff]
        %v1652 = vld [vmem:[#allocation2 + $0x70] sm:$0xff]
        %v1653 = vld [vmem:[#allocation2 + $0x78] sm:$0xff]
        %v1654 = vld [vmem:[#allocation2 + $0x80] sm:$0xff]
        %v1655 = vld [vmem:[#allocation2 + $0x88] sm:$0xff]
        %v1656 = vld [vmem:[#allocation2 + $0x90] sm:$0xff]
        %v1657 = vld [vmem:[#allocation2 + $0x98] sm:$0xff]
        %v1658 = vld [vmem:[#allocation2 + $0xa0] sm:$0xff]
        %v1659 = vld [vmem:[#allocation2 + $0xa8] sm:$0xff]
        %v1660 = vld [vmem:[#allocation2 + $0xb0] sm:$0xff]
        %v1661 = vld [vmem:[#allocation2 + $0xb8] sm:$0xff]
        %v1662 = vld [vmem:[#allocation2 + $0xc0] sm:$0xff]
        %v1663 = vld [vmem:[#allocation2 + $0xc8] sm:$0xff]
        %v1664 = vld [vmem:[#allocation2 + $0xd0] sm:$0xff]
        %v1665 = vld [vmem:[#allocation2 + $0xd8] sm:$0xff]
        %v1666 = vld [vmem:[#allocation2 + $0xe0] sm:$0xff]
        %v1667 = vld [vmem:[#allocation2 + $0xe8] sm:$0xff]
        %v1668 = vld [vmem:[#allocation2 + $0xf0] sm:$0xff]
        %v1669 = vld [vmem:[#allocation2 + $0xf8] sm:$0xff]
        %v1670 = vadd.f32 %v1638, %v1559
        %v1671 = vadd.f32 %v1639, %v1561
        %v1672 = vadd.f32 %v1640, %v1564
        %v1673 = vadd.f32 %v1641, %v1566
        %v1674 = vadd.f32 %v1642, %v1569
        %v1675 = vadd.f32 %v1643, %v1571
        %v1676 = vadd.f32 %v1644, %v1574
        %v1677 = vadd.f32 %v1645, %v1576
        %v1678 = vadd.f32 %v1646, %v1579
        %v1679 = vadd.f32 %v1647, %v1581
        %v1680 = vadd.f32 %v1648, %v1584
        %v1681 = vadd.f32 %v1649, %v1586
        %v1682 = vadd.f32 %v1650, %v1589
        %v1683 = vadd.f32 %v1651, %v1591
        %v1684 = vadd.f32 %v1652, %v1594
        %v1685 = vadd.f32 %v1653, %v1596
        %v1686 = vadd.f32 %v1654, %v1599
        %v1687 = vadd.f32 %v1655, %v1601
        %v1688 = vadd.f32 %v1656, %v1604
        %v1689 = vadd.f32 %v1657, %v1606
        %v1690 = vadd.f32 %v1658, %v1609
        %v1691 = vadd.f32 %v1659, %v1611
        %v1692 = vadd.f32 %v1660, %v1614
        %v1693 = vadd.f32 %v1661, %v1616
        %v1694 = vadd.f32 %v1662, %v1619
        %v1695 = vadd.f32 %v1663, %v1621
        %v1696 = vadd.f32 %v1664, %v1624
        %v1697 = vadd.f32 %v1665, %v1626
        %v1698 = vadd.f32 %v1666, %v1629
        %v1699 = vadd.f32 %v1667, %v1631
        %v1700 = vadd.f32 %v1668, %v1634
        %v1701 = vadd.f32 %v1669, %v1636
        %1702 = vst [vmem:[#allocation2] sm:$0xff] %v1670
        %1703 = vst [vmem:[#allocation2 + $0x8] sm:$0xff] %v1671
        %1704 = vst [vmem:[#allocation2 + $0x10] sm:$0xff] %v1672
        %1705 = vst [vmem:[#allocation2 + $0x18] sm:$0xff] %v1673
        %1706 = vst [vmem:[#allocation2 + $0x20] sm:$0xff] %v1674
        %1707 = vst [vmem:[#allocation2 + $0x28] sm:$0xff] %v1675
        %1708 = vst [vmem:[#allocation2 + $0x30] sm:$0xff] %v1676
        %1709 = vst [vmem:[#allocation2 + $0x38] sm:$0xff] %v1677
        %1710 = vst [vmem:[#allocation2 + $0x40] sm:$0xff] %v1678
        %1711 = vst [vmem:[#allocation2 + $0x48] sm:$0xff] %v1679
        %1712 = vst [vmem:[#allocation2 + $0x50] sm:$0xff] %v1680
        %1713 = vst [vmem:[#allocation2 + $0x58] sm:$0xff] %v1681
        %1714 = vst [vmem:[#allocation2 + $0x60] sm:$0xff] %v1682
        %1715 = vst [vmem:[#allocation2 + $0x68] sm:$0xff] %v1683
        %1716 = vst [vmem:[#allocation2 + $0x70] sm:$0xff] %v1684
        %1717 = vst [vmem:[#allocation2 + $0x78] sm:$0xff] %v1685
        %1718 = vst [vmem:[#allocation2 + $0x80] sm:$0xff] %v1686
        %1719 = vst [vmem:[#allocation2 + $0x88] sm:$0xff] %v1687
        %1720 = vst [vmem:[#allocation2 + $0x90] sm:$0xff] %v1688
        %1721 = vst [vmem:[#allocation2 + $0x98] sm:$0xff] %v1689
        %1722 = vst [vmem:[#allocation2 + $0xa0] sm:$0xff] %v1690
        %1723 = vst [vmem:[#allocation2 + $0xa8] sm:$0xff] %v1691
        %1724 = vst [vmem:[#allocation2 + $0xb0] sm:$0xff] %v1692
        %1725 = vst [vmem:[#allocation2 + $0xb8] sm:$0xff] %v1693
        %1726 = vst [vmem:[#allocation2 + $0xc0] sm:$0xff] %v1694
        %1727 = vst [vmem:[#allocation2 + $0xc8] sm:$0xff] %v1695
        %1728 = vst [vmem:[#allocation2 + $0xd0] sm:$0xff] %v1696
        %1729 = vst [vmem:[#allocation2 + $0xd8] sm:$0xff] %v1697
        %1730 = vst [vmem:[#allocation2 + $0xe0] sm:$0xff] %v1698
        %1731 = vst [vmem:[#allocation2 + $0xe8] sm:$0xff] %v1699
        %1732 = vst [vmem:[#allocation2 + $0xf0] sm:$0xff] %v1700
        %1733 = vst [vmem:[#allocation2 + $0xf8] sm:$0xff] %v1701
        %s1734 = sadd.s32 %s225, 1
        %s1735 = smul.u32 %s1734, 3
        %s1736 = smul.addr %s1735, 4
        %s1737 = scalar_lea.vmem %s215, %s1736
        %v1738 = vld [vmem:[%s1737] sm:$0xf]
        %v1739 = vld [vmem:[%s1737 + $0x4] sm:$0xf]
        %v1740 = vld [vmem:[%s1737 + $0xc] sm:$0xf]
        %v1741 = vld [vmem:[%s1737 + $0x10] sm:$0xf]
        %v1742 = vld [vmem:[%s1737 + $0x18] sm:$0xf]
        %v1743 = vld [vmem:[%s1737 + $0x1c] sm:$0xf]
        %v1744 = vld [vmem:[%s1737 + $0x24] sm:$0xf]
        %v1745 = vld [vmem:[%s1737 + $0x28] sm:$0xf]
        %v1746 = vld [vmem:[%s1737 + $0x30] sm:$0xf]
        %v1747 = vld [vmem:[%s1737 + $0x34] sm:$0xf]
        %v1748 = vld [vmem:[%s1737 + $0x3c] sm:$0xf]
        %v1749 = vld [vmem:[%s1737 + $0x40] sm:$0xf]
        %v1750 = vld [vmem:[%s1737 + $0x48] sm:$0xf]
        %v1751 = vld [vmem:[%s1737 + $0x4c] sm:$0xf]
        %v1752 = vld [vmem:[%s1737 + $0x54] sm:$0xf]
        %v1753 = vld [vmem:[%s1737 + $0x58] sm:$0xf]
        %v1754 = vld [vmem:[%s1737 + $0x60] sm:$0xf]
        %v1755 = vld [vmem:[%s1737 + $0x64] sm:$0xf]
        %v1756 = vld [vmem:[%s1737 + $0x6c] sm:$0xf]
        %v1757 = vld [vmem:[%s1737 + $0x70] sm:$0xf]
        %v1758 = vld [vmem:[%s1737 + $0x78] sm:$0xf]
        %v1759 = vld [vmem:[%s1737 + $0x7c] sm:$0xf]
        %v1760 = vld [vmem:[%s1737 + $0x84] sm:$0xf]
        %v1761 = vld [vmem:[%s1737 + $0x88] sm:$0xf]
        %v1762 = vld [vmem:[%s1737 + $0x90] sm:$0xf]
        %v1763 = vld [vmem:[%s1737 + $0x94] sm:$0xf]
        %v1764 = vld [vmem:[%s1737 + $0x9c] sm:$0xf]
        %v1765 = vld [vmem:[%s1737 + $0xa0] sm:$0xf]
        %v1766 = vld [vmem:[%s1737 + $0xa8] sm:$0xf]
        %v1767 = vld [vmem:[%s1737 + $0xac] sm:$0xf]
        %v1768 = vld [vmem:[%s1737 + $0xb4] sm:$0xf]
        %v1769 = vld [vmem:[%s1737 + $0xb8] sm:$0xf]
        %s1770 = scalar_lea.vmem %s219, 6
        %v1771 = vld [vmem:[%s1770] sm:$0x3]
        %v1804 = vunpack.c.l.b16 %v1738
        %v1805 = vunpack.c.l.b16 %v1739
        %v1806 = vunpack.c.l.b16 %v1740
        %v1807 = vunpack.c.l.b16 %v1741
        %v1808 = vunpack.c.l.b16 %v1742
        %v1809 = vunpack.c.l.b16 %v1743
        %v1810 = vunpack.c.l.b16 %v1744
        %v1811 = vunpack.c.l.b16 %v1745
        %v1812 = vunpack.c.l.b16 %v1746
        %v1813 = vunpack.c.l.b16 %v1747
        %v1814 = vunpack.c.l.b16 %v1748
        %v1815 = vunpack.c.l.b16 %v1749
        %v1816 = vunpack.c.l.b16 %v1750
        %v1817 = vunpack.c.l.b16 %v1751
        %v1818 = vunpack.c.l.b16 %v1752
        %v1819 = vunpack.c.l.b16 %v1753
        %v1820 = vunpack.c.l.b16 %v1754
        %v1821 = vunpack.c.l.b16 %v1755
        %v1822 = vunpack.c.l.b16 %v1756
        %v1823 = vunpack.c.l.b16 %v1757
        %v1824 = vunpack.c.l.b16 %v1758
        %v1825 = vunpack.c.l.b16 %v1759
        %v1826 = vunpack.c.l.b16 %v1760
        %v1827 = vunpack.c.l.b16 %v1761
        %v1828 = vunpack.c.l.b16 %v1762
        %v1829 = vunpack.c.l.b16 %v1763
        %v1830 = vunpack.c.l.b16 %v1764
        %v1831 = vunpack.c.l.b16 %v1765
        %v1832 = vunpack.c.l.b16 %v1766
        %v1833 = vunpack.c.l.b16 %v1767
        %v1834 = vunpack.c.l.b16 %v1768
        %v1835 = vunpack.c.l.b16 %v1769
        %v1836 = vpack.c.b16 %v1805, %v1804
        %v1837 = vpack.c.b16 %v1807, %v1806
        %v1838 = vpack.c.b16 %v1809, %v1808
        %v1839 = vpack.c.b16 %v1811, %v1810
        %v1840 = vpack.c.b16 %v1813, %v1812
        %v1841 = vpack.c.b16 %v1815, %v1814
        %v1842 = vpack.c.b16 %v1817, %v1816
        %v1843 = vpack.c.b16 %v1819, %v1818
        %v1844 = vpack.c.b16 %v1821, %v1820
        %v1845 = vpack.c.b16 %v1823, %v1822
        %v1846 = vpack.c.b16 %v1825, %v1824
        %v1847 = vpack.c.b16 %v1827, %v1826
        %v1848 = vpack.c.b16 %v1829, %v1828
        %v1849 = vpack.c.b16 %v1831, %v1830
        %v1850 = vpack.c.b16 %v1833, %v1832
        %v1851 = vpack.c.b16 %v1835, %v1834
        %v1853 = vsel %vm342, %v1836, 0
        %v1856 = vsel %vm342, %v1837, 0
        %v1859 = vsel %vm342, %v1838, 0
        %v1862 = vsel %vm342, %v1839, 0
        %v1865 = vsel %vm342, %v1840, 0
        %v1868 = vsel %vm342, %v1841, 0
        %v1871 = vsel %vm342, %v1842, 0
        %v1874 = vsel %vm342, %v1843, 0
        %v1877 = vsel %vm342, %v1844, 0
        %v1880 = vsel %vm342, %v1845, 0
        %v1883 = vsel %vm342, %v1846, 0
        %v1886 = vsel %vm342, %v1847, 0
        %v1889 = vsel %vm342, %v1848, 0
        %v1892 = vsel %vm342, %v1849, 0
        %v1895 = vsel %vm342, %v1850, 0
        %v1898 = vsel %vm342, %v1851, 0
        %v1901 = vsel %vm391, %v1771, 0
        %1903 = vmatpush.bf16.msra.mxu0 0
        %1904 = vmatpush.bf16.msra.mxu0 0
        %1905 = vmatpush.bf16.msra.mxu0 0
        %1906 = vmatpush.bf16.msra.mxu0 0
        %1907 = vmatpush.bf16.msra.mxu0 0
        %1908 = vmatpush.bf16.msra.mxu0 0
        %1909 = vmatpush.bf16.msra.mxu0 0
        %1910 = vmatpush.bf16.msra.mxu0 %v1901
        %1911 = vmatmul.bf16.gmra.mxu0 %v1853
        %v1912 = vpop.f32.mrf.mxu0
        %v1913 = vadd.f32 0.0, %v1912
        %v1914 = vpop.f32.mrf.mxu0
        %v1915 = vadd.f32 0.0, %v1914
        %1916 = vmatmul.bf16.gmra.mxu0 %v1856
        %v1917 = vpop.f32.mrf.mxu0
        %v1918 = vadd.f32 0.0, %v1917
        %v1919 = vpop.f32.mrf.mxu0
        %v1920 = vadd.f32 0.0, %v1919
        %1921 = vmatmul.bf16.gmra.mxu0 %v1859
        %v1922 = vpop.f32.mrf.mxu0
        %v1923 = vadd.f32 0.0, %v1922
        %v1924 = vpop.f32.mrf.mxu0
        %v1925 = vadd.f32 0.0, %v1924
        %1926 = vmatmul.bf16.gmra.mxu0 %v1862
        %v1927 = vpop.f32.mrf.mxu0
        %v1928 = vadd.f32 0.0, %v1927
        %v1929 = vpop.f32.mrf.mxu0
        %v1930 = vadd.f32 0.0, %v1929
        %1931 = vmatmul.bf16.gmra.mxu0 %v1865
        %v1932 = vpop.f32.mrf.mxu0
        %v1933 = vadd.f32 0.0, %v1932
        %v1934 = vpop.f32.mrf.mxu0
        %v1935 = vadd.f32 0.0, %v1934
        %1936 = vmatmul.bf16.gmra.mxu0 %v1868
        %v1937 = vpop.f32.mrf.mxu0
        %v1938 = vadd.f32 0.0, %v1937
        %v1939 = vpop.f32.mrf.mxu0
        %v1940 = vadd.f32 0.0, %v1939
        %1941 = vmatmul.bf16.gmra.mxu0 %v1871
        %v1942 = vpop.f32.mrf.mxu0
        %v1943 = vadd.f32 0.0, %v1942
        %v1944 = vpop.f32.mrf.mxu0
        %v1945 = vadd.f32 0.0, %v1944
        %1946 = vmatmul.bf16.gmra.mxu0 %v1874
        %v1947 = vpop.f32.mrf.mxu0
        %v1948 = vadd.f32 0.0, %v1947
        %v1949 = vpop.f32.mrf.mxu0
        %v1950 = vadd.f32 0.0, %v1949
        %1951 = vmatmul.bf16.gmra.mxu0 %v1877
        %v1952 = vpop.f32.mrf.mxu0
        %v1953 = vadd.f32 0.0, %v1952
        %v1954 = vpop.f32.mrf.mxu0
        %v1955 = vadd.f32 0.0, %v1954
        %1956 = vmatmul.bf16.gmra.mxu0 %v1880
        %v1957 = vpop.f32.mrf.mxu0
        %v1958 = vadd.f32 0.0, %v1957
        %v1959 = vpop.f32.mrf.mxu0
        %v1960 = vadd.f32 0.0, %v1959
        %1961 = vmatmul.bf16.gmra.mxu0 %v1883
        %v1962 = vpop.f32.mrf.mxu0
        %v1963 = vadd.f32 0.0, %v1962
        %v1964 = vpop.f32.mrf.mxu0
        %v1965 = vadd.f32 0.0, %v1964
        %1966 = vmatmul.bf16.gmra.mxu0 %v1886
        %v1967 = vpop.f32.mrf.mxu0
        %v1968 = vadd.f32 0.0, %v1967
        %v1969 = vpop.f32.mrf.mxu0
        %v1970 = vadd.f32 0.0, %v1969
        %1971 = vmatmul.bf16.gmra.mxu0 %v1889
        %v1972 = vpop.f32.mrf.mxu0
        %v1973 = vadd.f32 0.0, %v1972
        %v1974 = vpop.f32.mrf.mxu0
        %v1975 = vadd.f32 0.0, %v1974
        %1976 = vmatmul.bf16.gmra.mxu0 %v1892
        %v1977 = vpop.f32.mrf.mxu0
        %v1978 = vadd.f32 0.0, %v1977
        %v1979 = vpop.f32.mrf.mxu0
        %v1980 = vadd.f32 0.0, %v1979
        %1981 = vmatmul.bf16.gmra.mxu0 %v1895
        %v1982 = vpop.f32.mrf.mxu0
        %v1983 = vadd.f32 0.0, %v1982
        %v1984 = vpop.f32.mrf.mxu0
        %v1985 = vadd.f32 0.0, %v1984
        %1986 = vmatmul.bf16.gmra.mxu0 %v1898
        %v1987 = vpop.f32.mrf.mxu0
        %v1988 = vadd.f32 0.0, %v1987
        %v1989 = vpop.f32.mrf.mxu0
        %v1990 = vadd.f32 0.0, %v1989
        %1991 = vdwg.mxu0
        %v1992 = vld [vmem:[#allocation2] sm:$0xff]
        %v1993 = vld [vmem:[#allocation2 + $0x8] sm:$0xff]
        %v1994 = vld [vmem:[#allocation2 + $0x10] sm:$0xff]
        %v1995 = vld [vmem:[#allocation2 + $0x18] sm:$0xff]
        %v1996 = vld [vmem:[#allocation2 + $0x20] sm:$0xff]
        %v1997 = vld [vmem:[#allocation2 + $0x28] sm:$0xff]
        %v1998 = vld [vmem:[#allocation2 + $0x30] sm:$0xff]
        %v1999 = vld [vmem:[#allocation2 + $0x38] sm:$0xff]
        %v2000 = vld [vmem:[#allocation2 + $0x40] sm:$0xff]
        %v2001 = vld [vmem:[#allocation2 + $0x48] sm:$0xff]
        %v2002 = vld [vmem:[#allocation2 + $0x50] sm:$0xff]
        %v2003 = vld [vmem:[#allocation2 + $0x58] sm:$0xff]
        %v2004 = vld [vmem:[#allocation2 + $0x60] sm:$0xff]
        %v2005 = vld [vmem:[#allocation2 + $0x68] sm:$0xff]
        %v2006 = vld [vmem:[#allocation2 + $0x70] sm:$0xff]
        %v2007 = vld [vmem:[#allocation2 + $0x78] sm:$0xff]
        %v2008 = vld [vmem:[#allocation2 + $0x80] sm:$0xff]
        %v2009 = vld [vmem:[#allocation2 + $0x88] sm:$0xff]
        %v2010 = vld [vmem:[#allocation2 + $0x90] sm:$0xff]
        %v2011 = vld [vmem:[#allocation2 + $0x98] sm:$0xff]
        %v2012 = vld [vmem:[#allocation2 + $0xa0] sm:$0xff]
        %v2013 = vld [vmem:[#allocation2 + $0xa8] sm:$0xff]
        %v2014 = vld [vmem:[#allocation2 + $0xb0] sm:$0xff]
        %v2015 = vld [vmem:[#allocation2 + $0xb8] sm:$0xff]
        %v2016 = vld [vmem:[#allocation2 + $0xc0] sm:$0xff]
        %v2017 = vld [vmem:[#allocation2 + $0xc8] sm:$0xff]
        %v2018 = vld [vmem:[#allocation2 + $0xd0] sm:$0xff]
        %v2019 = vld [vmem:[#allocation2 + $0xd8] sm:$0xff]
        %v2020 = vld [vmem:[#allocation2 + $0xe0] sm:$0xff]
        %v2021 = vld [vmem:[#allocation2 + $0xe8] sm:$0xff]
        %v2022 = vld [vmem:[#allocation2 + $0xf0] sm:$0xff]
        %v2023 = vld [vmem:[#allocation2 + $0xf8] sm:$0xff]
        %v2024 = vadd.f32 %v1992, %v1913
        %v2025 = vadd.f32 %v1993, %v1915
        %v2026 = vadd.f32 %v1994, %v1918
        %v2027 = vadd.f32 %v1995, %v1920
        %v2028 = vadd.f32 %v1996, %v1923
        %v2029 = vadd.f32 %v1997, %v1925
        %v2030 = vadd.f32 %v1998, %v1928
        %v2031 = vadd.f32 %v1999, %v1930
        %v2032 = vadd.f32 %v2000, %v1933
        %v2033 = vadd.f32 %v2001, %v1935
        %v2034 = vadd.f32 %v2002, %v1938
        %v2035 = vadd.f32 %v2003, %v1940
        %v2036 = vadd.f32 %v2004, %v1943
        %v2037 = vadd.f32 %v2005, %v1945
        %v2038 = vadd.f32 %v2006, %v1948
        %v2039 = vadd.f32 %v2007, %v1950
        %v2040 = vadd.f32 %v2008, %v1953
        %v2041 = vadd.f32 %v2009, %v1955
        %v2042 = vadd.f32 %v2010, %v1958
        %v2043 = vadd.f32 %v2011, %v1960
        %v2044 = vadd.f32 %v2012, %v1963
        %v2045 = vadd.f32 %v2013, %v1965
        %v2046 = vadd.f32 %v2014, %v1968
        %v2047 = vadd.f32 %v2015, %v1970
        %v2048 = vadd.f32 %v2016, %v1973
        %v2049 = vadd.f32 %v2017, %v1975
        %v2050 = vadd.f32 %v2018, %v1978
        %v2051 = vadd.f32 %v2019, %v1980
        %v2052 = vadd.f32 %v2020, %v1983
        %v2053 = vadd.f32 %v2021, %v1985
        %v2054 = vadd.f32 %v2022, %v1988
        %v2055 = vadd.f32 %v2023, %v1990
        %2056 = vst [vmem:[#allocation2] sm:$0xff] %v2024
        %2057 = vst [vmem:[#allocation2 + $0x8] sm:$0xff] %v2025
        %2058 = vst [vmem:[#allocation2 + $0x10] sm:$0xff] %v2026
        %2059 = vst [vmem:[#allocation2 + $0x18] sm:$0xff] %v2027
        %2060 = vst [vmem:[#allocation2 + $0x20] sm:$0xff] %v2028
        %2061 = vst [vmem:[#allocation2 + $0x28] sm:$0xff] %v2029
        %2062 = vst [vmem:[#allocation2 + $0x30] sm:$0xff] %v2030
        %2063 = vst [vmem:[#allocation2 + $0x38] sm:$0xff] %v2031
        %2064 = vst [vmem:[#allocation2 + $0x40] sm:$0xff] %v2032
        %2065 = vst [vmem:[#allocation2 + $0x48] sm:$0xff] %v2033
        %2066 = vst [vmem:[#allocation2 + $0x50] sm:$0xff] %v2034
        %2067 = vst [vmem:[#allocation2 + $0x58] sm:$0xff] %v2035
        %2068 = vst [vmem:[#allocation2 + $0x60] sm:$0xff] %v2036
        %2069 = vst [vmem:[#allocation2 + $0x68] sm:$0xff] %v2037
        %2070 = vst [vmem:[#allocation2 + $0x70] sm:$0xff] %v2038
        %2071 = vst [vmem:[#allocation2 + $0x78] sm:$0xff] %v2039
        %2072 = vst [vmem:[#allocation2 + $0x80] sm:$0xff] %v2040
        %2073 = vst [vmem:[#allocation2 + $0x88] sm:$0xff] %v2041
        %2074 = vst [vmem:[#allocation2 + $0x90] sm:$0xff] %v2042
        %2075 = vst [vmem:[#allocation2 + $0x98] sm:$0xff] %v2043
        %2076 = vst [vmem:[#allocation2 + $0xa0] sm:$0xff] %v2044
        %2077 = vst [vmem:[#allocation2 + $0xa8] sm:$0xff] %v2045
        %2078 = vst [vmem:[#allocation2 + $0xb0] sm:$0xff] %v2046
        %2079 = vst [vmem:[#allocation2 + $0xb8] sm:$0xff] %v2047
        %2080 = vst [vmem:[#allocation2 + $0xc0] sm:$0xff] %v2048
        %2081 = vst [vmem:[#allocation2 + $0xc8] sm:$0xff] %v2049
        %2082 = vst [vmem:[#allocation2 + $0xd0] sm:$0xff] %v2050
        %2083 = vst [vmem:[#allocation2 + $0xd8] sm:$0xff] %v2051
        %2084 = vst [vmem:[#allocation2 + $0xe0] sm:$0xff] %v2052
        %2085 = vst [vmem:[#allocation2 + $0xe8] sm:$0xff] %v2053
        %2086 = vst [vmem:[#allocation2 + $0xf0] sm:$0xff] %v2054
        %2087 = vst [vmem:[#allocation2 + $0xf8] sm:$0xff] %v2055
        %v2088 = vld [vmem:[%s1737] sm:$0xf]
        %v2089 = vld [vmem:[%s1737 + $0x4] sm:$0xf]
        %v2090 = vld [vmem:[%s1737 + $0x8] sm:$0x1]
        %v2091 = vld [vmem:[%s1737 + $0xc] sm:$0xf]
        %v2092 = vld [vmem:[%s1737 + $0x10] sm:$0xf]
        %v2093 = vld [vmem:[%s1737 + $0x14] sm:$0x1]
        %v2094 = vld [vmem:[%s1737 + $0x18] sm:$0xf]
        %v2095 = vld [vmem:[%s1737 + $0x1c] sm:$0xf]
        %v2096 = vld [vmem:[%s1737 + $0x20] sm:$0x1]
        %v2097 = vld [vmem:[%s1737 + $0x24] sm:$0xf]
        %v2098 = vld [vmem:[%s1737 + $0x28] sm:$0xf]
        %v2099 = vld [vmem:[%s1737 + $0x2c] sm:$0x1]
        %v2100 = vld [vmem:[%s1737 + $0x30] sm:$0xf]
        %v2101 = vld [vmem:[%s1737 + $0x34] sm:$0xf]
        %v2102 = vld [vmem:[%s1737 + $0x38] sm:$0x1]
        %v2103 = vld [vmem:[%s1737 + $0x3c] sm:$0xf]
        %v2104 = vld [vmem:[%s1737 + $0x40] sm:$0xf]
        %v2105 = vld [vmem:[%s1737 + $0x44] sm:$0x1]
        %v2106 = vld [vmem:[%s1737 + $0x48] sm:$0xf]
        %v2107 = vld [vmem:[%s1737 + $0x4c] sm:$0xf]
        %v2108 = vld [vmem:[%s1737 + $0x50] sm:$0x1]
        %v2109 = vld [vmem:[%s1737 + $0x54] sm:$0xf]
        %v2110 = vld [vmem:[%s1737 + $0x58] sm:$0xf]
        %v2111 = vld [vmem:[%s1737 + $0x5c] sm:$0x1]
        %v2112 = vld [vmem:[%s1737 + $0x60] sm:$0xf]
        %v2113 = vld [vmem:[%s1737 + $0x64] sm:$0xf]
        %v2114 = vld [vmem:[%s1737 + $0x68] sm:$0x1]
        %v2115 = vld [vmem:[%s1737 + $0x6c] sm:$0xf]
        %v2116 = vld [vmem:[%s1737 + $0x70] sm:$0xf]
        %v2117 = vld [vmem:[%s1737 + $0x74] sm:$0x1]
        %v2118 = vld [vmem:[%s1737 + $0x78] sm:$0xf]
        %v2119 = vld [vmem:[%s1737 + $0x7c] sm:$0xf]
        %v2120 = vld [vmem:[%s1737 + $0x80] sm:$0x1]
        %v2121 = vld [vmem:[%s1737 + $0x84] sm:$0xf]
        %v2122 = vld [vmem:[%s1737 + $0x88] sm:$0xf]
        %v2123 = vld [vmem:[%s1737 + $0x8c] sm:$0x1]
        %v2124 = vld [vmem:[%s1737 + $0x90] sm:$0xf]
        %v2125 = vld [vmem:[%s1737 + $0x94] sm:$0xf]
        %v2126 = vld [vmem:[%s1737 + $0x98] sm:$0x1]
        %v2127 = vld [vmem:[%s1737 + $0x9c] sm:$0xf]
        %v2128 = vld [vmem:[%s1737 + $0xa0] sm:$0xf]
        %v2129 = vld [vmem:[%s1737 + $0xa4] sm:$0x1]
        %v2130 = vld [vmem:[%s1737 + $0xa8] sm:$0xf]
        %v2131 = vld [vmem:[%s1737 + $0xac] sm:$0xf]
        %v2132 = vld [vmem:[%s1737 + $0xb0] sm:$0x1]
        %v2133 = vld [vmem:[%s1737 + $0xb4] sm:$0xf]
        %v2134 = vld [vmem:[%s1737 + $0xb8] sm:$0xf]
        %v2135 = vld [vmem:[%s1737 + $0xbc] sm:$0x1]
        %v2137 = vshrl.u32 %v2088, 16
        %v2139 = vrot.slane %v2137, 4
        %v2140 = vshll.u32 %v2088, 16
        %v2142 = vrot.slane %v2140, 5
        %v2143 = vor.u32 %v2139, %v2142
        %v2144 = vrot.slane %v2143, 4
        %v2146 = vshll.u32 %v2089, 16
        %v2148 = vrot.slane %v2146, 5
        %v2149 = vsel %vm566, %v2144, %v2148
        %v2150 = vshrl.u32 %v2089, 16
        %v2152 = vrot.slane %v2150, 4
        %v2153 = vor.u32 %v2152, %v2148
        %v2154 = vrot.slane %v2153, 4
        %v2156 = vshll.u32 %v2090, 16
        %v2158 = vrot.slane %v2156, 5
        %v2159 = vsel %vm566, %v2154, %v2158
        %v2161 = vshrl.u32 %v2091, 16
        %v2163 = vrot.slane %v2161, 4
        %v2164 = vshll.u32 %v2091, 16
        %v2166 = vrot.slane %v2164, 5
        %v2167 = vor.u32 %v2163, %v2166
        %v2168 = vrot.slane %v2167, 4
        %v2170 = vshll.u32 %v2092, 16
        %v2172 = vrot.slane %v2170, 5
        %v2173 = vsel %vm566, %v2168, %v2172
        %v2174 = vshrl.u32 %v2092, 16
        %v2176 = vrot.slane %v2174, 4
        %v2177 = vor.u32 %v2176, %v2172
        %v2178 = vrot.slane %v2177, 4
        %v2180 = vshll.u32 %v2093, 16
        %v2182 = vrot.slane %v2180, 5
        %v2183 = vsel %vm566, %v2178, %v2182
        %v2185 = vshrl.u32 %v2094, 16
        %v2187 = vrot.slane %v2185, 4
        %v2188 = vshll.u32 %v2094, 16
        %v2190 = vrot.slane %v2188, 5
        %v2191 = vor.u32 %v2187, %v2190
        %v2192 = vrot.slane %v2191, 4
        %v2194 = vshll.u32 %v2095, 16
        %v2196 = vrot.slane %v2194, 5
        %v2197 = vsel %vm566, %v2192, %v2196
        %v2198 = vshrl.u32 %v2095, 16
        %v2200 = vrot.slane %v2198, 4
        %v2201 = vor.u32 %v2200, %v2196
        %v2202 = vrot.slane %v2201, 4
        %v2204 = vshll.u32 %v2096, 16
        %v2206 = vrot.slane %v2204, 5
        %v2207 = vsel %vm566, %v2202, %v2206
        %v2209 = vshrl.u32 %v2097, 16
        %v2211 = vrot.slane %v2209, 4
        %v2212 = vshll.u32 %v2097, 16
        %v2214 = vrot.slane %v2212, 5
        %v2215 = vor.u32 %v2211, %v2214
        %v2216 = vrot.slane %v2215, 4
        %v2218 = vshll.u32 %v2098, 16
        %v2220 = vrot.slane %v2218, 5
        %v2221 = vsel %vm566, %v2216, %v2220
        %v2222 = vshrl.u32 %v2098, 16
        %v2224 = vrot.slane %v2222, 4
        %v2225 = vor.u32 %v2224, %v2220
        %v2226 = vrot.slane %v2225, 4
        %v2228 = vshll.u32 %v2099, 16
        %v2230 = vrot.slane %v2228, 5
        %v2231 = vsel %vm566, %v2226, %v2230
        %v2233 = vshrl.u32 %v2100, 16
        %v2235 = vrot.slane %v2233, 4
        %v2236 = vshll.u32 %v2100, 16
        %v2238 = vrot.slane %v2236, 5
        %v2239 = vor.u32 %v2235, %v2238
        %v2240 = vrot.slane %v2239, 4
        %v2242 = vshll.u32 %v2101, 16
        %v2244 = vrot.slane %v2242, 5
        %v2245 = vsel %vm566, %v2240, %v2244
        %v2246 = vshrl.u32 %v2101, 16
        %v2248 = vrot.slane %v2246, 4
        %v2249 = vor.u32 %v2248, %v2244
        %v2250 = vrot.slane %v2249, 4
        %v2252 = vshll.u32 %v2102, 16
        %v2254 = vrot.slane %v2252, 5
        %v2255 = vsel %vm566, %v2250, %v2254
        %v2257 = vshrl.u32 %v2103, 16
        %v2259 = vrot.slane %v2257, 4
        %v2260 = vshll.u32 %v2103, 16
        %v2262 = vrot.slane %v2260, 5
        %v2263 = vor.u32 %v2259, %v2262
        %v2264 = vrot.slane %v2263, 4
        %v2266 = vshll.u32 %v2104, 16
        %v2268 = vrot.slane %v2266, 5
        %v2269 = vsel %vm566, %v2264, %v2268
        %v2270 = vshrl.u32 %v2104, 16
        %v2272 = vrot.slane %v2270, 4
        %v2273 = vor.u32 %v2272, %v2268
        %v2274 = vrot.slane %v2273, 4
        %v2276 = vshll.u32 %v2105, 16
        %v2278 = vrot.slane %v2276, 5
        %v2279 = vsel %vm566, %v2274, %v2278
        %v2281 = vshrl.u32 %v2106, 16
        %v2283 = vrot.slane %v2281, 4
        %v2284 = vshll.u32 %v2106, 16
        %v2286 = vrot.slane %v2284, 5
        %v2287 = vor.u32 %v2283, %v2286
        %v2288 = vrot.slane %v2287, 4
        %v2290 = vshll.u32 %v2107, 16
        %v2292 = vrot.slane %v2290, 5
        %v2293 = vsel %vm566, %v2288, %v2292
        %v2294 = vshrl.u32 %v2107, 16
        %v2296 = vrot.slane %v2294, 4
        %v2297 = vor.u32 %v2296, %v2292
        %v2298 = vrot.slane %v2297, 4
        %v2300 = vshll.u32 %v2108, 16
        %v2302 = vrot.slane %v2300, 5
        %v2303 = vsel %vm566, %v2298, %v2302
        %v2305 = vshrl.u32 %v2109, 16
        %v2307 = vrot.slane %v2305, 4
        %v2308 = vshll.u32 %v2109, 16
        %v2310 = vrot.slane %v2308, 5
        %v2311 = vor.u32 %v2307, %v2310
        %v2312 = vrot.slane %v2311, 4
        %v2314 = vshll.u32 %v2110, 16
        %v2316 = vrot.slane %v2314, 5
        %v2317 = vsel %vm566, %v2312, %v2316
        %v2318 = vshrl.u32 %v2110, 16
        %v2320 = vrot.slane %v2318, 4
        %v2321 = vor.u32 %v2320, %v2316
        %v2322 = vrot.slane %v2321, 4
        %v2324 = vshll.u32 %v2111, 16
        %v2326 = vrot.slane %v2324, 5
        %v2327 = vsel %vm566, %v2322, %v2326
        %v2329 = vshrl.u32 %v2112, 16
        %v2331 = vrot.slane %v2329, 4
        %v2332 = vshll.u32 %v2112, 16
        %v2334 = vrot.slane %v2332, 5
        %v2335 = vor.u32 %v2331, %v2334
        %v2336 = vrot.slane %v2335, 4
        %v2338 = vshll.u32 %v2113, 16
        %v2340 = vrot.slane %v2338, 5
        %v2341 = vsel %vm566, %v2336, %v2340
        %v2342 = vshrl.u32 %v2113, 16
        %v2344 = vrot.slane %v2342, 4
        %v2345 = vor.u32 %v2344, %v2340
        %v2346 = vrot.slane %v2345, 4
        %v2348 = vshll.u32 %v2114, 16
        %v2350 = vrot.slane %v2348, 5
        %v2351 = vsel %vm566, %v2346, %v2350
        %v2353 = vshrl.u32 %v2115, 16
        %v2355 = vrot.slane %v2353, 4
        %v2356 = vshll.u32 %v2115, 16
        %v2358 = vrot.slane %v2356, 5
        %v2359 = vor.u32 %v2355, %v2358
        %v2360 = vrot.slane %v2359, 4
        %v2362 = vshll.u32 %v2116, 16
        %v2364 = vrot.slane %v2362, 5
        %v2365 = vsel %vm566, %v2360, %v2364
        %v2366 = vshrl.u32 %v2116, 16
        %v2368 = vrot.slane %v2366, 4
        %v2369 = vor.u32 %v2368, %v2364
        %v2370 = vrot.slane %v2369, 4
        %v2372 = vshll.u32 %v2117, 16
        %v2374 = vrot.slane %v2372, 5
        %v2375 = vsel %vm566, %v2370, %v2374
        %v2377 = vshrl.u32 %v2118, 16
        %v2379 = vrot.slane %v2377, 4
        %v2380 = vshll.u32 %v2118, 16
        %v2382 = vrot.slane %v2380, 5
        %v2383 = vor.u32 %v2379, %v2382
        %v2384 = vrot.slane %v2383, 4
        %v2386 = vshll.u32 %v2119, 16
        %v2388 = vrot.slane %v2386, 5
        %v2389 = vsel %vm566, %v2384, %v2388
        %v2390 = vshrl.u32 %v2119, 16
        %v2392 = vrot.slane %v2390, 4
        %v2393 = vor.u32 %v2392, %v2388
        %v2394 = vrot.slane %v2393, 4
        %v2396 = vshll.u32 %v2120, 16
        %v2398 = vrot.slane %v2396, 5
        %v2399 = vsel %vm566, %v2394, %v2398
        %v2401 = vshrl.u32 %v2121, 16
        %v2403 = vrot.slane %v2401, 4
        %v2404 = vshll.u32 %v2121, 16
        %v2406 = vrot.slane %v2404, 5
        %v2407 = vor.u32 %v2403, %v2406
        %v2408 = vrot.slane %v2407, 4
        %v2410 = vshll.u32 %v2122, 16
        %v2412 = vrot.slane %v2410, 5
        %v2413 = vsel %vm566, %v2408, %v2412
        %v2414 = vshrl.u32 %v2122, 16
        %v2416 = vrot.slane %v2414, 4
        %v2417 = vor.u32 %v2416, %v2412
        %v2418 = vrot.slane %v2417, 4
        %v2420 = vshll.u32 %v2123, 16
        %v2422 = vrot.slane %v2420, 5
        %v2423 = vsel %vm566, %v2418, %v2422
        %v2425 = vshrl.u32 %v2124, 16
        %v2427 = vrot.slane %v2425, 4
        %v2428 = vshll.u32 %v2124, 16
        %v2430 = vrot.slane %v2428, 5
        %v2431 = vor.u32 %v2427, %v2430
        %v2432 = vrot.slane %v2431, 4
        %v2434 = vshll.u32 %v2125, 16
        %v2436 = vrot.slane %v2434, 5
        %v2437 = vsel %vm566, %v2432, %v2436
        %v2438 = vshrl.u32 %v2125, 16
        %v2440 = vrot.slane %v2438, 4
        %v2441 = vor.u32 %v2440, %v2436
        %v2442 = vrot.slane %v2441, 4
        %v2444 = vshll.u32 %v2126, 16
        %v2446 = vrot.slane %v2444, 5
        %v2447 = vsel %vm566, %v2442, %v2446
        %v2449 = vshrl.u32 %v2127, 16
        %v2451 = vrot.slane %v2449, 4
        %v2452 = vshll.u32 %v2127, 16
        %v2454 = vrot.slane %v2452, 5
        %v2455 = vor.u32 %v2451, %v2454
        %v2456 = vrot.slane %v2455, 4
        %v2458 = vshll.u32 %v2128, 16
        %v2460 = vrot.slane %v2458, 5
        %v2461 = vsel %vm566, %v2456, %v2460
        %v2462 = vshrl.u32 %v2128, 16
        %v2464 = vrot.slane %v2462, 4
        %v2465 = vor.u32 %v2464, %v2460
        %v2466 = vrot.slane %v2465, 4
        %v2468 = vshll.u32 %v2129, 16
        %v2470 = vrot.slane %v2468, 5
        %v2471 = vsel %vm566, %v2466, %v2470
        %v2473 = vshrl.u32 %v2130, 16
        %v2475 = vrot.slane %v2473, 4
        %v2476 = vshll.u32 %v2130, 16
        %v2478 = vrot.slane %v2476, 5
        %v2479 = vor.u32 %v2475, %v2478
        %v2480 = vrot.slane %v2479, 4
        %v2482 = vshll.u32 %v2131, 16
        %v2484 = vrot.slane %v2482, 5
        %v2485 = vsel %vm566, %v2480, %v2484
        %v2486 = vshrl.u32 %v2131, 16
        %v2488 = vrot.slane %v2486, 4
        %v2489 = vor.u32 %v2488, %v2484
        %v2490 = vrot.slane %v2489, 4
        %v2492 = vshll.u32 %v2132, 16
        %v2494 = vrot.slane %v2492, 5
        %v2495 = vsel %vm566, %v2490, %v2494
        %v2497 = vshrl.u32 %v2133, 16
        %v2499 = vrot.slane %v2497, 4
        %v2500 = vshll.u32 %v2133, 16
        %v2502 = vrot.slane %v2500, 5
        %v2503 = vor.u32 %v2499, %v2502
        %v2504 = vrot.slane %v2503, 4
        %v2506 = vshll.u32 %v2134, 16
        %v2508 = vrot.slane %v2506, 5
        %v2509 = vsel %vm566, %v2504, %v2508
        %v2510 = vshrl.u32 %v2134, 16
        %v2512 = vrot.slane %v2510, 4
        %v2513 = vor.u32 %v2512, %v2508
        %v2514 = vrot.slane %v2513, 4
        %v2516 = vshll.u32 %v2135, 16
        %v2518 = vrot.slane %v2516, 5
        %v2519 = vsel %vm566, %v2514, %v2518
        %s2520 = scalar_lea.vmem %s219, 8
        %v2521 = vld [vmem:[%s2520] sm:$0x3]
        %v2522 = vunpack.c.l.b16 %v2149
        %v2523 = vunpack.c.l.b16 %v2159
        %v2524 = vunpack.c.l.b16 %v2173
        %v2525 = vunpack.c.l.b16 %v2183
        %v2526 = vunpack.c.l.b16 %v2197
        %v2527 = vunpack.c.l.b16 %v2207
        %v2528 = vunpack.c.l.b16 %v2221
        %v2529 = vunpack.c.l.b16 %v2231
        %v2530 = vunpack.c.l.b16 %v2245
        %v2531 = vunpack.c.l.b16 %v2255
        %v2532 = vunpack.c.l.b16 %v2269
        %v2533 = vunpack.c.l.b16 %v2279
        %v2534 = vunpack.c.l.b16 %v2293
        %v2535 = vunpack.c.l.b16 %v2303
        %v2536 = vunpack.c.l.b16 %v2317
        %v2537 = vunpack.c.l.b16 %v2327
        %v2538 = vunpack.c.l.b16 %v2341
        %v2539 = vunpack.c.l.b16 %v2351
        %v2540 = vunpack.c.l.b16 %v2365
        %v2541 = vunpack.c.l.b16 %v2375
        %v2542 = vunpack.c.l.b16 %v2389
        %v2543 = vunpack.c.l.b16 %v2399
        %v2544 = vunpack.c.l.b16 %v2413
        %v2545 = vunpack.c.l.b16 %v2423
        %v2546 = vunpack.c.l.b16 %v2437
        %v2547 = vunpack.c.l.b16 %v2447
        %v2548 = vunpack.c.l.b16 %v2461
        %v2549 = vunpack.c.l.b16 %v2471
        %v2550 = vunpack.c.l.b16 %v2485
        %v2551 = vunpack.c.l.b16 %v2495
        %v2552 = vunpack.c.l.b16 %v2509
        %v2553 = vunpack.c.l.b16 %v2519
        %v2554 = vpack.c.b16 %v2523, %v2522
        %v2555 = vpack.c.b16 %v2525, %v2524
        %v2556 = vpack.c.b16 %v2527, %v2526
        %v2557 = vpack.c.b16 %v2529, %v2528
        %v2558 = vpack.c.b16 %v2531, %v2530
        %v2559 = vpack.c.b16 %v2533, %v2532
        %v2560 = vpack.c.b16 %v2535, %v2534
        %v2561 = vpack.c.b16 %v2537, %v2536
        %v2562 = vpack.c.b16 %v2539, %v2538
        %v2563 = vpack.c.b16 %v2541, %v2540
        %v2564 = vpack.c.b16 %v2543, %v2542
        %v2565 = vpack.c.b16 %v2545, %v2544
        %v2566 = vpack.c.b16 %v2547, %v2546
        %v2567 = vpack.c.b16 %v2549, %v2548
        %v2568 = vpack.c.b16 %v2551, %v2550
        %v2569 = vpack.c.b16 %v2553, %v2552
        %v2571 = vsel %vm342, %v2554, 0
        %v2574 = vsel %vm342, %v2555, 0
        %v2577 = vsel %vm342, %v2556, 0
        %v2580 = vsel %vm342, %v2557, 0
        %v2583 = vsel %vm342, %v2558, 0
        %v2586 = vsel %vm342, %v2559, 0
        %v2589 = vsel %vm342, %v2560, 0
        %v2592 = vsel %vm342, %v2561, 0
        %v2595 = vsel %vm342, %v2562, 0
        %v2598 = vsel %vm342, %v2563, 0
        %v2601 = vsel %vm342, %v2564, 0
        %v2604 = vsel %vm342, %v2565, 0
        %v2607 = vsel %vm342, %v2566, 0
        %v2610 = vsel %vm342, %v2567, 0
        %v2613 = vsel %vm342, %v2568, 0
        %v2616 = vsel %vm342, %v2569, 0
        %v2619 = vsel %vm391, %v2521, 0
        %2621 = vmatpush.bf16.msra.mxu0 0
        %2622 = vmatpush.bf16.msra.mxu0 0
        %2623 = vmatpush.bf16.msra.mxu0 0
        %2624 = vmatpush.bf16.msra.mxu0 0
        %2625 = vmatpush.bf16.msra.mxu0 0
        %2626 = vmatpush.bf16.msra.mxu0 0
        %2627 = vmatpush.bf16.msra.mxu0 0
        %2628 = vmatpush.bf16.msra.mxu0 %v2619
        %2629 = vmatmul.bf16.gmra.mxu0 %v2571
        %v2630 = vpop.f32.mrf.mxu0
        %v2631 = vadd.f32 0.0, %v2630
        %v2632 = vpop.f32.mrf.mxu0
        %v2633 = vadd.f32 0.0, %v2632
        %2634 = vmatmul.bf16.gmra.mxu0 %v2574
        %v2635 = vpop.f32.mrf.mxu0
        %v2636 = vadd.f32 0.0, %v2635
        %v2637 = vpop.f32.mrf.mxu0
        %v2638 = vadd.f32 0.0, %v2637
        %2639 = vmatmul.bf16.gmra.mxu0 %v2577
        %v2640 = vpop.f32.mrf.mxu0
        %v2641 = vadd.f32 0.0, %v2640
        %v2642 = vpop.f32.mrf.mxu0
        %v2643 = vadd.f32 0.0, %v2642
        %2644 = vmatmul.bf16.gmra.mxu0 %v2580
        %v2645 = vpop.f32.mrf.mxu0
        %v2646 = vadd.f32 0.0, %v2645
        %v2647 = vpop.f32.mrf.mxu0
        %v2648 = vadd.f32 0.0, %v2647
        %2649 = vmatmul.bf16.gmra.mxu0 %v2583
        %v2650 = vpop.f32.mrf.mxu0
        %v2651 = vadd.f32 0.0, %v2650
        %v2652 = vpop.f32.mrf.mxu0
        %v2653 = vadd.f32 0.0, %v2652
        %2654 = vmatmul.bf16.gmra.mxu0 %v2586
        %v2655 = vpop.f32.mrf.mxu0
        %v2656 = vadd.f32 0.0, %v2655
        %v2657 = vpop.f32.mrf.mxu0
        %v2658 = vadd.f32 0.0, %v2657
        %2659 = vmatmul.bf16.gmra.mxu0 %v2589
        %v2660 = vpop.f32.mrf.mxu0
        %v2661 = vadd.f32 0.0, %v2660
        %v2662 = vpop.f32.mrf.mxu0
        %v2663 = vadd.f32 0.0, %v2662
        %2664 = vmatmul.bf16.gmra.mxu0 %v2592
        %v2665 = vpop.f32.mrf.mxu0
        %v2666 = vadd.f32 0.0, %v2665
        %v2667 = vpop.f32.mrf.mxu0
        %v2668 = vadd.f32 0.0, %v2667
        %2669 = vmatmul.bf16.gmra.mxu0 %v2595
        %v2670 = vpop.f32.mrf.mxu0
        %v2671 = vadd.f32 0.0, %v2670
        %v2672 = vpop.f32.mrf.mxu0
        %v2673 = vadd.f32 0.0, %v2672
        %2674 = vmatmul.bf16.gmra.mxu0 %v2598
        %v2675 = vpop.f32.mrf.mxu0
        %v2676 = vadd.f32 0.0, %v2675
        %v2677 = vpop.f32.mrf.mxu0
        %v2678 = vadd.f32 0.0, %v2677
        %2679 = vmatmul.bf16.gmra.mxu0 %v2601
        %v2680 = vpop.f32.mrf.mxu0
        %v2681 = vadd.f32 0.0, %v2680
        %v2682 = vpop.f32.mrf.mxu0
        %v2683 = vadd.f32 0.0, %v2682
        %2684 = vmatmul.bf16.gmra.mxu0 %v2604
        %v2685 = vpop.f32.mrf.mxu0
        %v2686 = vadd.f32 0.0, %v2685
        %v2687 = vpop.f32.mrf.mxu0
        %v2688 = vadd.f32 0.0, %v2687
        %2689 = vmatmul.bf16.gmra.mxu0 %v2607
        %v2690 = vpop.f32.mrf.mxu0
        %v2691 = vadd.f32 0.0, %v2690
        %v2692 = vpop.f32.mrf.mxu0
        %v2693 = vadd.f32 0.0, %v2692
        %2694 = vmatmul.bf16.gmra.mxu0 %v2610
        %v2695 = vpop.f32.mrf.mxu0
        %v2696 = vadd.f32 0.0, %v2695
        %v2697 = vpop.f32.mrf.mxu0
        %v2698 = vadd.f32 0.0, %v2697
        %2699 = vmatmul.bf16.gmra.mxu0 %v2613
        %v2700 = vpop.f32.mrf.mxu0
        %v2701 = vadd.f32 0.0, %v2700
        %v2702 = vpop.f32.mrf.mxu0
        %v2703 = vadd.f32 0.0, %v2702
        %2704 = vmatmul.bf16.gmra.mxu0 %v2616
        %v2705 = vpop.f32.mrf.mxu0
        %v2706 = vadd.f32 0.0, %v2705
        %v2707 = vpop.f32.mrf.mxu0
        %v2708 = vadd.f32 0.0, %v2707
        %2709 = vdwg.mxu0
        %v2710 = vld [vmem:[#allocation2] sm:$0xff]
        %v2711 = vld [vmem:[#allocation2 + $0x8] sm:$0xff]
        %v2712 = vld [vmem:[#allocation2 + $0x10] sm:$0xff]
        %v2713 = vld [vmem:[#allocation2 + $0x18] sm:$0xff]
        %v2714 = vld [vmem:[#allocation2 + $0x20] sm:$0xff]
        %v2715 = vld [vmem:[#allocation2 + $0x28] sm:$0xff]
        %v2716 = vld [vmem:[#allocation2 + $0x30] sm:$0xff]
        %v2717 = vld [vmem:[#allocation2 + $0x38] sm:$0xff]
        %v2718 = vld [vmem:[#allocation2 + $0x40] sm:$0xff]
        %v2719 = vld [vmem:[#allocation2 + $0x48] sm:$0xff]
        %v2720 = vld [vmem:[#allocation2 + $0x50] sm:$0xff]
        %v2721 = vld [vmem:[#allocation2 + $0x58] sm:$0xff]
        %v2722 = vld [vmem:[#allocation2 + $0x60] sm:$0xff]
        %v2723 = vld [vmem:[#allocation2 + $0x68] sm:$0xff]
        %v2724 = vld [vmem:[#allocation2 + $0x70] sm:$0xff]
        %v2725 = vld [vmem:[#allocation2 + $0x78] sm:$0xff]
        %v2726 = vld [vmem:[#allocation2 + $0x80] sm:$0xff]
        %v2727 = vld [vmem:[#allocation2 + $0x88] sm:$0xff]
        %v2728 = vld [vmem:[#allocation2 + $0x90] sm:$0xff]
        %v2729 = vld [vmem:[#allocation2 + $0x98] sm:$0xff]
        %v2730 = vld [vmem:[#allocation2 + $0xa0] sm:$0xff]
        %v2731 = vld [vmem:[#allocation2 + $0xa8] sm:$0xff]
        %v2732 = vld [vmem:[#allocation2 + $0xb0] sm:$0xff]
        %v2733 = vld [vmem:[#allocation2 + $0xb8] sm:$0xff]
        %v2734 = vld [vmem:[#allocation2 + $0xc0] sm:$0xff]
        %v2735 = vld [vmem:[#allocation2 + $0xc8] sm:$0xff]
        %v2736 = vld [vmem:[#allocation2 + $0xd0] sm:$0xff]
        %v2737 = vld [vmem:[#allocation2 + $0xd8] sm:$0xff]
        %v2738 = vld [vmem:[#allocation2 + $0xe0] sm:$0xff]
        %v2739 = vld [vmem:[#allocation2 + $0xe8] sm:$0xff]
        %v2740 = vld [vmem:[#allocation2 + $0xf0] sm:$0xff]
        %v2741 = vld [vmem:[#allocation2 + $0xf8] sm:$0xff]
        %v2742 = vadd.f32 %v2710, %v2631
        %v2743 = vadd.f32 %v2711, %v2633
        %v2744 = vadd.f32 %v2712, %v2636
        %v2745 = vadd.f32 %v2713, %v2638
        %v2746 = vadd.f32 %v2714, %v2641
        %v2747 = vadd.f32 %v2715, %v2643
        %v2748 = vadd.f32 %v2716, %v2646
        %v2749 = vadd.f32 %v2717, %v2648
        %v2750 = vadd.f32 %v2718, %v2651
        %v2751 = vadd.f32 %v2719, %v2653
        %v2752 = vadd.f32 %v2720, %v2656
        %v2753 = vadd.f32 %v2721, %v2658
        %v2754 = vadd.f32 %v2722, %v2661
        %v2755 = vadd.f32 %v2723, %v2663
        %v2756 = vadd.f32 %v2724, %v2666
        %v2757 = vadd.f32 %v2725, %v2668
        %v2758 = vadd.f32 %v2726, %v2671
        %v2759 = vadd.f32 %v2727, %v2673
        %v2760 = vadd.f32 %v2728, %v2676
        %v2761 = vadd.f32 %v2729, %v2678
        %v2762 = vadd.f32 %v2730, %v2681
        %v2763 = vadd.f32 %v2731, %v2683
        %v2764 = vadd.f32 %v2732, %v2686
        %v2765 = vadd.f32 %v2733, %v2688
        %v2766 = vadd.f32 %v2734, %v2691
        %v2767 = vadd.f32 %v2735, %v2693
        %v2768 = vadd.f32 %v2736, %v2696
        %v2769 = vadd.f32 %v2737, %v2698
        %v2770 = vadd.f32 %v2738, %v2701
        %v2771 = vadd.f32 %v2739, %v2703
        %v2772 = vadd.f32 %v2740, %v2706
        %v2773 = vadd.f32 %v2741, %v2708
        %2774 = vst [vmem:[#allocation2] sm:$0xff] %v2742
        %2775 = vst [vmem:[#allocation2 + $0x8] sm:$0xff] %v2743
        %2776 = vst [vmem:[#allocation2 + $0x10] sm:$0xff] %v2744
        %2777 = vst [vmem:[#allocation2 + $0x18] sm:$0xff] %v2745
        %2778 = vst [vmem:[#allocation2 + $0x20] sm:$0xff] %v2746
        %2779 = vst [vmem:[#allocation2 + $0x28] sm:$0xff] %v2747
        %2780 = vst [vmem:[#allocation2 + $0x30] sm:$0xff] %v2748
        %2781 = vst [vmem:[#allocation2 + $0x38] sm:$0xff] %v2749
        %2782 = vst [vmem:[#allocation2 + $0x40] sm:$0xff] %v2750
        %2783 = vst [vmem:[#allocation2 + $0x48] sm:$0xff] %v2751
        %2784 = vst [vmem:[#allocation2 + $0x50] sm:$0xff] %v2752
        %2785 = vst [vmem:[#allocation2 + $0x58] sm:$0xff] %v2753
        %2786 = vst [vmem:[#allocation2 + $0x60] sm:$0xff] %v2754
        %2787 = vst [vmem:[#allocation2 + $0x68] sm:$0xff] %v2755
        %2788 = vst [vmem:[#allocation2 + $0x70] sm:$0xff] %v2756
        %2789 = vst [vmem:[#allocation2 + $0x78] sm:$0xff] %v2757
        %2790 = vst [vmem:[#allocation2 + $0x80] sm:$0xff] %v2758
        %2791 = vst [vmem:[#allocation2 + $0x88] sm:$0xff] %v2759
        %2792 = vst [vmem:[#allocation2 + $0x90] sm:$0xff] %v2760
        %2793 = vst [vmem:[#allocation2 + $0x98] sm:$0xff] %v2761
        %2794 = vst [vmem:[#allocation2 + $0xa0] sm:$0xff] %v2762
        %2795 = vst [vmem:[#allocation2 + $0xa8] sm:$0xff] %v2763
        %2796 = vst [vmem:[#allocation2 + $0xb0] sm:$0xff] %v2764
        %2797 = vst [vmem:[#allocation2 + $0xb8] sm:$0xff] %v2765
        %2798 = vst [vmem:[#allocation2 + $0xc0] sm:$0xff] %v2766
        %2799 = vst [vmem:[#allocation2 + $0xc8] sm:$0xff] %v2767
        %2800 = vst [vmem:[#allocation2 + $0xd0] sm:$0xff] %v2768
        %2801 = vst [vmem:[#allocation2 + $0xd8] sm:$0xff] %v2769
        %2802 = vst [vmem:[#allocation2 + $0xe0] sm:$0xff] %v2770
        %2803 = vst [vmem:[#allocation2 + $0xe8] sm:$0xff] %v2771
        %2804 = vst [vmem:[#allocation2 + $0xf0] sm:$0xff] %v2772
        %2805 = vst [vmem:[#allocation2 + $0xf8] sm:$0xff] %v2773
        %v2806 = vld [vmem:[%s1737] sm:$0xe]
        %v2807 = vld [vmem:[%s1737 + $0x4] sm:$0xf]
        %v2808 = vld [vmem:[%s1737 + $0x8] sm:$0x1]
        %v2809 = vld [vmem:[%s1737 + $0xc] sm:$0xe]
        %v2810 = vld [vmem:[%s1737 + $0x10] sm:$0xf]
        %v2811 = vld [vmem:[%s1737 + $0x14] sm:$0x1]
        %v2812 = vld [vmem:[%s1737 + $0x18] sm:$0xe]
        %v2813 = vld [vmem:[%s1737 + $0x1c] sm:$0xf]
        %v2814 = vld [vmem:[%s1737 + $0x20] sm:$0x1]
        %v2815 = vld [vmem:[%s1737 + $0x24] sm:$0xe]
        %v2816 = vld [vmem:[%s1737 + $0x28] sm:$0xf]
        %v2817 = vld [vmem:[%s1737 + $0x2c] sm:$0x1]
        %v2818 = vld [vmem:[%s1737 + $0x30] sm:$0xe]
        %v2819 = vld [vmem:[%s1737 + $0x34] sm:$0xf]
        %v2820 = vld [vmem:[%s1737 + $0x38] sm:$0x1]
        %v2821 = vld [vmem:[%s1737 + $0x3c] sm:$0xe]
        %v2822 = vld [vmem:[%s1737 + $0x40] sm:$0xf]
        %v2823 = vld [vmem:[%s1737 + $0x44] sm:$0x1]
        %v2824 = vld [vmem:[%s1737 + $0x48] sm:$0xe]
        %v2825 = vld [vmem:[%s1737 + $0x4c] sm:$0xf]
        %v2826 = vld [vmem:[%s1737 + $0x50] sm:$0x1]
        %v2827 = vld [vmem:[%s1737 + $0x54] sm:$0xe]
        %v2828 = vld [vmem:[%s1737 + $0x58] sm:$0xf]
        %v2829 = vld [vmem:[%s1737 + $0x5c] sm:$0x1]
        %v2830 = vld [vmem:[%s1737 + $0x60] sm:$0xe]
        %v2831 = vld [vmem:[%s1737 + $0x64] sm:$0xf]
        %v2832 = vld [vmem:[%s1737 + $0x68] sm:$0x1]
        %v2833 = vld [vmem:[%s1737 + $0x6c] sm:$0xe]
        %v2834 = vld [vmem:[%s1737 + $0x70] sm:$0xf]
        %v2835 = vld [vmem:[%s1737 + $0x74] sm:$0x1]
        %v2836 = vld [vmem:[%s1737 + $0x78] sm:$0xe]
        %v2837 = vld [vmem:[%s1737 + $0x7c] sm:$0xf]
        %v2838 = vld [vmem:[%s1737 + $0x80] sm:$0x1]
        %v2839 = vld [vmem:[%s1737 + $0x84] sm:$0xe]
        %v2840 = vld [vmem:[%s1737 + $0x88] sm:$0xf]
        %v2841 = vld [vmem:[%s1737 + $0x8c] sm:$0x1]
        %v2842 = vld [vmem:[%s1737 + $0x90] sm:$0xe]
        %v2843 = vld [vmem:[%s1737 + $0x94] sm:$0xf]
        %v2844 = vld [vmem:[%s1737 + $0x98] sm:$0x1]
        %v2845 = vld [vmem:[%s1737 + $0x9c] sm:$0xe]
        %v2846 = vld [vmem:[%s1737 + $0xa0] sm:$0xf]
        %v2847 = vld [vmem:[%s1737 + $0xa4] sm:$0x1]
        %v2848 = vld [vmem:[%s1737 + $0xa8] sm:$0xe]
        %v2849 = vld [vmem:[%s1737 + $0xac] sm:$0xf]
        %v2850 = vld [vmem:[%s1737 + $0xb0] sm:$0x1]
        %v2851 = vld [vmem:[%s1737 + $0xb4] sm:$0xe]
        %v2852 = vld [vmem:[%s1737 + $0xb8] sm:$0xf]
        %v2853 = vld [vmem:[%s1737 + $0xbc] sm:$0x1]
        %v2902 = vrot.slane %v2806, 5
        %v2903 = vrot.slane %v2902, 4
        %v2904 = vrot.slane %v2807, 5
        %v2905 = vsel %vm1335, %v2903, %v2904
        %v2906 = vrot.slane %v2904, 4
        %v2907 = vrot.slane %v2808, 5
        %v2908 = vsel %vm1335, %v2906, %v2907
        %v2909 = vrot.slane %v2809, 5
        %v2910 = vrot.slane %v2909, 4
        %v2911 = vrot.slane %v2810, 5
        %v2912 = vsel %vm1335, %v2910, %v2911
        %v2913 = vrot.slane %v2911, 4
        %v2914 = vrot.slane %v2811, 5
        %v2915 = vsel %vm1335, %v2913, %v2914
        %v2916 = vrot.slane %v2812, 5
        %v2917 = vrot.slane %v2916, 4
        %v2918 = vrot.slane %v2813, 5
        %v2919 = vsel %vm1335, %v2917, %v2918
        %v2920 = vrot.slane %v2918, 4
        %v2921 = vrot.slane %v2814, 5
        %v2922 = vsel %vm1335, %v2920, %v2921
        %v2923 = vrot.slane %v2815, 5
        %v2924 = vrot.slane %v2923, 4
        %v2925 = vrot.slane %v2816, 5
        %v2926 = vsel %vm1335, %v2924, %v2925
        %v2927 = vrot.slane %v2925, 4
        %v2928 = vrot.slane %v2817, 5
        %v2929 = vsel %vm1335, %v2927, %v2928
        %v2930 = vrot.slane %v2818, 5
        %v2931 = vrot.slane %v2930, 4
        %v2932 = vrot.slane %v2819, 5
        %v2933 = vsel %vm1335, %v2931, %v2932
        %v2934 = vrot.slane %v2932, 4
        %v2935 = vrot.slane %v2820, 5
        %v2936 = vsel %vm1335, %v2934, %v2935
        %v2937 = vrot.slane %v2821, 5
        %v2938 = vrot.slane %v2937, 4
        %v2939 = vrot.slane %v2822, 5
        %v2940 = vsel %vm1335, %v2938, %v2939
        %v2941 = vrot.slane %v2939, 4
        %v2942 = vrot.slane %v2823, 5
        %v2943 = vsel %vm1335, %v2941, %v2942
        %v2944 = vrot.slane %v2824, 5
        %v2945 = vrot.slane %v2944, 4
        %v2946 = vrot.slane %v2825, 5
        %v2947 = vsel %vm1335, %v2945, %v2946
        %v2948 = vrot.slane %v2946, 4
        %v2949 = vrot.slane %v2826, 5
        %v2950 = vsel %vm1335, %v2948, %v2949
        %v2951 = vrot.slane %v2827, 5
        %v2952 = vrot.slane %v2951, 4
        %v2953 = vrot.slane %v2828, 5
        %v2954 = vsel %vm1335, %v2952, %v2953
        %v2955 = vrot.slane %v2953, 4
        %v2956 = vrot.slane %v2829, 5
        %v2957 = vsel %vm1335, %v2955, %v2956
        %v2958 = vrot.slane %v2830, 5
        %v2959 = vrot.slane %v2958, 4
        %v2960 = vrot.slane %v2831, 5
        %v2961 = vsel %vm1335, %v2959, %v2960
        %v2962 = vrot.slane %v2960, 4
        %v2963 = vrot.slane %v2832, 5
        %v2964 = vsel %vm1335, %v2962, %v2963
        %v2965 = vrot.slane %v2833, 5
        %v2966 = vrot.slane %v2965, 4
        %v2967 = vrot.slane %v2834, 5
        %v2968 = vsel %vm1335, %v2966, %v2967
        %v2969 = vrot.slane %v2967, 4
        %v2970 = vrot.slane %v2835, 5
        %v2971 = vsel %vm1335, %v2969, %v2970
        %v2972 = vrot.slane %v2836, 5
        %v2973 = vrot.slane %v2972, 4
        %v2974 = vrot.slane %v2837, 5
        %v2975 = vsel %vm1335, %v2973, %v2974
        %v2976 = vrot.slane %v2974, 4
        %v2977 = vrot.slane %v2838, 5
        %v2978 = vsel %vm1335, %v2976, %v2977
        %v2979 = vrot.slane %v2839, 5
        %v2980 = vrot.slane %v2979, 4
        %v2981 = vrot.slane %v2840, 5
        %v2982 = vsel %vm1335, %v2980, %v2981
        %v2983 = vrot.slane %v2981, 4
        %v2984 = vrot.slane %v2841, 5
        %v2985 = vsel %vm1335, %v2983, %v2984
        %v2986 = vrot.slane %v2842, 5
        %v2987 = vrot.slane %v2986, 4
        %v2988 = vrot.slane %v2843, 5
        %v2989 = vsel %vm1335, %v2987, %v2988
        %v2990 = vrot.slane %v2988, 4
        %v2991 = vrot.slane %v2844, 5
        %v2992 = vsel %vm1335, %v2990, %v2991
        %v2993 = vrot.slane %v2845, 5
        %v2994 = vrot.slane %v2993, 4
        %v2995 = vrot.slane %v2846, 5
        %v2996 = vsel %vm1335, %v2994, %v2995
        %v2997 = vrot.slane %v2995, 4
        %v2998 = vrot.slane %v2847, 5
        %v2999 = vsel %vm1335, %v2997, %v2998
        %v3000 = vrot.slane %v2848, 5
        %v3001 = vrot.slane %v3000, 4
        %v3002 = vrot.slane %v2849, 5
        %v3003 = vsel %vm1335, %v3001, %v3002
        %v3004 = vrot.slane %v3002, 4
        %v3005 = vrot.slane %v2850, 5
        %v3006 = vsel %vm1335, %v3004, %v3005
        %v3007 = vrot.slane %v2851, 5
        %v3008 = vrot.slane %v3007, 4
        %v3009 = vrot.slane %v2852, 5
        %v3010 = vsel %vm1335, %v3008, %v3009
        %v3011 = vrot.slane %v3009, 4
        %v3012 = vrot.slane %v2853, 5
        %v3013 = vsel %vm1335, %v3011, %v3012
        %s3014 = scalar_lea.vmem %s219, 10
        %v3015 = vld [vmem:[%s3014] sm:$0x3]
        %v3016 = vunpack.c.l.b16 %v2905
        %v3017 = vunpack.c.l.b16 %v2908
        %v3018 = vunpack.c.l.b16 %v2912
        %v3019 = vunpack.c.l.b16 %v2915
        %v3020 = vunpack.c.l.b16 %v2919
        %v3021 = vunpack.c.l.b16 %v2922
        %v3022 = vunpack.c.l.b16 %v2926
        %v3023 = vunpack.c.l.b16 %v2929
        %v3024 = vunpack.c.l.b16 %v2933
        %v3025 = vunpack.c.l.b16 %v2936
        %v3026 = vunpack.c.l.b16 %v2940
        %v3027 = vunpack.c.l.b16 %v2943
        %v3028 = vunpack.c.l.b16 %v2947
        %v3029 = vunpack.c.l.b16 %v2950
        %v3030 = vunpack.c.l.b16 %v2954
        %v3031 = vunpack.c.l.b16 %v2957
        %v3032 = vunpack.c.l.b16 %v2961
        %v3033 = vunpack.c.l.b16 %v2964
        %v3034 = vunpack.c.l.b16 %v2968
        %v3035 = vunpack.c.l.b16 %v2971
        %v3036 = vunpack.c.l.b16 %v2975
        %v3037 = vunpack.c.l.b16 %v2978
        %v3038 = vunpack.c.l.b16 %v2982
        %v3039 = vunpack.c.l.b16 %v2985
        %v3040 = vunpack.c.l.b16 %v2989
        %v3041 = vunpack.c.l.b16 %v2992
        %v3042 = vunpack.c.l.b16 %v2996
        %v3043 = vunpack.c.l.b16 %v2999
        %v3044 = vunpack.c.l.b16 %v3003
        %v3045 = vunpack.c.l.b16 %v3006
        %v3046 = vunpack.c.l.b16 %v3010
        %v3047 = vunpack.c.l.b16 %v3013
        %v3048 = vpack.c.b16 %v3017, %v3016
        %v3049 = vpack.c.b16 %v3019, %v3018
        %v3050 = vpack.c.b16 %v3021, %v3020
        %v3051 = vpack.c.b16 %v3023, %v3022
        %v3052 = vpack.c.b16 %v3025, %v3024
        %v3053 = vpack.c.b16 %v3027, %v3026
        %v3054 = vpack.c.b16 %v3029, %v3028
        %v3055 = vpack.c.b16 %v3031, %v3030
        %v3056 = vpack.c.b16 %v3033, %v3032
        %v3057 = vpack.c.b16 %v3035, %v3034
        %v3058 = vpack.c.b16 %v3037, %v3036
        %v3059 = vpack.c.b16 %v3039, %v3038
        %v3060 = vpack.c.b16 %v3041, %v3040
        %v3061 = vpack.c.b16 %v3043, %v3042
        %v3062 = vpack.c.b16 %v3045, %v3044
        %v3063 = vpack.c.b16 %v3047, %v3046
        %v3065 = vsel %vm342, %v3048, 0
        %v3068 = vsel %vm342, %v3049, 0
        %v3071 = vsel %vm342, %v3050, 0
        %v3074 = vsel %vm342, %v3051, 0
        %v3077 = vsel %vm342, %v3052, 0
        %v3080 = vsel %vm342, %v3053, 0
        %v3083 = vsel %vm342, %v3054, 0
        %v3086 = vsel %vm342, %v3055, 0
        %v3089 = vsel %vm342, %v3056, 0
        %v3092 = vsel %vm342, %v3057, 0
        %v3095 = vsel %vm342, %v3058, 0
        %v3098 = vsel %vm342, %v3059, 0
        %v3101 = vsel %vm342, %v3060, 0
        %v3104 = vsel %vm342, %v3061, 0
        %v3107 = vsel %vm342, %v3062, 0
        %v3110 = vsel %vm342, %v3063, 0
        %v3113 = vsel %vm391, %v3015, 0
        %3115 = vmatpush.bf16.msra.mxu0 0
        %3116 = vmatpush.bf16.msra.mxu0 0
        %3117 = vmatpush.bf16.msra.mxu0 0
        %3118 = vmatpush.bf16.msra.mxu0 0
        %3119 = vmatpush.bf16.msra.mxu0 0
        %3120 = vmatpush.bf16.msra.mxu0 0
        %3121 = vmatpush.bf16.msra.mxu0 0
        %3122 = vmatpush.bf16.msra.mxu0 %v3113
        %3123 = vmatmul.bf16.gmra.mxu0 %v3065
        %v3124 = vpop.f32.mrf.mxu0
        %v3125 = vadd.f32 0.0, %v3124
        %v3126 = vpop.f32.mrf.mxu0
        %v3127 = vadd.f32 0.0, %v3126
        %3128 = vmatmul.bf16.gmra.mxu0 %v3068
        %v3129 = vpop.f32.mrf.mxu0
        %v3130 = vadd.f32 0.0, %v3129
        %v3131 = vpop.f32.mrf.mxu0
        %v3132 = vadd.f32 0.0, %v3131
        %3133 = vmatmul.bf16.gmra.mxu0 %v3071
        %v3134 = vpop.f32.mrf.mxu0
        %v3135 = vadd.f32 0.0, %v3134
        %v3136 = vpop.f32.mrf.mxu0
        %v3137 = vadd.f32 0.0, %v3136
        %3138 = vmatmul.bf16.gmra.mxu0 %v3074
        %v3139 = vpop.f32.mrf.mxu0
        %v3140 = vadd.f32 0.0, %v3139
        %v3141 = vpop.f32.mrf.mxu0
        %v3142 = vadd.f32 0.0, %v3141
        %3143 = vmatmul.bf16.gmra.mxu0 %v3077
        %v3144 = vpop.f32.mrf.mxu0
        %v3145 = vadd.f32 0.0, %v3144
        %v3146 = vpop.f32.mrf.mxu0
        %v3147 = vadd.f32 0.0, %v3146
        %3148 = vmatmul.bf16.gmra.mxu0 %v3080
        %v3149 = vpop.f32.mrf.mxu0
        %v3150 = vadd.f32 0.0, %v3149
        %v3151 = vpop.f32.mrf.mxu0
        %v3152 = vadd.f32 0.0, %v3151
        %3153 = vmatmul.bf16.gmra.mxu0 %v3083
        %v3154 = vpop.f32.mrf.mxu0
        %v3155 = vadd.f32 0.0, %v3154
        %v3156 = vpop.f32.mrf.mxu0
        %v3157 = vadd.f32 0.0, %v3156
        %3158 = vmatmul.bf16.gmra.mxu0 %v3086
        %v3159 = vpop.f32.mrf.mxu0
        %v3160 = vadd.f32 0.0, %v3159
        %v3161 = vpop.f32.mrf.mxu0
        %v3162 = vadd.f32 0.0, %v3161
        %3163 = vmatmul.bf16.gmra.mxu0 %v3089
        %v3164 = vpop.f32.mrf.mxu0
        %v3165 = vadd.f32 0.0, %v3164
        %v3166 = vpop.f32.mrf.mxu0
        %v3167 = vadd.f32 0.0, %v3166
        %3168 = vmatmul.bf16.gmra.mxu0 %v3092
        %v3169 = vpop.f32.mrf.mxu0
        %v3170 = vadd.f32 0.0, %v3169
        %v3171 = vpop.f32.mrf.mxu0
        %v3172 = vadd.f32 0.0, %v3171
        %3173 = vmatmul.bf16.gmra.mxu0 %v3095
        %v3174 = vpop.f32.mrf.mxu0
        %v3175 = vadd.f32 0.0, %v3174
        %v3176 = vpop.f32.mrf.mxu0
        %v3177 = vadd.f32 0.0, %v3176
        %3178 = vmatmul.bf16.gmra.mxu0 %v3098
        %v3179 = vpop.f32.mrf.mxu0
        %v3180 = vadd.f32 0.0, %v3179
        %v3181 = vpop.f32.mrf.mxu0
        %v3182 = vadd.f32 0.0, %v3181
        %3183 = vmatmul.bf16.gmra.mxu0 %v3101
        %v3184 = vpop.f32.mrf.mxu0
        %v3185 = vadd.f32 0.0, %v3184
        %v3186 = vpop.f32.mrf.mxu0
        %v3187 = vadd.f32 0.0, %v3186
        %3188 = vmatmul.bf16.gmra.mxu0 %v3104
        %v3189 = vpop.f32.mrf.mxu0
        %v3190 = vadd.f32 0.0, %v3189
        %v3191 = vpop.f32.mrf.mxu0
        %v3192 = vadd.f32 0.0, %v3191
        %3193 = vmatmul.bf16.gmra.mxu0 %v3107
        %v3194 = vpop.f32.mrf.mxu0
        %v3195 = vadd.f32 0.0, %v3194
        %v3196 = vpop.f32.mrf.mxu0
        %v3197 = vadd.f32 0.0, %v3196
        %3198 = vmatmul.bf16.gmra.mxu0 %v3110
        %v3199 = vpop.f32.mrf.mxu0
        %v3200 = vadd.f32 0.0, %v3199
        %v3201 = vpop.f32.mrf.mxu0
        %v3202 = vadd.f32 0.0, %v3201
        %3203 = vdwg.mxu0
        %v3204 = vld [vmem:[#allocation2] sm:$0xff]
        %v3205 = vld [vmem:[#allocation2 + $0x8] sm:$0xff]
        %v3206 = vld [vmem:[#allocation2 + $0x10] sm:$0xff]
        %v3207 = vld [vmem:[#allocation2 + $0x18] sm:$0xff]
        %v3208 = vld [vmem:[#allocation2 + $0x20] sm:$0xff]
        %v3209 = vld [vmem:[#allocation2 + $0x28] sm:$0xff]
        %v3210 = vld [vmem:[#allocation2 + $0x30] sm:$0xff]
        %v3211 = vld [vmem:[#allocation2 + $0x38] sm:$0xff]
        %v3212 = vld [vmem:[#allocation2 + $0x40] sm:$0xff]
        %v3213 = vld [vmem:[#allocation2 + $0x48] sm:$0xff]
        %v3214 = vld [vmem:[#allocation2 + $0x50] sm:$0xff]
        %v3215 = vld [vmem:[#allocation2 + $0x58] sm:$0xff]
        %v3216 = vld [vmem:[#allocation2 + $0x60] sm:$0xff]
        %v3217 = vld [vmem:[#allocation2 + $0x68] sm:$0xff]
        %v3218 = vld [vmem:[#allocation2 + $0x70] sm:$0xff]
        %v3219 = vld [vmem:[#allocation2 + $0x78] sm:$0xff]
        %v3220 = vld [vmem:[#allocation2 + $0x80] sm:$0xff]
        %v3221 = vld [vmem:[#allocation2 + $0x88] sm:$0xff]
        %v3222 = vld [vmem:[#allocation2 + $0x90] sm:$0xff]
        %v3223 = vld [vmem:[#allocation2 + $0x98] sm:$0xff]
        %v3224 = vld [vmem:[#allocation2 + $0xa0] sm:$0xff]
        %v3225 = vld [vmem:[#allocation2 + $0xa8] sm:$0xff]
        %v3226 = vld [vmem:[#allocation2 + $0xb0] sm:$0xff]
        %v3227 = vld [vmem:[#allocation2 + $0xb8] sm:$0xff]
        %v3228 = vld [vmem:[#allocation2 + $0xc0] sm:$0xff]
        %v3229 = vld [vmem:[#allocation2 + $0xc8] sm:$0xff]
        %v3230 = vld [vmem:[#allocation2 + $0xd0] sm:$0xff]
        %v3231 = vld [vmem:[#allocation2 + $0xd8] sm:$0xff]
        %v3232 = vld [vmem:[#allocation2 + $0xe0] sm:$0xff]
        %v3233 = vld [vmem:[#allocation2 + $0xe8] sm:$0xff]
        %v3234 = vld [vmem:[#allocation2 + $0xf0] sm:$0xff]
        %v3235 = vld [vmem:[#allocation2 + $0xf8] sm:$0xff]
        %v3236 = vadd.f32 %v3204, %v3125
        %v3237 = vadd.f32 %v3205, %v3127
        %v3238 = vadd.f32 %v3206, %v3130
        %v3239 = vadd.f32 %v3207, %v3132
        %v3240 = vadd.f32 %v3208, %v3135
        %v3241 = vadd.f32 %v3209, %v3137
        %v3242 = vadd.f32 %v3210, %v3140
        %v3243 = vadd.f32 %v3211, %v3142
        %v3244 = vadd.f32 %v3212, %v3145
        %v3245 = vadd.f32 %v3213, %v3147
        %v3246 = vadd.f32 %v3214, %v3150
        %v3247 = vadd.f32 %v3215, %v3152
        %v3248 = vadd.f32 %v3216, %v3155
        %v3249 = vadd.f32 %v3217, %v3157
        %v3250 = vadd.f32 %v3218, %v3160
        %v3251 = vadd.f32 %v3219, %v3162
        %v3252 = vadd.f32 %v3220, %v3165
        %v3253 = vadd.f32 %v3221, %v3167
        %v3254 = vadd.f32 %v3222, %v3170
        %v3255 = vadd.f32 %v3223, %v3172
        %v3256 = vadd.f32 %v3224, %v3175
        %v3257 = vadd.f32 %v3225, %v3177
        %v3258 = vadd.f32 %v3226, %v3180
        %v3259 = vadd.f32 %v3227, %v3182
        %v3260 = vadd.f32 %v3228, %v3185
        %v3261 = vadd.f32 %v3229, %v3187
        %v3262 = vadd.f32 %v3230, %v3190
        %v3263 = vadd.f32 %v3231, %v3192
        %v3264 = vadd.f32 %v3232, %v3195
        %v3265 = vadd.f32 %v3233, %v3197
        %v3266 = vadd.f32 %v3234, %v3200
        %v3267 = vadd.f32 %v3235, %v3202
        %3268 = vst [vmem:[#allocation2] sm:$0xff] %v3236
        %3269 = vst [vmem:[#allocation2 + $0x8] sm:$0xff] %v3237
        %3270 = vst [vmem:[#allocation2 + $0x10] sm:$0xff] %v3238
        %3271 = vst [vmem:[#allocation2 + $0x18] sm:$0xff] %v3239
        %3272 = vst [vmem:[#allocation2 + $0x20] sm:$0xff] %v3240
        %3273 = vst [vmem:[#allocation2 + $0x28] sm:$0xff] %v3241
        %3274 = vst [vmem:[#allocation2 + $0x30] sm:$0xff] %v3242
        %3275 = vst [vmem:[#allocation2 + $0x38] sm:$0xff] %v3243
        %3276 = vst [vmem:[#allocation2 + $0x40] sm:$0xff] %v3244
        %3277 = vst [vmem:[#allocation2 + $0x48] sm:$0xff] %v3245
        %3278 = vst [vmem:[#allocation2 + $0x50] sm:$0xff] %v3246
        %3279 = vst [vmem:[#allocation2 + $0x58] sm:$0xff] %v3247
        %3280 = vst [vmem:[#allocation2 + $0x60] sm:$0xff] %v3248
        %3281 = vst [vmem:[#allocation2 + $0x68] sm:$0xff] %v3249
        %3282 = vst [vmem:[#allocation2 + $0x70] sm:$0xff] %v3250
        %3283 = vst [vmem:[#allocation2 + $0x78] sm:$0xff] %v3251
        %3284 = vst [vmem:[#allocation2 + $0x80] sm:$0xff] %v3252
        %3285 = vst [vmem:[#allocation2 + $0x88] sm:$0xff] %v3253
        %3286 = vst [vmem:[#allocation2 + $0x90] sm:$0xff] %v3254
        %3287 = vst [vmem:[#allocation2 + $0x98] sm:$0xff] %v3255
        %3288 = vst [vmem:[#allocation2 + $0xa0] sm:$0xff] %v3256
        %3289 = vst [vmem:[#allocation2 + $0xa8] sm:$0xff] %v3257
        %3290 = vst [vmem:[#allocation2 + $0xb0] sm:$0xff] %v3258
        %3291 = vst [vmem:[#allocation2 + $0xb8] sm:$0xff] %v3259
        %3292 = vst [vmem:[#allocation2 + $0xc0] sm:$0xff] %v3260
        %3293 = vst [vmem:[#allocation2 + $0xc8] sm:$0xff] %v3261
        %3294 = vst [vmem:[#allocation2 + $0xd0] sm:$0xff] %v3262
        %3295 = vst [vmem:[#allocation2 + $0xd8] sm:$0xff] %v3263
        %3296 = vst [vmem:[#allocation2 + $0xe0] sm:$0xff] %v3264
        %3297 = vst [vmem:[#allocation2 + $0xe8] sm:$0xff] %v3265
        %3298 = vst [vmem:[#allocation2 + $0xf0] sm:$0xff] %v3266
        %3299 = vst [vmem:[#allocation2 + $0xf8] sm:$0xff] %v3267
        %s3300 = sadd.s32 %s225, 2
        %s3301 = smul.u32 %s3300, 3
        %s3302 = smul.addr %s3301, 4
        %s3303 = scalar_lea.vmem %s215, %s3302
        %v3304 = vld [vmem:[%s3303] sm:$0xf]
        %v3305 = vld [vmem:[%s3303 + $0x4] sm:$0xf]
        %v3306 = vld [vmem:[%s3303 + $0xc] sm:$0xf]
        %v3307 = vld [vmem:[%s3303 + $0x10] sm:$0xf]
        %v3308 = vld [vmem:[%s3303 + $0x18] sm:$0xf]
        %v3309 = vld [vmem:[%s3303 + $0x1c] sm:$0xf]
        %v3310 = vld [vmem:[%s3303 + $0x24] sm:$0xf]
        %v3311 = vld [vmem:[%s3303 + $0x28] sm:$0xf]
        %v3312 = vld [vmem:[%s3303 + $0x30] sm:$0xf]
        %v3313 = vld [vmem:[%s3303 + $0x34] sm:$0xf]
        %v3314 = vld [vmem:[%s3303 + $0x3c] sm:$0xf]
        %v3315 = vld [vmem:[%s3303 + $0x40] sm:$0xf]
        %v3316 = vld [vmem:[%s3303 + $0x48] sm:$0xf]
        %v3317 = vld [vmem:[%s3303 + $0x4c] sm:$0xf]
        %v3318 = vld [vmem:[%s3303 + $0x54] sm:$0xf]
        %v3319 = vld [vmem:[%s3303 + $0x58] sm:$0xf]
        %v3320 = vld [vmem:[%s3303 + $0x60] sm:$0xf]
        %v3321 = vld [vmem:[%s3303 + $0x64] sm:$0xf]
        %v3322 = vld [vmem:[%s3303 + $0x6c] sm:$0xf]
        %v3323 = vld [vmem:[%s3303 + $0x70] sm:$0xf]
        %v3324 = vld [vmem:[%s3303 + $0x78] sm:$0xf]
        %v3325 = vld [vmem:[%s3303 + $0x7c] sm:$0xf]
        %v3326 = vld [vmem:[%s3303 + $0x84] sm:$0xf]
        %v3327 = vld [vmem:[%s3303 + $0x88] sm:$0xf]
        %v3328 = vld [vmem:[%s3303 + $0x90] sm:$0xf]
        %v3329 = vld [vmem:[%s3303 + $0x94] sm:$0xf]
        %v3330 = vld [vmem:[%s3303 + $0x9c] sm:$0xf]
        %v3331 = vld [vmem:[%s3303 + $0xa0] sm:$0xf]
        %v3332 = vld [vmem:[%s3303 + $0xa8] sm:$0xf]
        %v3333 = vld [vmem:[%s3303 + $0xac] sm:$0xf]
        %v3334 = vld [vmem:[%s3303 + $0xb4] sm:$0xf]
        %v3335 = vld [vmem:[%s3303 + $0xb8] sm:$0xf]
        %s3336 = scalar_lea.vmem %s219, 12
        %v3337 = vld [vmem:[%s3336] sm:$0x3]
        %v3370 = vunpack.c.l.b16 %v3304
        %v3371 = vunpack.c.l.b16 %v3305
        %v3372 = vunpack.c.l.b16 %v3306
        %v3373 = vunpack.c.l.b16 %v3307
        %v3374 = vunpack.c.l.b16 %v3308
        %v3375 = vunpack.c.l.b16 %v3309
        %v3376 = vunpack.c.l.b16 %v3310
        %v3377 = vunpack.c.l.b16 %v3311
        %v3378 = vunpack.c.l.b16 %v3312
        %v3379 = vunpack.c.l.b16 %v3313
        %v3380 = vunpack.c.l.b16 %v3314
        %v3381 = vunpack.c.l.b16 %v3315
        %v3382 = vunpack.c.l.b16 %v3316
        %v3383 = vunpack.c.l.b16 %v3317
        %v3384 = vunpack.c.l.b16 %v3318
        %v3385 = vunpack.c.l.b16 %v3319
        %v3386 = vunpack.c.l.b16 %v3320
        %v3387 = vunpack.c.l.b16 %v3321
        %v3388 = vunpack.c.l.b16 %v3322
        %v3389 = vunpack.c.l.b16 %v3323
        %v3390 = vunpack.c.l.b16 %v3324
        %v3391 = vunpack.c.l.b16 %v3325
        %v3392 = vunpack.c.l.b16 %v3326
        %v3393 = vunpack.c.l.b16 %v3327
        %v3394 = vunpack.c.l.b16 %v3328
        %v3395 = vunpack.c.l.b16 %v3329
        %v3396 = vunpack.c.l.b16 %v3330
        %v3397 = vunpack.c.l.b16 %v3331
        %v3398 = vunpack.c.l.b16 %v3332
        %v3399 = vunpack.c.l.b16 %v3333
        %v3400 = vunpack.c.l.b16 %v3334
        %v3401 = vunpack.c.l.b16 %v3335
        %v3402 = vpack.c.b16 %v3371, %v3370
        %v3403 = vpack.c.b16 %v3373, %v3372
        %v3404 = vpack.c.b16 %v3375, %v3374
        %v3405 = vpack.c.b16 %v3377, %v3376
        %v3406 = vpack.c.b16 %v3379, %v3378
        %v3407 = vpack.c.b16 %v3381, %v3380
        %v3408 = vpack.c.b16 %v3383, %v3382
        %v3409 = vpack.c.b16 %v3385, %v3384
        %v3410 = vpack.c.b16 %v3387, %v3386
        %v3411 = vpack.c.b16 %v3389, %v3388
        %v3412 = vpack.c.b16 %v3391, %v3390
        %v3413 = vpack.c.b16 %v3393, %v3392
        %v3414 = vpack.c.b16 %v3395, %v3394
        %v3415 = vpack.c.b16 %v3397, %v3396
        %v3416 = vpack.c.b16 %v3399, %v3398
        %v3417 = vpack.c.b16 %v3401, %v3400
        %v3419 = vsel %vm342, %v3402, 0
        %v3422 = vsel %vm342, %v3403, 0
        %v3425 = vsel %vm342, %v3404, 0
        %v3428 = vsel %vm342, %v3405, 0
        %v3431 = vsel %vm342, %v3406, 0
        %v3434 = vsel %vm342, %v3407, 0
        %v3437 = vsel %vm342, %v3408, 0
        %v3440 = vsel %vm342, %v3409, 0
        %v3443 = vsel %vm342, %v3410, 0
        %v3446 = vsel %vm342, %v3411, 0
        %v3449 = vsel %vm342, %v3412, 0
        %v3452 = vsel %vm342, %v3413, 0
        %v3455 = vsel %vm342, %v3414, 0
        %v3458 = vsel %vm342, %v3415, 0
        %v3461 = vsel %vm342, %v3416, 0
        %v3464 = vsel %vm342, %v3417, 0
        %v3467 = vsel %vm391, %v3337, 0
        %3469 = vmatpush.bf16.msra.mxu0 0
        %3470 = vmatpush.bf16.msra.mxu0 0
        %3471 = vmatpush.bf16.msra.mxu0 0
        %3472 = vmatpush.bf16.msra.mxu0 0
        %3473 = vmatpush.bf16.msra.mxu0 0
        %3474 = vmatpush.bf16.msra.mxu0 0
        %3475 = vmatpush.bf16.msra.mxu0 0
        %3476 = vmatpush.bf16.msra.mxu0 %v3467
        %3477 = vmatmul.bf16.gmra.mxu0 %v3419
        %v3478 = vpop.f32.mrf.mxu0
        %v3479 = vadd.f32 0.0, %v3478
        %v3480 = vpop.f32.mrf.mxu0
        %v3481 = vadd.f32 0.0, %v3480
        %3482 = vmatmul.bf16.gmra.mxu0 %v3422
        %v3483 = vpop.f32.mrf.mxu0
        %v3484 = vadd.f32 0.0, %v3483
        %v3485 = vpop.f32.mrf.mxu0
        %v3486 = vadd.f32 0.0, %v3485
        %3487 = vmatmul.bf16.gmra.mxu0 %v3425
        %v3488 = vpop.f32.mrf.mxu0
        %v3489 = vadd.f32 0.0, %v3488
        %v3490 = vpop.f32.mrf.mxu0
        %v3491 = vadd.f32 0.0, %v3490
        %3492 = vmatmul.bf16.gmra.mxu0 %v3428
        %v3493 = vpop.f32.mrf.mxu0
        %v3494 = vadd.f32 0.0, %v3493
        %v3495 = vpop.f32.mrf.mxu0
        %v3496 = vadd.f32 0.0, %v3495
        %3497 = vmatmul.bf16.gmra.mxu0 %v3431
        %v3498 = vpop.f32.mrf.mxu0
        %v3499 = vadd.f32 0.0, %v3498
        %v3500 = vpop.f32.mrf.mxu0
        %v3501 = vadd.f32 0.0, %v3500
        %3502 = vmatmul.bf16.gmra.mxu0 %v3434
        %v3503 = vpop.f32.mrf.mxu0
        %v3504 = vadd.f32 0.0, %v3503
        %v3505 = vpop.f32.mrf.mxu0
        %v3506 = vadd.f32 0.0, %v3505
        %3507 = vmatmul.bf16.gmra.mxu0 %v3437
        %v3508 = vpop.f32.mrf.mxu0
        %v3509 = vadd.f32 0.0, %v3508
        %v3510 = vpop.f32.mrf.mxu0
        %v3511 = vadd.f32 0.0, %v3510
        %3512 = vmatmul.bf16.gmra.mxu0 %v3440
        %v3513 = vpop.f32.mrf.mxu0
        %v3514 = vadd.f32 0.0, %v3513
        %v3515 = vpop.f32.mrf.mxu0
        %v3516 = vadd.f32 0.0, %v3515
        %3517 = vmatmul.bf16.gmra.mxu0 %v3443
        %v3518 = vpop.f32.mrf.mxu0
        %v3519 = vadd.f32 0.0, %v3518
        %v3520 = vpop.f32.mrf.mxu0
        %v3521 = vadd.f32 0.0, %v3520
        %3522 = vmatmul.bf16.gmra.mxu0 %v3446
        %v3523 = vpop.f32.mrf.mxu0
        %v3524 = vadd.f32 0.0, %v3523
        %v3525 = vpop.f32.mrf.mxu0
        %v3526 = vadd.f32 0.0, %v3525
        %3527 = vmatmul.bf16.gmra.mxu0 %v3449
        %v3528 = vpop.f32.mrf.mxu0
        %v3529 = vadd.f32 0.0, %v3528
        %v3530 = vpop.f32.mrf.mxu0
        %v3531 = vadd.f32 0.0, %v3530
        %3532 = vmatmul.bf16.gmra.mxu0 %v3452
        %v3533 = vpop.f32.mrf.mxu0
        %v3534 = vadd.f32 0.0, %v3533
        %v3535 = vpop.f32.mrf.mxu0
        %v3536 = vadd.f32 0.0, %v3535
        %3537 = vmatmul.bf16.gmra.mxu0 %v3455
        %v3538 = vpop.f32.mrf.mxu0
        %v3539 = vadd.f32 0.0, %v3538
        %v3540 = vpop.f32.mrf.mxu0
        %v3541 = vadd.f32 0.0, %v3540
        %3542 = vmatmul.bf16.gmra.mxu0 %v3458
        %v3543 = vpop.f32.mrf.mxu0
        %v3544 = vadd.f32 0.0, %v3543
        %v3545 = vpop.f32.mrf.mxu0
        %v3546 = vadd.f32 0.0, %v3545
        %3547 = vmatmul.bf16.gmra.mxu0 %v3461
        %v3548 = vpop.f32.mrf.mxu0
        %v3549 = vadd.f32 0.0, %v3548
        %v3550 = vpop.f32.mrf.mxu0
        %v3551 = vadd.f32 0.0, %v3550
        %3552 = vmatmul.bf16.gmra.mxu0 %v3464
        %v3553 = vpop.f32.mrf.mxu0
        %v3554 = vadd.f32 0.0, %v3553
        %v3555 = vpop.f32.mrf.mxu0
        %v3556 = vadd.f32 0.0, %v3555
        %3557 = vdwg.mxu0
        %v3558 = vld [vmem:[#allocation2] sm:$0xff]
        %v3559 = vld [vmem:[#allocation2 + $0x8] sm:$0xff]
        %v3560 = vld [vmem:[#allocation2 + $0x10] sm:$0xff]
        %v3561 = vld [vmem:[#allocation2 + $0x18] sm:$0xff]
        %v3562 = vld [vmem:[#allocation2 + $0x20] sm:$0xff]
        %v3563 = vld [vmem:[#allocation2 + $0x28] sm:$0xff]
        %v3564 = vld [vmem:[#allocation2 + $0x30] sm:$0xff]
        %v3565 = vld [vmem:[#allocation2 + $0x38] sm:$0xff]
        %v3566 = vld [vmem:[#allocation2 + $0x40] sm:$0xff]
        %v3567 = vld [vmem:[#allocation2 + $0x48] sm:$0xff]
        %v3568 = vld [vmem:[#allocation2 + $0x50] sm:$0xff]
        %v3569 = vld [vmem:[#allocation2 + $0x58] sm:$0xff]
        %v3570 = vld [vmem:[#allocation2 + $0x60] sm:$0xff]
        %v3571 = vld [vmem:[#allocation2 + $0x68] sm:$0xff]
        %v3572 = vld [vmem:[#allocation2 + $0x70] sm:$0xff]
        %v3573 = vld [vmem:[#allocation2 + $0x78] sm:$0xff]
        %v3574 = vld [vmem:[#allocation2 + $0x80] sm:$0xff]
        %v3575 = vld [vmem:[#allocation2 + $0x88] sm:$0xff]
        %v3576 = vld [vmem:[#allocation2 + $0x90] sm:$0xff]
        %v3577 = vld [vmem:[#allocation2 + $0x98] sm:$0xff]
        %v3578 = vld [vmem:[#allocation2 + $0xa0] sm:$0xff]
        %v3579 = vld [vmem:[#allocation2 + $0xa8] sm:$0xff]
        %v3580 = vld [vmem:[#allocation2 + $0xb0] sm:$0xff]
        %v3581 = vld [vmem:[#allocation2 + $0xb8] sm:$0xff]
        %v3582 = vld [vmem:[#allocation2 + $0xc0] sm:$0xff]
        %v3583 = vld [vmem:[#allocation2 + $0xc8] sm:$0xff]
        %v3584 = vld [vmem:[#allocation2 + $0xd0] sm:$0xff]
        %v3585 = vld [vmem:[#allocation2 + $0xd8] sm:$0xff]
        %v3586 = vld [vmem:[#allocation2 + $0xe0] sm:$0xff]
        %v3587 = vld [vmem:[#allocation2 + $0xe8] sm:$0xff]
        %v3588 = vld [vmem:[#allocation2 + $0xf0] sm:$0xff]
        %v3589 = vld [vmem:[#allocation2 + $0xf8] sm:$0xff]
        %v3590 = vadd.f32 %v3558, %v3479
        %v3591 = vadd.f32 %v3559, %v3481
        %v3592 = vadd.f32 %v3560, %v3484
        %v3593 = vadd.f32 %v3561, %v3486
        %v3594 = vadd.f32 %v3562, %v3489
        %v3595 = vadd.f32 %v3563, %v3491
        %v3596 = vadd.f32 %v3564, %v3494
        %v3597 = vadd.f32 %v3565, %v3496
        %v3598 = vadd.f32 %v3566, %v3499
        %v3599 = vadd.f32 %v3567, %v3501
        %v3600 = vadd.f32 %v3568, %v3504
        %v3601 = vadd.f32 %v3569, %v3506
        %v3602 = vadd.f32 %v3570, %v3509
        %v3603 = vadd.f32 %v3571, %v3511
        %v3604 = vadd.f32 %v3572, %v3514
        %v3605 = vadd.f32 %v3573, %v3516
        %v3606 = vadd.f32 %v3574, %v3519
        %v3607 = vadd.f32 %v3575, %v3521
        %v3608 = vadd.f32 %v3576, %v3524
        %v3609 = vadd.f32 %v3577, %v3526
        %v3610 = vadd.f32 %v3578, %v3529
        %v3611 = vadd.f32 %v3579, %v3531
        %v3612 = vadd.f32 %v3580, %v3534
        %v3613 = vadd.f32 %v3581, %v3536
        %v3614 = vadd.f32 %v3582, %v3539
        %v3615 = vadd.f32 %v3583, %v3541
        %v3616 = vadd.f32 %v3584, %v3544
        %v3617 = vadd.f32 %v3585, %v3546
        %v3618 = vadd.f32 %v3586, %v3549
        %v3619 = vadd.f32 %v3587, %v3551
        %v3620 = vadd.f32 %v3588, %v3554
        %v3621 = vadd.f32 %v3589, %v3556
        %3622 = vst [vmem:[#allocation2] sm:$0xff] %v3590
        %3623 = vst [vmem:[#allocation2 + $0x8] sm:$0xff] %v3591
        %3624 = vst [vmem:[#allocation2 + $0x10] sm:$0xff] %v3592
        %3625 = vst [vmem:[#allocation2 + $0x18] sm:$0xff] %v3593
        %3626 = vst [vmem:[#allocation2 + $0x20] sm:$0xff] %v3594
        %3627 = vst [vmem:[#allocation2 + $0x28] sm:$0xff] %v3595
        %3628 = vst [vmem:[#allocation2 + $0x30] sm:$0xff] %v3596
        %3629 = vst [vmem:[#allocation2 + $0x38] sm:$0xff] %v3597
        %3630 = vst [vmem:[#allocation2 + $0x40] sm:$0xff] %v3598
        %3631 = vst [vmem:[#allocation2 + $0x48] sm:$0xff] %v3599
        %3632 = vst [vmem:[#allocation2 + $0x50] sm:$0xff] %v3600
        %3633 = vst [vmem:[#allocation2 + $0x58] sm:$0xff] %v3601
        %3634 = vst [vmem:[#allocation2 + $0x60] sm:$0xff] %v3602
        %3635 = vst [vmem:[#allocation2 + $0x68] sm:$0xff] %v3603
        %3636 = vst [vmem:[#allocation2 + $0x70] sm:$0xff] %v3604
        %3637 = vst [vmem:[#allocation2 + $0x78] sm:$0xff] %v3605
        %3638 = vst [vmem:[#allocation2 + $0x80] sm:$0xff] %v3606
        %3639 = vst [vmem:[#allocation2 + $0x88] sm:$0xff] %v3607
        %3640 = vst [vmem:[#allocation2 + $0x90] sm:$0xff] %v3608
        %3641 = vst [vmem:[#allocation2 + $0x98] sm:$0xff] %v3609
        %3642 = vst [vmem:[#allocation2 + $0xa0] sm:$0xff] %v3610
        %3643 = vst [vmem:[#allocation2 + $0xa8] sm:$0xff] %v3611
        %3644 = vst [vmem:[#allocation2 + $0xb0] sm:$0xff] %v3612
        %3645 = vst [vmem:[#allocation2 + $0xb8] sm:$0xff] %v3613
        %3646 = vst [vmem:[#allocation2 + $0xc0] sm:$0xff] %v3614
        %3647 = vst [vmem:[#allocation2 + $0xc8] sm:$0xff] %v3615
        %3648 = vst [vmem:[#allocation2 + $0xd0] sm:$0xff] %v3616
        %3649 = vst [vmem:[#allocation2 + $0xd8] sm:$0xff] %v3617
        %3650 = vst [vmem:[#allocation2 + $0xe0] sm:$0xff] %v3618
        %3651 = vst [vmem:[#allocation2 + $0xe8] sm:$0xff] %v3619
        %3652 = vst [vmem:[#allocation2 + $0xf0] sm:$0xff] %v3620
        %3653 = vst [vmem:[#allocation2 + $0xf8] sm:$0xff] %v3621
        %v3654 = vld [vmem:[%s3303] sm:$0xf]
        %v3655 = vld [vmem:[%s3303 + $0x4] sm:$0xf]
        %v3656 = vld [vmem:[%s3303 + $0x8] sm:$0x1]
        %v3657 = vld [vmem:[%s3303 + $0xc] sm:$0xf]
        %v3658 = vld [vmem:[%s3303 + $0x10] sm:$0xf]
        %v3659 = vld [vmem:[%s3303 + $0x14] sm:$0x1]
        %v3660 = vld [vmem:[%s3303 + $0x18] sm:$0xf]
        %v3661 = vld [vmem:[%s3303 + $0x1c] sm:$0xf]
        %v3662 = vld [vmem:[%s3303 + $0x20] sm:$0x1]
        %v3663 = vld [vmem:[%s3303 + $0x24] sm:$0xf]
        %v3664 = vld [vmem:[%s3303 + $0x28] sm:$0xf]
        %v3665 = vld [vmem:[%s3303 + $0x2c] sm:$0x1]
        %v3666 = vld [vmem:[%s3303 + $0x30] sm:$0xf]
        %v3667 = vld [vmem:[%s3303 + $0x34] sm:$0xf]
        %v3668 = vld [vmem:[%s3303 + $0x38] sm:$0x1]
        %v3669 = vld [vmem:[%s3303 + $0x3c] sm:$0xf]
        %v3670 = vld [vmem:[%s3303 + $0x40] sm:$0xf]
        %v3671 = vld [vmem:[%s3303 + $0x44] sm:$0x1]
        %v3672 = vld [vmem:[%s3303 + $0x48] sm:$0xf]
        %v3673 = vld [vmem:[%s3303 + $0x4c] sm:$0xf]
        %v3674 = vld [vmem:[%s3303 + $0x50] sm:$0x1]
        %v3675 = vld [vmem:[%s3303 + $0x54] sm:$0xf]
        %v3676 = vld [vmem:[%s3303 + $0x58] sm:$0xf]
        %v3677 = vld [vmem:[%s3303 + $0x5c] sm:$0x1]
        %v3678 = vld [vmem:[%s3303 + $0x60] sm:$0xf]
        %v3679 = vld [vmem:[%s3303 + $0x64] sm:$0xf]
        %v3680 = vld [vmem:[%s3303 + $0x68] sm:$0x1]
        %v3681 = vld [vmem:[%s3303 + $0x6c] sm:$0xf]
        %v3682 = vld [vmem:[%s3303 + $0x70] sm:$0xf]
        %v3683 = vld [vmem:[%s3303 + $0x74] sm:$0x1]
        %v3684 = vld [vmem:[%s3303 + $0x78] sm:$0xf]
        %v3685 = vld [vmem:[%s3303 + $0x7c] sm:$0xf]
        %v3686 = vld [vmem:[%s3303 + $0x80] sm:$0x1]
        %v3687 = vld [vmem:[%s3303 + $0x84] sm:$0xf]
        %v3688 = vld [vmem:[%s3303 + $0x88] sm:$0xf]
        %v3689 = vld [vmem:[%s3303 + $0x8c] sm:$0x1]
        %v3690 = vld [vmem:[%s3303 + $0x90] sm:$0xf]
        %v3691 = vld [vmem:[%s3303 + $0x94] sm:$0xf]
        %v3692 = vld [vmem:[%s3303 + $0x98] sm:$0x1]
        %v3693 = vld [vmem:[%s3303 + $0x9c] sm:$0xf]
        %v3694 = vld [vmem:[%s3303 + $0xa0] sm:$0xf]
        %v3695 = vld [vmem:[%s3303 + $0xa4] sm:$0x1]
        %v3696 = vld [vmem:[%s3303 + $0xa8] sm:$0xf]
        %v3697 = vld [vmem:[%s3303 + $0xac] sm:$0xf]
        %v3698 = vld [vmem:[%s3303 + $0xb0] sm:$0x1]
        %v3699 = vld [vmem:[%s3303 + $0xb4] sm:$0xf]
        %v3700 = vld [vmem:[%s3303 + $0xb8] sm:$0xf]
        %v3701 = vld [vmem:[%s3303 + $0xbc] sm:$0x1]
        %v3703 = vshrl.u32 %v3654, 16
        %v3705 = vrot.slane %v3703, 4
        %v3706 = vshll.u32 %v3654, 16
        %v3708 = vrot.slane %v3706, 5
        %v3709 = vor.u32 %v3705, %v3708
        %v3710 = vrot.slane %v3709, 4
        %v3712 = vshll.u32 %v3655, 16
        %v3714 = vrot.slane %v3712, 5
        %v3715 = vsel %vm566, %v3710, %v3714
        %v3716 = vshrl.u32 %v3655, 16
        %v3718 = vrot.slane %v3716, 4
        %v3719 = vor.u32 %v3718, %v3714
        %v3720 = vrot.slane %v3719, 4
        %v3722 = vshll.u32 %v3656, 16
        %v3724 = vrot.slane %v3722, 5
        %v3725 = vsel %vm566, %v3720, %v3724
        %v3727 = vshrl.u32 %v3657, 16
        %v3729 = vrot.slane %v3727, 4
        %v3730 = vshll.u32 %v3657, 16
        %v3732 = vrot.slane %v3730, 5
        %v3733 = vor.u32 %v3729, %v3732
        %v3734 = vrot.slane %v3733, 4
        %v3736 = vshll.u32 %v3658, 16
        %v3738 = vrot.slane %v3736, 5
        %v3739 = vsel %vm566, %v3734, %v3738
        %v3740 = vshrl.u32 %v3658, 16
        %v3742 = vrot.slane %v3740, 4
        %v3743 = vor.u32 %v3742, %v3738
        %v3744 = vrot.slane %v3743, 4
        %v3746 = vshll.u32 %v3659, 16
        %v3748 = vrot.slane %v3746, 5
        %v3749 = vsel %vm566, %v3744, %v3748
        %v3751 = vshrl.u32 %v3660, 16
        %v3753 = vrot.slane %v3751, 4
        %v3754 = vshll.u32 %v3660, 16
        %v3756 = vrot.slane %v3754, 5
        %v3757 = vor.u32 %v3753, %v3756
        %v3758 = vrot.slane %v3757, 4
        %v3760 = vshll.u32 %v3661, 16
        %v3762 = vrot.slane %v3760, 5
        %v3763 = vsel %vm566, %v3758, %v3762
        %v3764 = vshrl.u32 %v3661, 16
        %v3766 = vrot.slane %v3764, 4
        %v3767 = vor.u32 %v3766, %v3762
        %v3768 = vrot.slane %v3767, 4
        %v3770 = vshll.u32 %v3662, 16
        %v3772 = vrot.slane %v3770, 5
        %v3773 = vsel %vm566, %v3768, %v3772
        %v3775 = vshrl.u32 %v3663, 16
        %v3777 = vrot.slane %v3775, 4
        %v3778 = vshll.u32 %v3663, 16
        %v3780 = vrot.slane %v3778, 5
        %v3781 = vor.u32 %v3777, %v3780
        %v3782 = vrot.slane %v3781, 4
        %v3784 = vshll.u32 %v3664, 16
        %v3786 = vrot.slane %v3784, 5
        %v3787 = vsel %vm566, %v3782, %v3786
        %v3788 = vshrl.u32 %v3664, 16
        %v3790 = vrot.slane %v3788, 4
        %v3791 = vor.u32 %v3790, %v3786
        %v3792 = vrot.slane %v3791, 4
        %v3794 = vshll.u32 %v3665, 16
        %v3796 = vrot.slane %v3794, 5
        %v3797 = vsel %vm566, %v3792, %v3796
        %v3799 = vshrl.u32 %v3666, 16
        %v3801 = vrot.slane %v3799, 4
        %v3802 = vshll.u32 %v3666, 16
        %v3804 = vrot.slane %v3802, 5
        %v3805 = vor.u32 %v3801, %v3804
        %v3806 = vrot.slane %v3805, 4
        %v3808 = vshll.u32 %v3667, 16
        %v3810 = vrot.slane %v3808, 5
        %v3811 = vsel %vm566, %v3806, %v3810
        %v3812 = vshrl.u32 %v3667, 16
        %v3814 = vrot.slane %v3812, 4
        %v3815 = vor.u32 %v3814, %v3810
        %v3816 = vrot.slane %v3815, 4
        %v3818 = vshll.u32 %v3668, 16
        %v3820 = vrot.slane %v3818, 5
        %v3821 = vsel %vm566, %v3816, %v3820
        %v3823 = vshrl.u32 %v3669, 16
        %v3825 = vrot.slane %v3823, 4
        %v3826 = vshll.u32 %v3669, 16
        %v3828 = vrot.slane %v3826, 5
        %v3829 = vor.u32 %v3825, %v3828
        %v3830 = vrot.slane %v3829, 4
        %v3832 = vshll.u32 %v3670, 16
        %v3834 = vrot.slane %v3832, 5
        %v3835 = vsel %vm566, %v3830, %v3834
        %v3836 = vshrl.u32 %v3670, 16
        %v3838 = vrot.slane %v3836, 4
        %v3839 = vor.u32 %v3838, %v3834
        %v3840 = vrot.slane %v3839, 4
        %v3842 = vshll.u32 %v3671, 16
        %v3844 = vrot.slane %v3842, 5
        %v3845 = vsel %vm566, %v3840, %v3844
        %v3847 = vshrl.u32 %v3672, 16
        %v3849 = vrot.slane %v3847, 4
        %v3850 = vshll.u32 %v3672, 16
        %v3852 = vrot.slane %v3850, 5
        %v3853 = vor.u32 %v3849, %v3852
        %v3854 = vrot.slane %v3853, 4
        %v3856 = vshll.u32 %v3673, 16
        %v3858 = vrot.slane %v3856, 5
        %v3859 = vsel %vm566, %v3854, %v3858
        %v3860 = vshrl.u32 %v3673, 16
        %v3862 = vrot.slane %v3860, 4
        %v3863 = vor.u32 %v3862, %v3858
        %v3864 = vrot.slane %v3863, 4
        %v3866 = vshll.u32 %v3674, 16
        %v3868 = vrot.slane %v3866, 5
        %v3869 = vsel %vm566, %v3864, %v3868
        %v3871 = vshrl.u32 %v3675, 16
        %v3873 = vrot.slane %v3871, 4
        %v3874 = vshll.u32 %v3675, 16
        %v3876 = vrot.slane %v3874, 5
        %v3877 = vor.u32 %v3873, %v3876
        %v3878 = vrot.slane %v3877, 4
        %v3880 = vshll.u32 %v3676, 16
        %v3882 = vrot.slane %v3880, 5
        %v3883 = vsel %vm566, %v3878, %v3882
        %v3884 = vshrl.u32 %v3676, 16
        %v3886 = vrot.slane %v3884, 4
        %v3887 = vor.u32 %v3886, %v3882
        %v3888 = vrot.slane %v3887, 4
        %v3890 = vshll.u32 %v3677, 16
        %v3892 = vrot.slane %v3890, 5
        %v3893 = vsel %vm566, %v3888, %v3892
        %v3895 = vshrl.u32 %v3678, 16
        %v3897 = vrot.slane %v3895, 4
        %v3898 = vshll.u32 %v3678, 16
        %v3900 = vrot.slane %v3898, 5
        %v3901 = vor.u32 %v3897, %v3900
        %v3902 = vrot.slane %v3901, 4
        %v3904 = vshll.u32 %v3679, 16
        %v3906 = vrot.slane %v3904, 5
        %v3907 = vsel %vm566, %v3902, %v3906
        %v3908 = vshrl.u32 %v3679, 16
        %v3910 = vrot.slane %v3908, 4
        %v3911 = vor.u32 %v3910, %v3906
        %v3912 = vrot.slane %v3911, 4
        %v3914 = vshll.u32 %v3680, 16
        %v3916 = vrot.slane %v3914, 5
        %v3917 = vsel %vm566, %v3912, %v3916
        %v3919 = vshrl.u32 %v3681, 16
        %v3921 = vrot.slane %v3919, 4
        %v3922 = vshll.u32 %v3681, 16
        %v3924 = vrot.slane %v3922, 5
        %v3925 = vor.u32 %v3921, %v3924
        %v3926 = vrot.slane %v3925, 4
        %v3928 = vshll.u32 %v3682, 16
        %v3930 = vrot.slane %v3928, 5
        %v3931 = vsel %vm566, %v3926, %v3930
        %v3932 = vshrl.u32 %v3682, 16
        %v3934 = vrot.slane %v3932, 4
        %v3935 = vor.u32 %v3934, %v3930
        %v3936 = vrot.slane %v3935, 4
        %v3938 = vshll.u32 %v3683, 16
        %v3940 = vrot.slane %v3938, 5
        %v3941 = vsel %vm566, %v3936, %v3940
        %v3943 = vshrl.u32 %v3684, 16
        %v3945 = vrot.slane %v3943, 4
        %v3946 = vshll.u32 %v3684, 16
        %v3948 = vrot.slane %v3946, 5
        %v3949 = vor.u32 %v3945, %v3948
        %v3950 = vrot.slane %v3949, 4
        %v3952 = vshll.u32 %v3685, 16
        %v3954 = vrot.slane %v3952, 5
        %v3955 = vsel %vm566, %v3950, %v3954
        %v3956 = vshrl.u32 %v3685, 16
        %v3958 = vrot.slane %v3956, 4
        %v3959 = vor.u32 %v3958, %v3954
        %v3960 = vrot.slane %v3959, 4
        %v3962 = vshll.u32 %v3686, 16
        %v3964 = vrot.slane %v3962, 5
        %v3965 = vsel %vm566, %v3960, %v3964
        %v3967 = vshrl.u32 %v3687, 16
        %v3969 = vrot.slane %v3967, 4
        %v3970 = vshll.u32 %v3687, 16
        %v3972 = vrot.slane %v3970, 5
        %v3973 = vor.u32 %v3969, %v3972
        %v3974 = vrot.slane %v3973, 4
        %v3976 = vshll.u32 %v3688, 16
        %v3978 = vrot.slane %v3976, 5
        %v3979 = vsel %vm566, %v3974, %v3978
        %v3980 = vshrl.u32 %v3688, 16
        %v3982 = vrot.slane %v3980, 4
        %v3983 = vor.u32 %v3982, %v3978
        %v3984 = vrot.slane %v3983, 4
        %v3986 = vshll.u32 %v3689, 16
        %v3988 = vrot.slane %v3986, 5
        %v3989 = vsel %vm566, %v3984, %v3988
        %v3991 = vshrl.u32 %v3690, 16
        %v3993 = vrot.slane %v3991, 4
        %v3994 = vshll.u32 %v3690, 16
        %v3996 = vrot.slane %v3994, 5
        %v3997 = vor.u32 %v3993, %v3996
        %v3998 = vrot.slane %v3997, 4
        %v4000 = vshll.u32 %v3691, 16
        %v4002 = vrot.slane %v4000, 5
        %v4003 = vsel %vm566, %v3998, %v4002
        %v4004 = vshrl.u32 %v3691, 16
        %v4006 = vrot.slane %v4004, 4
        %v4007 = vor.u32 %v4006, %v4002
        %v4008 = vrot.slane %v4007, 4
        %v4010 = vshll.u32 %v3692, 16
        %v4012 = vrot.slane %v4010, 5
        %v4013 = vsel %vm566, %v4008, %v4012
        %v4015 = vshrl.u32 %v3693, 16
        %v4017 = vrot.slane %v4015, 4
        %v4018 = vshll.u32 %v3693, 16
        %v4020 = vrot.slane %v4018, 5
        %v4021 = vor.u32 %v4017, %v4020
        %v4022 = vrot.slane %v4021, 4
        %v4024 = vshll.u32 %v3694, 16
        %v4026 = vrot.slane %v4024, 5
        %v4027 = vsel %vm566, %v4022, %v4026
        %v4028 = vshrl.u32 %v3694, 16
        %v4030 = vrot.slane %v4028, 4
        %v4031 = vor.u32 %v4030, %v4026
        %v4032 = vrot.slane %v4031, 4
        %v4034 = vshll.u32 %v3695, 16
        %v4036 = vrot.slane %v4034, 5
        %v4037 = vsel %vm566, %v4032, %v4036
        %v4039 = vshrl.u32 %v3696, 16
        %v4041 = vrot.slane %v4039, 4
        %v4042 = vshll.u32 %v3696, 16
        %v4044 = vrot.slane %v4042, 5
        %v4045 = vor.u32 %v4041, %v4044
        %v4046 = vrot.slane %v4045, 4
        %v4048 = vshll.u32 %v3697, 16
        %v4050 = vrot.slane %v4048, 5
        %v4051 = vsel %vm566, %v4046, %v4050
        %v4052 = vshrl.u32 %v3697, 16
        %v4054 = vrot.slane %v4052, 4
        %v4055 = vor.u32 %v4054, %v4050
        %v4056 = vrot.slane %v4055, 4
        %v4058 = vshll.u32 %v3698, 16
        %v4060 = vrot.slane %v4058, 5
        %v4061 = vsel %vm566, %v4056, %v4060
        %v4063 = vshrl.u32 %v3699, 16
        %v4065 = vrot.slane %v4063, 4
        %v4066 = vshll.u32 %v3699, 16
        %v4068 = vrot.slane %v4066, 5
        %v4069 = vor.u32 %v4065, %v4068
        %v4070 = vrot.slane %v4069, 4
        %v4072 = vshll.u32 %v3700, 16
        %v4074 = vrot.slane %v4072, 5
        %v4075 = vsel %vm566, %v4070, %v4074
        %v4076 = vshrl.u32 %v3700, 16
        %v4078 = vrot.slane %v4076, 4
        %v4079 = vor.u32 %v4078, %v4074
        %v4080 = vrot.slane %v4079, 4
        %v4082 = vshll.u32 %v3701, 16
        %v4084 = vrot.slane %v4082, 5
        %v4085 = vsel %vm566, %v4080, %v4084
        %s4086 = scalar_lea.vmem %s219, 14
        %v4087 = vld [vmem:[%s4086] sm:$0x3]
        %v4088 = vunpack.c.l.b16 %v3715
        %v4089 = vunpack.c.l.b16 %v3725
        %v4090 = vunpack.c.l.b16 %v3739
        %v4091 = vunpack.c.l.b16 %v3749
        %v4092 = vunpack.c.l.b16 %v3763
        %v4093 = vunpack.c.l.b16 %v3773
        %v4094 = vunpack.c.l.b16 %v3787
        %v4095 = vunpack.c.l.b16 %v3797
        %v4096 = vunpack.c.l.b16 %v3811
        %v4097 = vunpack.c.l.b16 %v3821
        %v4098 = vunpack.c.l.b16 %v3835
        %v4099 = vunpack.c.l.b16 %v3845
        %v4100 = vunpack.c.l.b16 %v3859
        %v4101 = vunpack.c.l.b16 %v3869
        %v4102 = vunpack.c.l.b16 %v3883
        %v4103 = vunpack.c.l.b16 %v3893
        %v4104 = vunpack.c.l.b16 %v3907
        %v4105 = vunpack.c.l.b16 %v3917
        %v4106 = vunpack.c.l.b16 %v3931
        %v4107 = vunpack.c.l.b16 %v3941
        %v4108 = vunpack.c.l.b16 %v3955
        %v4109 = vunpack.c.l.b16 %v3965
        %v4110 = vunpack.c.l.b16 %v3979
        %v4111 = vunpack.c.l.b16 %v3989
        %v4112 = vunpack.c.l.b16 %v4003
        %v4113 = vunpack.c.l.b16 %v4013
        %v4114 = vunpack.c.l.b16 %v4027
        %v4115 = vunpack.c.l.b16 %v4037
        %v4116 = vunpack.c.l.b16 %v4051
        %v4117 = vunpack.c.l.b16 %v4061
        %v4118 = vunpack.c.l.b16 %v4075
        %v4119 = vunpack.c.l.b16 %v4085
        %v4120 = vpack.c.b16 %v4089, %v4088
        %v4121 = vpack.c.b16 %v4091, %v4090
        %v4122 = vpack.c.b16 %v4093, %v4092
        %v4123 = vpack.c.b16 %v4095, %v4094
        %v4124 = vpack.c.b16 %v4097, %v4096
        %v4125 = vpack.c.b16 %v4099, %v4098
        %v4126 = vpack.c.b16 %v4101, %v4100
        %v4127 = vpack.c.b16 %v4103, %v4102
        %v4128 = vpack.c.b16 %v4105, %v4104
        %v4129 = vpack.c.b16 %v4107, %v4106
        %v4130 = vpack.c.b16 %v4109, %v4108
        %v4131 = vpack.c.b16 %v4111, %v4110
        %v4132 = vpack.c.b16 %v4113, %v4112
        %v4133 = vpack.c.b16 %v4115, %v4114
        %v4134 = vpack.c.b16 %v4117, %v4116
        %v4135 = vpack.c.b16 %v4119, %v4118
        %v4137 = vsel %vm342, %v4120, 0
        %v4140 = vsel %vm342, %v4121, 0
        %v4143 = vsel %vm342, %v4122, 0
        %v4146 = vsel %vm342, %v4123, 0
        %v4149 = vsel %vm342, %v4124, 0
        %v4152 = vsel %vm342, %v4125, 0
        %v4155 = vsel %vm342, %v4126, 0
        %v4158 = vsel %vm342, %v4127, 0
        %v4161 = vsel %vm342, %v4128, 0
        %v4164 = vsel %vm342, %v4129, 0
        %v4167 = vsel %vm342, %v4130, 0
        %v4170 = vsel %vm342, %v4131, 0
        %v4173 = vsel %vm342, %v4132, 0
        %v4176 = vsel %vm342, %v4133, 0
        %v4179 = vsel %vm342, %v4134, 0
        %v4182 = vsel %vm342, %v4135, 0
        %v4185 = vsel %vm391, %v4087, 0
        %4187 = vmatpush.bf16.msra.mxu0 0
        %4188 = vmatpush.bf16.msra.mxu0 0
        %4189 = vmatpush.bf16.msra.mxu0 0
        %4190 = vmatpush.bf16.msra.mxu0 0
        %4191 = vmatpush.bf16.msra.mxu0 0
        %4192 = vmatpush.bf16.msra.mxu0 0
        %4193 = vmatpush.bf16.msra.mxu0 0
        %4194 = vmatpush.bf16.msra.mxu0 %v4185
        %4195 = vmatmul.bf16.gmra.mxu0 %v4137
        %v4196 = vpop.f32.mrf.mxu0
        %v4197 = vadd.f32 0.0, %v4196
        %v4198 = vpop.f32.mrf.mxu0
        %v4199 = vadd.f32 0.0, %v4198
        %4200 = vmatmul.bf16.gmra.mxu0 %v4140
        %v4201 = vpop.f32.mrf.mxu0
        %v4202 = vadd.f32 0.0, %v4201
        %v4203 = vpop.f32.mrf.mxu0
        %v4204 = vadd.f32 0.0, %v4203
        %4205 = vmatmul.bf16.gmra.mxu0 %v4143
        %v4206 = vpop.f32.mrf.mxu0
        %v4207 = vadd.f32 0.0, %v4206
        %v4208 = vpop.f32.mrf.mxu0
        %v4209 = vadd.f32 0.0, %v4208
        %4210 = vmatmul.bf16.gmra.mxu0 %v4146
        %v4211 = vpop.f32.mrf.mxu0
        %v4212 = vadd.f32 0.0, %v4211
        %v4213 = vpop.f32.mrf.mxu0
        %v4214 = vadd.f32 0.0, %v4213
        %4215 = vmatmul.bf16.gmra.mxu0 %v4149
        %v4216 = vpop.f32.mrf.mxu0
        %v4217 = vadd.f32 0.0, %v4216
        %v4218 = vpop.f32.mrf.mxu0
        %v4219 = vadd.f32 0.0, %v4218
        %4220 = vmatmul.bf16.gmra.mxu0 %v4152
        %v4221 = vpop.f32.mrf.mxu0
        %v4222 = vadd.f32 0.0, %v4221
        %v4223 = vpop.f32.mrf.mxu0
        %v4224 = vadd.f32 0.0, %v4223
        %4225 = vmatmul.bf16.gmra.mxu0 %v4155
        %v4226 = vpop.f32.mrf.mxu0
        %v4227 = vadd.f32 0.0, %v4226
        %v4228 = vpop.f32.mrf.mxu0
        %v4229 = vadd.f32 0.0, %v4228
        %4230 = vmatmul.bf16.gmra.mxu0 %v4158
        %v4231 = vpop.f32.mrf.mxu0
        %v4232 = vadd.f32 0.0, %v4231
        %v4233 = vpop.f32.mrf.mxu0
        %v4234 = vadd.f32 0.0, %v4233
        %4235 = vmatmul.bf16.gmra.mxu0 %v4161
        %v4236 = vpop.f32.mrf.mxu0
        %v4237 = vadd.f32 0.0, %v4236
        %v4238 = vpop.f32.mrf.mxu0
        %v4239 = vadd.f32 0.0, %v4238
        %4240 = vmatmul.bf16.gmra.mxu0 %v4164
        %v4241 = vpop.f32.mrf.mxu0
        %v4242 = vadd.f32 0.0, %v4241
        %v4243 = vpop.f32.mrf.mxu0
        %v4244 = vadd.f32 0.0, %v4243
        %4245 = vmatmul.bf16.gmra.mxu0 %v4167
        %v4246 = vpop.f32.mrf.mxu0
        %v4247 = vadd.f32 0.0, %v4246
        %v4248 = vpop.f32.mrf.mxu0
        %v4249 = vadd.f32 0.0, %v4248
        %4250 = vmatmul.bf16.gmra.mxu0 %v4170
        %v4251 = vpop.f32.mrf.mxu0
        %v4252 = vadd.f32 0.0, %v4251
        %v4253 = vpop.f32.mrf.mxu0
        %v4254 = vadd.f32 0.0, %v4253
        %4255 = vmatmul.bf16.gmra.mxu0 %v4173
        %v4256 = vpop.f32.mrf.mxu0
        %v4257 = vadd.f32 0.0, %v4256
        %v4258 = vpop.f32.mrf.mxu0
        %v4259 = vadd.f32 0.0, %v4258
        %4260 = vmatmul.bf16.gmra.mxu0 %v4176
        %v4261 = vpop.f32.mrf.mxu0
        %v4262 = vadd.f32 0.0, %v4261
        %v4263 = vpop.f32.mrf.mxu0
        %v4264 = vadd.f32 0.0, %v4263
        %4265 = vmatmul.bf16.gmra.mxu0 %v4179
        %v4266 = vpop.f32.mrf.mxu0
        %v4267 = vadd.f32 0.0, %v4266
        %v4268 = vpop.f32.mrf.mxu0
        %v4269 = vadd.f32 0.0, %v4268
        %4270 = vmatmul.bf16.gmra.mxu0 %v4182
        %v4271 = vpop.f32.mrf.mxu0
        %v4272 = vadd.f32 0.0, %v4271
        %v4273 = vpop.f32.mrf.mxu0
        %v4274 = vadd.f32 0.0, %v4273
        %4275 = vdwg.mxu0
        %v4276 = vld [vmem:[#allocation2] sm:$0xff]
        %v4277 = vld [vmem:[#allocation2 + $0x8] sm:$0xff]
        %v4278 = vld [vmem:[#allocation2 + $0x10] sm:$0xff]
        %v4279 = vld [vmem:[#allocation2 + $0x18] sm:$0xff]
        %v4280 = vld [vmem:[#allocation2 + $0x20] sm:$0xff]
        %v4281 = vld [vmem:[#allocation2 + $0x28] sm:$0xff]
        %v4282 = vld [vmem:[#allocation2 + $0x30] sm:$0xff]
        %v4283 = vld [vmem:[#allocation2 + $0x38] sm:$0xff]
        %v4284 = vld [vmem:[#allocation2 + $0x40] sm:$0xff]
        %v4285 = vld [vmem:[#allocation2 + $0x48] sm:$0xff]
        %v4286 = vld [vmem:[#allocation2 + $0x50] sm:$0xff]
        %v4287 = vld [vmem:[#allocation2 + $0x58] sm:$0xff]
        %v4288 = vld [vmem:[#allocation2 + $0x60] sm:$0xff]
        %v4289 = vld [vmem:[#allocation2 + $0x68] sm:$0xff]
        %v4290 = vld [vmem:[#allocation2 + $0x70] sm:$0xff]
        %v4291 = vld [vmem:[#allocation2 + $0x78] sm:$0xff]
        %v4292 = vld [vmem:[#allocation2 + $0x80] sm:$0xff]
        %v4293 = vld [vmem:[#allocation2 + $0x88] sm:$0xff]
        %v4294 = vld [vmem:[#allocation2 + $0x90] sm:$0xff]
        %v4295 = vld [vmem:[#allocation2 + $0x98] sm:$0xff]
        %v4296 = vld [vmem:[#allocation2 + $0xa0] sm:$0xff]
        %v4297 = vld [vmem:[#allocation2 + $0xa8] sm:$0xff]
        %v4298 = vld [vmem:[#allocation2 + $0xb0] sm:$0xff]
        %v4299 = vld [vmem:[#allocation2 + $0xb8] sm:$0xff]
        %v4300 = vld [vmem:[#allocation2 + $0xc0] sm:$0xff]
        %v4301 = vld [vmem:[#allocation2 + $0xc8] sm:$0xff]
        %v4302 = vld [vmem:[#allocation2 + $0xd0] sm:$0xff]
        %v4303 = vld [vmem:[#allocation2 + $0xd8] sm:$0xff]
        %v4304 = vld [vmem:[#allocation2 + $0xe0] sm:$0xff]
        %v4305 = vld [vmem:[#allocation2 + $0xe8] sm:$0xff]
        %v4306 = vld [vmem:[#allocation2 + $0xf0] sm:$0xff]
        %v4307 = vld [vmem:[#allocation2 + $0xf8] sm:$0xff]
        %v4308 = vadd.f32 %v4276, %v4197
        %v4309 = vadd.f32 %v4277, %v4199
        %v4310 = vadd.f32 %v4278, %v4202
        %v4311 = vadd.f32 %v4279, %v4204
        %v4312 = vadd.f32 %v4280, %v4207
        %v4313 = vadd.f32 %v4281, %v4209
        %v4314 = vadd.f32 %v4282, %v4212
        %v4315 = vadd.f32 %v4283, %v4214
        %v4316 = vadd.f32 %v4284, %v4217
        %v4317 = vadd.f32 %v4285, %v4219
        %v4318 = vadd.f32 %v4286, %v4222
        %v4319 = vadd.f32 %v4287, %v4224
        %v4320 = vadd.f32 %v4288, %v4227
        %v4321 = vadd.f32 %v4289, %v4229
        %v4322 = vadd.f32 %v4290, %v4232
        %v4323 = vadd.f32 %v4291, %v4234
        %v4324 = vadd.f32 %v4292, %v4237
        %v4325 = vadd.f32 %v4293, %v4239
        %v4326 = vadd.f32 %v4294, %v4242
        %v4327 = vadd.f32 %v4295, %v4244
        %v4328 = vadd.f32 %v4296, %v4247
        %v4329 = vadd.f32 %v4297, %v4249
        %v4330 = vadd.f32 %v4298, %v4252
        %v4331 = vadd.f32 %v4299, %v4254
        %v4332 = vadd.f32 %v4300, %v4257
        %v4333 = vadd.f32 %v4301, %v4259
        %v4334 = vadd.f32 %v4302, %v4262
        %v4335 = vadd.f32 %v4303, %v4264
        %v4336 = vadd.f32 %v4304, %v4267
        %v4337 = vadd.f32 %v4305, %v4269
        %v4338 = vadd.f32 %v4306, %v4272
        %v4339 = vadd.f32 %v4307, %v4274
        %4340 = vst [vmem:[#allocation2] sm:$0xff] %v4308
        %4341 = vst [vmem:[#allocation2 + $0x8] sm:$0xff] %v4309
        %4342 = vst [vmem:[#allocation2 + $0x10] sm:$0xff] %v4310
        %4343 = vst [vmem:[#allocation2 + $0x18] sm:$0xff] %v4311
        %4344 = vst [vmem:[#allocation2 + $0x20] sm:$0xff] %v4312
        %4345 = vst [vmem:[#allocation2 + $0x28] sm:$0xff] %v4313
        %4346 = vst [vmem:[#allocation2 + $0x30] sm:$0xff] %v4314
        %4347 = vst [vmem:[#allocation2 + $0x38] sm:$0xff] %v4315
        %4348 = vst [vmem:[#allocation2 + $0x40] sm:$0xff] %v4316
        %4349 = vst [vmem:[#allocation2 + $0x48] sm:$0xff] %v4317
        %4350 = vst [vmem:[#allocation2 + $0x50] sm:$0xff] %v4318
        %4351 = vst [vmem:[#allocation2 + $0x58] sm:$0xff] %v4319
        %4352 = vst [vmem:[#allocation2 + $0x60] sm:$0xff] %v4320
        %4353 = vst [vmem:[#allocation2 + $0x68] sm:$0xff] %v4321
        %4354 = vst [vmem:[#allocation2 + $0x70] sm:$0xff] %v4322
        %4355 = vst [vmem:[#allocation2 + $0x78] sm:$0xff] %v4323
        %4356 = vst [vmem:[#allocation2 + $0x80] sm:$0xff] %v4324
        %4357 = vst [vmem:[#allocation2 + $0x88] sm:$0xff] %v4325
        %4358 = vst [vmem:[#allocation2 + $0x90] sm:$0xff] %v4326
        %4359 = vst [vmem:[#allocation2 + $0x98] sm:$0xff] %v4327
        %4360 = vst [vmem:[#allocation2 + $0xa0] sm:$0xff] %v4328
        %4361 = vst [vmem:[#allocation2 + $0xa8] sm:$0xff] %v4329
        %4362 = vst [vmem:[#allocation2 + $0xb0] sm:$0xff] %v4330
        %4363 = vst [vmem:[#allocation2 + $0xb8] sm:$0xff] %v4331
        %4364 = vst [vmem:[#allocation2 + $0xc0] sm:$0xff] %v4332
        %4365 = vst [vmem:[#allocation2 + $0xc8] sm:$0xff] %v4333
        %4366 = vst [vmem:[#allocation2 + $0xd0] sm:$0xff] %v4334
        %4367 = vst [vmem:[#allocation2 + $0xd8] sm:$0xff] %v4335
        %4368 = vst [vmem:[#allocation2 + $0xe0] sm:$0xff] %v4336
        %4369 = vst [vmem:[#allocation2 + $0xe8] sm:$0xff] %v4337
        %4370 = vst [vmem:[#allocation2 + $0xf0] sm:$0xff] %v4338
        %4371 = vst [vmem:[#allocation2 + $0xf8] sm:$0xff] %v4339
        %v4372 = vld [vmem:[%s3303] sm:$0xe]
        %v4373 = vld [vmem:[%s3303 + $0x4] sm:$0xf]
        %v4374 = vld [vmem:[%s3303 + $0x8] sm:$0x1]
        %v4375 = vld [vmem:[%s3303 + $0xc] sm:$0xe]
        %v4376 = vld [vmem:[%s3303 + $0x10] sm:$0xf]
        %v4377 = vld [vmem:[%s3303 + $0x14] sm:$0x1]
        %v4378 = vld [vmem:[%s3303 + $0x18] sm:$0xe]
        %v4379 = vld [vmem:[%s3303 + $0x1c] sm:$0xf]
        %v4380 = vld [vmem:[%s3303 + $0x20] sm:$0x1]
        %v4381 = vld [vmem:[%s3303 + $0x24] sm:$0xe]
        %v4382 = vld [vmem:[%s3303 + $0x28] sm:$0xf]
        %v4383 = vld [vmem:[%s3303 + $0x2c] sm:$0x1]
        %v4384 = vld [vmem:[%s3303 + $0x30] sm:$0xe]
        %v4385 = vld [vmem:[%s3303 + $0x34] sm:$0xf]
        %v4386 = vld [vmem:[%s3303 + $0x38] sm:$0x1]
        %v4387 = vld [vmem:[%s3303 + $0x3c] sm:$0xe]
        %v4388 = vld [vmem:[%s3303 + $0x40] sm:$0xf]
        %v4389 = vld [vmem:[%s3303 + $0x44] sm:$0x1]
        %v4390 = vld [vmem:[%s3303 + $0x48] sm:$0xe]
        %v4391 = vld [vmem:[%s3303 + $0x4c] sm:$0xf]
        %v4392 = vld [vmem:[%s3303 + $0x50] sm:$0x1]
        %v4393 = vld [vmem:[%s3303 + $0x54] sm:$0xe]
        %v4394 = vld [vmem:[%s3303 + $0x58] sm:$0xf]
        %v4395 = vld [vmem:[%s3303 + $0x5c] sm:$0x1]
        %v4396 = vld [vmem:[%s3303 + $0x60] sm:$0xe]
        %v4397 = vld [vmem:[%s3303 + $0x64] sm:$0xf]
        %v4398 = vld [vmem:[%s3303 + $0x68] sm:$0x1]
        %v4399 = vld [vmem:[%s3303 + $0x6c] sm:$0xe]
        %v4400 = vld [vmem:[%s3303 + $0x70] sm:$0xf]
        %v4401 = vld [vmem:[%s3303 + $0x74] sm:$0x1]
        %v4402 = vld [vmem:[%s3303 + $0x78] sm:$0xe]
        %v4403 = vld [vmem:[%s3303 + $0x7c] sm:$0xf]
        %v4404 = vld [vmem:[%s3303 + $0x80] sm:$0x1]
        %v4405 = vld [vmem:[%s3303 + $0x84] sm:$0xe]
        %v4406 = vld [vmem:[%s3303 + $0x88] sm:$0xf]
        %v4407 = vld [vmem:[%s3303 + $0x8c] sm:$0x1]
        %v4408 = vld [vmem:[%s3303 + $0x90] sm:$0xe]
        %v4409 = vld [vmem:[%s3303 + $0x94] sm:$0xf]
        %v4410 = vld [vmem:[%s3303 + $0x98] sm:$0x1]
        %v4411 = vld [vmem:[%s3303 + $0x9c] sm:$0xe]
        %v4412 = vld [vmem:[%s3303 + $0xa0] sm:$0xf]
        %v4413 = vld [vmem:[%s3303 + $0xa4] sm:$0x1]
        %v4414 = vld [vmem:[%s3303 + $0xa8] sm:$0xe]
        %v4415 = vld [vmem:[%s3303 + $0xac] sm:$0xf]
        %v4416 = vld [vmem:[%s3303 + $0xb0] sm:$0x1]
        %v4417 = vld [vmem:[%s3303 + $0xb4] sm:$0xe]
        %v4418 = vld [vmem:[%s3303 + $0xb8] sm:$0xf]
        %v4419 = vld [vmem:[%s3303 + $0xbc] sm:$0x1]
        %v4468 = vrot.slane %v4372, 5
        %v4469 = vrot.slane %v4468, 4
        %v4470 = vrot.slane %v4373, 5
        %v4471 = vsel %vm1335, %v4469, %v4470
        %v4472 = vrot.slane %v4470, 4
        %v4473 = vrot.slane %v4374, 5
        %v4474 = vsel %vm1335, %v4472, %v4473
        %v4475 = vrot.slane %v4375, 5
        %v4476 = vrot.slane %v4475, 4
        %v4477 = vrot.slane %v4376, 5
        %v4478 = vsel %vm1335, %v4476, %v4477
        %v4479 = vrot.slane %v4477, 4
        %v4480 = vrot.slane %v4377, 5
        %v4481 = vsel %vm1335, %v4479, %v4480
        %v4482 = vrot.slane %v4378, 5
        %v4483 = vrot.slane %v4482, 4
        %v4484 = vrot.slane %v4379, 5
        %v4485 = vsel %vm1335, %v4483, %v4484
        %v4486 = vrot.slane %v4484, 4
        %v4487 = vrot.slane %v4380, 5
        %v4488 = vsel %vm1335, %v4486, %v4487
        %v4489 = vrot.slane %v4381, 5
        %v4490 = vrot.slane %v4489, 4
        %v4491 = vrot.slane %v4382, 5
        %v4492 = vsel %vm1335, %v4490, %v4491
        %v4493 = vrot.slane %v4491, 4
        %v4494 = vrot.slane %v4383, 5
        %v4495 = vsel %vm1335, %v4493, %v4494
        %v4496 = vrot.slane %v4384, 5
        %v4497 = vrot.slane %v4496, 4
        %v4498 = vrot.slane %v4385, 5
        %v4499 = vsel %vm1335, %v4497, %v4498
        %v4500 = vrot.slane %v4498, 4
        %v4501 = vrot.slane %v4386, 5
        %v4502 = vsel %vm1335, %v4500, %v4501
        %v4503 = vrot.slane %v4387, 5
        %v4504 = vrot.slane %v4503, 4
        %v4505 = vrot.slane %v4388, 5
        %v4506 = vsel %vm1335, %v4504, %v4505
        %v4507 = vrot.slane %v4505, 4
        %v4508 = vrot.slane %v4389, 5
        %v4509 = vsel %vm1335, %v4507, %v4508
        %v4510 = vrot.slane %v4390, 5
        %v4511 = vrot.slane %v4510, 4
        %v4512 = vrot.slane %v4391, 5
        %v4513 = vsel %vm1335, %v4511, %v4512
        %v4514 = vrot.slane %v4512, 4
        %v4515 = vrot.slane %v4392, 5
        %v4516 = vsel %vm1335, %v4514, %v4515
        %v4517 = vrot.slane %v4393, 5
        %v4518 = vrot.slane %v4517, 4
        %v4519 = vrot.slane %v4394, 5
        %v4520 = vsel %vm1335, %v4518, %v4519
        %v4521 = vrot.slane %v4519, 4
        %v4522 = vrot.slane %v4395, 5
        %v4523 = vsel %vm1335, %v4521, %v4522
        %v4524 = vrot.slane %v4396, 5
        %v4525 = vrot.slane %v4524, 4
        %v4526 = vrot.slane %v4397, 5
        %v4527 = vsel %vm1335, %v4525, %v4526
        %v4528 = vrot.slane %v4526, 4
        %v4529 = vrot.slane %v4398, 5
        %v4530 = vsel %vm1335, %v4528, %v4529
        %v4531 = vrot.slane %v4399, 5
        %v4532 = vrot.slane %v4531, 4
        %v4533 = vrot.slane %v4400, 5
        %v4534 = vsel %vm1335, %v4532, %v4533
        %v4535 = vrot.slane %v4533, 4
        %v4536 = vrot.slane %v4401, 5
        %v4537 = vsel %vm1335, %v4535, %v4536
        %v4538 = vrot.slane %v4402, 5
        %v4539 = vrot.slane %v4538, 4
        %v4540 = vrot.slane %v4403, 5
        %v4541 = vsel %vm1335, %v4539, %v4540
        %v4542 = vrot.slane %v4540, 4
        %v4543 = vrot.slane %v4404, 5
        %v4544 = vsel %vm1335, %v4542, %v4543
        %v4545 = vrot.slane %v4405, 5
        %v4546 = vrot.slane %v4545, 4
        %v4547 = vrot.slane %v4406, 5
        %v4548 = vsel %vm1335, %v4546, %v4547
        %v4549 = vrot.slane %v4547, 4
        %v4550 = vrot.slane %v4407, 5
        %v4551 = vsel %vm1335, %v4549, %v4550
        %v4552 = vrot.slane %v4408, 5
        %v4553 = vrot.slane %v4552, 4
        %v4554 = vrot.slane %v4409, 5
        %v4555 = vsel %vm1335, %v4553, %v4554
        %v4556 = vrot.slane %v4554, 4
        %v4557 = vrot.slane %v4410, 5
        %v4558 = vsel %vm1335, %v4556, %v4557
        %v4559 = vrot.slane %v4411, 5
        %v4560 = vrot.slane %v4559, 4
        %v4561 = vrot.slane %v4412, 5
        %v4562 = vsel %vm1335, %v4560, %v4561
        %v4563 = vrot.slane %v4561, 4
        %v4564 = vrot.slane %v4413, 5
        %v4565 = vsel %vm1335, %v4563, %v4564
        %v4566 = vrot.slane %v4414, 5
        %v4567 = vrot.slane %v4566, 4
        %v4568 = vrot.slane %v4415, 5
        %v4569 = vsel %vm1335, %v4567, %v4568
        %v4570 = vrot.slane %v4568, 4
        %v4571 = vrot.slane %v4416, 5
        %v4572 = vsel %vm1335, %v4570, %v4571
        %v4573 = vrot.slane %v4417, 5
        %v4574 = vrot.slane %v4573, 4
        %v4575 = vrot.slane %v4418, 5
        %v4576 = vsel %vm1335, %v4574, %v4575
        %v4577 = vrot.slane %v4575, 4
        %v4578 = vrot.slane %v4419, 5
        %v4579 = vsel %vm1335, %v4577, %v4578
        %s4580 = scalar_lea.vmem %s219, 16
        %v4581 = vld [vmem:[%s4580] sm:$0x3]
        %v4582 = vunpack.c.l.b16 %v4471
        %v4583 = vunpack.c.l.b16 %v4474
        %v4584 = vunpack.c.l.b16 %v4478
        %v4585 = vunpack.c.l.b16 %v4481
        %v4586 = vunpack.c.l.b16 %v4485
        %v4587 = vunpack.c.l.b16 %v4488
        %v4588 = vunpack.c.l.b16 %v4492
        %v4589 = vunpack.c.l.b16 %v4495
        %v4590 = vunpack.c.l.b16 %v4499
        %v4591 = vunpack.c.l.b16 %v4502
        %v4592 = vunpack.c.l.b16 %v4506
        %v4593 = vunpack.c.l.b16 %v4509
        %v4594 = vunpack.c.l.b16 %v4513
        %v4595 = vunpack.c.l.b16 %v4516
        %v4596 = vunpack.c.l.b16 %v4520
        %v4597 = vunpack.c.l.b16 %v4523
        %v4598 = vunpack.c.l.b16 %v4527
        %v4599 = vunpack.c.l.b16 %v4530
        %v4600 = vunpack.c.l.b16 %v4534
        %v4601 = vunpack.c.l.b16 %v4537
        %v4602 = vunpack.c.l.b16 %v4541
        %v4603 = vunpack.c.l.b16 %v4544
        %v4604 = vunpack.c.l.b16 %v4548
        %v4605 = vunpack.c.l.b16 %v4551
        %v4606 = vunpack.c.l.b16 %v4555
        %v4607 = vunpack.c.l.b16 %v4558
        %v4608 = vunpack.c.l.b16 %v4562
        %v4609 = vunpack.c.l.b16 %v4565
        %v4610 = vunpack.c.l.b16 %v4569
        %v4611 = vunpack.c.l.b16 %v4572
        %v4612 = vunpack.c.l.b16 %v4576
        %v4613 = vunpack.c.l.b16 %v4579
        %v4614 = vpack.c.b16 %v4583, %v4582
        %v4615 = vpack.c.b16 %v4585, %v4584
        %v4616 = vpack.c.b16 %v4587, %v4586
        %v4617 = vpack.c.b16 %v4589, %v4588
        %v4618 = vpack.c.b16 %v4591, %v4590
        %v4619 = vpack.c.b16 %v4593, %v4592
        %v4620 = vpack.c.b16 %v4595, %v4594
        %v4621 = vpack.c.b16 %v4597, %v4596
        %v4622 = vpack.c.b16 %v4599, %v4598
        %v4623 = vpack.c.b16 %v4601, %v4600
        %v4624 = vpack.c.b16 %v4603, %v4602
        %v4625 = vpack.c.b16 %v4605, %v4604
        %v4626 = vpack.c.b16 %v4607, %v4606
        %v4627 = vpack.c.b16 %v4609, %v4608
        %v4628 = vpack.c.b16 %v4611, %v4610
        %v4629 = vpack.c.b16 %v4613, %v4612
        %v4631 = vsel %vm342, %v4614, 0
        %v4634 = vsel %vm342, %v4615, 0
        %v4637 = vsel %vm342, %v4616, 0
        %v4640 = vsel %vm342, %v4617, 0
        %v4643 = vsel %vm342, %v4618, 0
        %v4646 = vsel %vm342, %v4619, 0
        %v4649 = vsel %vm342, %v4620, 0
        %v4652 = vsel %vm342, %v4621, 0
        %v4655 = vsel %vm342, %v4622, 0
        %v4658 = vsel %vm342, %v4623, 0
        %v4661 = vsel %vm342, %v4624, 0
        %v4664 = vsel %vm342, %v4625, 0
        %v4667 = vsel %vm342, %v4626, 0
        %v4670 = vsel %vm342, %v4627, 0
        %v4673 = vsel %vm342, %v4628, 0
        %v4676 = vsel %vm342, %v4629, 0
        %v4679 = vsel %vm391, %v4581, 0
        %4681 = vmatpush.bf16.msra.mxu0 0
        %4682 = vmatpush.bf16.msra.mxu0 0
        %4683 = vmatpush.bf16.msra.mxu0 0
        %4684 = vmatpush.bf16.msra.mxu0 0
        %4685 = vmatpush.bf16.msra.mxu0 0
        %4686 = vmatpush.bf16.msra.mxu0 0
        %4687 = vmatpush.bf16.msra.mxu0 0
        %4688 = vmatpush.bf16.msra.mxu0 %v4679
        %4689 = vmatmul.bf16.gmra.mxu0 %v4631
        %v4690 = vpop.f32.mrf.mxu0
        %v4691 = vadd.f32 0.0, %v4690
        %v4692 = vpop.f32.mrf.mxu0
        %v4693 = vadd.f32 0.0, %v4692
        %4694 = vmatmul.bf16.gmra.mxu0 %v4634
        %v4695 = vpop.f32.mrf.mxu0
        %v4696 = vadd.f32 0.0, %v4695
        %v4697 = vpop.f32.mrf.mxu0
        %v4698 = vadd.f32 0.0, %v4697
        %4699 = vmatmul.bf16.gmra.mxu0 %v4637
        %v4700 = vpop.f32.mrf.mxu0
        %v4701 = vadd.f32 0.0, %v4700
        %v4702 = vpop.f32.mrf.mxu0
        %v4703 = vadd.f32 0.0, %v4702
        %4704 = vmatmul.bf16.gmra.mxu0 %v4640
        %v4705 = vpop.f32.mrf.mxu0
        %v4706 = vadd.f32 0.0, %v4705
        %v4707 = vpop.f32.mrf.mxu0
        %v4708 = vadd.f32 0.0, %v4707
        %4709 = vmatmul.bf16.gmra.mxu0 %v4643
        %v4710 = vpop.f32.mrf.mxu0
        %v4711 = vadd.f32 0.0, %v4710
        %v4712 = vpop.f32.mrf.mxu0
        %v4713 = vadd.f32 0.0, %v4712
        %4714 = vmatmul.bf16.gmra.mxu0 %v4646
        %v4715 = vpop.f32.mrf.mxu0
        %v4716 = vadd.f32 0.0, %v4715
        %v4717 = vpop.f32.mrf.mxu0
        %v4718 = vadd.f32 0.0, %v4717
        %4719 = vmatmul.bf16.gmra.mxu0 %v4649
        %v4720 = vpop.f32.mrf.mxu0
        %v4721 = vadd.f32 0.0, %v4720
        %v4722 = vpop.f32.mrf.mxu0
        %v4723 = vadd.f32 0.0, %v4722
        %4724 = vmatmul.bf16.gmra.mxu0 %v4652
        %v4725 = vpop.f32.mrf.mxu0
        %v4726 = vadd.f32 0.0, %v4725
        %v4727 = vpop.f32.mrf.mxu0
        %v4728 = vadd.f32 0.0, %v4727
        %4729 = vmatmul.bf16.gmra.mxu0 %v4655
        %v4730 = vpop.f32.mrf.mxu0
        %v4731 = vadd.f32 0.0, %v4730
        %v4732 = vpop.f32.mrf.mxu0
        %v4733 = vadd.f32 0.0, %v4732
        %4734 = vmatmul.bf16.gmra.mxu0 %v4658
        %v4735 = vpop.f32.mrf.mxu0
        %v4736 = vadd.f32 0.0, %v4735
        %v4737 = vpop.f32.mrf.mxu0
        %v4738 = vadd.f32 0.0, %v4737
        %4739 = vmatmul.bf16.gmra.mxu0 %v4661
        %v4740 = vpop.f32.mrf.mxu0
        %v4741 = vadd.f32 0.0, %v4740
        %v4742 = vpop.f32.mrf.mxu0
        %v4743 = vadd.f32 0.0, %v4742
        %4744 = vmatmul.bf16.gmra.mxu0 %v4664
        %v4745 = vpop.f32.mrf.mxu0
        %v4746 = vadd.f32 0.0, %v4745
        %v4747 = vpop.f32.mrf.mxu0
        %v4748 = vadd.f32 0.0, %v4747
        %4749 = vmatmul.bf16.gmra.mxu0 %v4667
        %v4750 = vpop.f32.mrf.mxu0
        %v4751 = vadd.f32 0.0, %v4750
        %v4752 = vpop.f32.mrf.mxu0
        %v4753 = vadd.f32 0.0, %v4752
        %4754 = vmatmul.bf16.gmra.mxu0 %v4670
        %v4755 = vpop.f32.mrf.mxu0
        %v4756 = vadd.f32 0.0, %v4755
        %v4757 = vpop.f32.mrf.mxu0
        %v4758 = vadd.f32 0.0, %v4757
        %4759 = vmatmul.bf16.gmra.mxu0 %v4673
        %v4760 = vpop.f32.mrf.mxu0
        %v4761 = vadd.f32 0.0, %v4760
        %v4762 = vpop.f32.mrf.mxu0
        %v4763 = vadd.f32 0.0, %v4762
        %4764 = vmatmul.bf16.gmra.mxu0 %v4676
        %v4765 = vpop.f32.mrf.mxu0
        %v4766 = vadd.f32 0.0, %v4765
        %v4767 = vpop.f32.mrf.mxu0
        %v4768 = vadd.f32 0.0, %v4767
        %4769 = vdwg.mxu0
        %v4770 = vld [vmem:[#allocation2] sm:$0xff]
        %v4771 = vld [vmem:[#allocation2 + $0x8] sm:$0xff]
        %v4772 = vld [vmem:[#allocation2 + $0x10] sm:$0xff]
        %v4773 = vld [vmem:[#allocation2 + $0x18] sm:$0xff]
        %v4774 = vld [vmem:[#allocation2 + $0x20] sm:$0xff]
        %v4775 = vld [vmem:[#allocation2 + $0x28] sm:$0xff]
        %v4776 = vld [vmem:[#allocation2 + $0x30] sm:$0xff]
        %v4777 = vld [vmem:[#allocation2 + $0x38] sm:$0xff]
        %v4778 = vld [vmem:[#allocation2 + $0x40] sm:$0xff]
        %v4779 = vld [vmem:[#allocation2 + $0x48] sm:$0xff]
        %v4780 = vld [vmem:[#allocation2 + $0x50] sm:$0xff]
        %v4781 = vld [vmem:[#allocation2 + $0x58] sm:$0xff]
        %v4782 = vld [vmem:[#allocation2 + $0x60] sm:$0xff]
        %v4783 = vld [vmem:[#allocation2 + $0x68] sm:$0xff]
        %v4784 = vld [vmem:[#allocation2 + $0x70] sm:$0xff]
        %v4785 = vld [vmem:[#allocation2 + $0x78] sm:$0xff]
        %v4786 = vld [vmem:[#allocation2 + $0x80] sm:$0xff]
        %v4787 = vld [vmem:[#allocation2 + $0x88] sm:$0xff]
        %v4788 = vld [vmem:[#allocation2 + $0x90] sm:$0xff]
        %v4789 = vld [vmem:[#allocation2 + $0x98] sm:$0xff]
        %v4790 = vld [vmem:[#allocation2 + $0xa0] sm:$0xff]
        %v4791 = vld [vmem:[#allocation2 + $0xa8] sm:$0xff]
        %v4792 = vld [vmem:[#allocation2 + $0xb0] sm:$0xff]
        %v4793 = vld [vmem:[#allocation2 + $0xb8] sm:$0xff]
        %v4794 = vld [vmem:[#allocation2 + $0xc0] sm:$0xff]
        %v4795 = vld [vmem:[#allocation2 + $0xc8] sm:$0xff]
        %v4796 = vld [vmem:[#allocation2 + $0xd0] sm:$0xff]
        %v4797 = vld [vmem:[#allocation2 + $0xd8] sm:$0xff]
        %v4798 = vld [vmem:[#allocation2 + $0xe0] sm:$0xff]
        %v4799 = vld [vmem:[#allocation2 + $0xe8] sm:$0xff]
        %v4800 = vld [vmem:[#allocation2 + $0xf0] sm:$0xff]
        %v4801 = vld [vmem:[#allocation2 + $0xf8] sm:$0xff]
        %v4802 = vadd.f32 %v4770, %v4691
        %v4803 = vadd.f32 %v4771, %v4693
        %v4804 = vadd.f32 %v4772, %v4696
        %v4805 = vadd.f32 %v4773, %v4698
        %v4806 = vadd.f32 %v4774, %v4701
        %v4807 = vadd.f32 %v4775, %v4703
        %v4808 = vadd.f32 %v4776, %v4706
        %v4809 = vadd.f32 %v4777, %v4708
        %v4810 = vadd.f32 %v4778, %v4711
        %v4811 = vadd.f32 %v4779, %v4713
        %v4812 = vadd.f32 %v4780, %v4716
        %v4813 = vadd.f32 %v4781, %v4718
        %v4814 = vadd.f32 %v4782, %v4721
        %v4815 = vadd.f32 %v4783, %v4723
        %v4816 = vadd.f32 %v4784, %v4726
        %v4817 = vadd.f32 %v4785, %v4728
        %v4818 = vadd.f32 %v4786, %v4731
        %v4819 = vadd.f32 %v4787, %v4733
        %v4820 = vadd.f32 %v4788, %v4736
        %v4821 = vadd.f32 %v4789, %v4738
        %v4822 = vadd.f32 %v4790, %v4741
        %v4823 = vadd.f32 %v4791, %v4743
        %v4824 = vadd.f32 %v4792, %v4746
        %v4825 = vadd.f32 %v4793, %v4748
        %v4826 = vadd.f32 %v4794, %v4751
        %v4827 = vadd.f32 %v4795, %v4753
        %v4828 = vadd.f32 %v4796, %v4756
        %v4829 = vadd.f32 %v4797, %v4758
        %v4830 = vadd.f32 %v4798, %v4761
        %v4831 = vadd.f32 %v4799, %v4763
        %v4832 = vadd.f32 %v4800, %v4766
        %v4833 = vadd.f32 %v4801, %v4768
        %4834 = vst [vmem:[#allocation2] sm:$0xff] %v4802
        %4835 = vst [vmem:[#allocation2 + $0x8] sm:$0xff] %v4803
        %4836 = vst [vmem:[#allocation2 + $0x10] sm:$0xff] %v4804
        %4837 = vst [vmem:[#allocation2 + $0x18] sm:$0xff] %v4805
        %4838 = vst [vmem:[#allocation2 + $0x20] sm:$0xff] %v4806
        %4839 = vst [vmem:[#allocation2 + $0x28] sm:$0xff] %v4807
        %4840 = vst [vmem:[#allocation2 + $0x30] sm:$0xff] %v4808
        %4841 = vst [vmem:[#allocation2 + $0x38] sm:$0xff] %v4809
        %4842 = vst [vmem:[#allocation2 + $0x40] sm:$0xff] %v4810
        %4843 = vst [vmem:[#allocation2 + $0x48] sm:$0xff] %v4811
        %4844 = vst [vmem:[#allocation2 + $0x50] sm:$0xff] %v4812
        %4845 = vst [vmem:[#allocation2 + $0x58] sm:$0xff] %v4813
        %4846 = vst [vmem:[#allocation2 + $0x60] sm:$0xff] %v4814
        %4847 = vst [vmem:[#allocation2 + $0x68] sm:$0xff] %v4815
        %4848 = vst [vmem:[#allocation2 + $0x70] sm:$0xff] %v4816
        %4849 = vst [vmem:[#allocation2 + $0x78] sm:$0xff] %v4817
        %4850 = vst [vmem:[#allocation2 + $0x80] sm:$0xff] %v4818
        %4851 = vst [vmem:[#allocation2 + $0x88] sm:$0xff] %v4819
        %4852 = vst [vmem:[#allocation2 + $0x90] sm:$0xff] %v4820
        %4853 = vst [vmem:[#allocation2 + $0x98] sm:$0xff] %v4821
        %4854 = vst [vmem:[#allocation2 + $0xa0] sm:$0xff] %v4822
        %4855 = vst [vmem:[#allocation2 + $0xa8] sm:$0xff] %v4823
        %4856 = vst [vmem:[#allocation2 + $0xb0] sm:$0xff] %v4824
        %4857 = vst [vmem:[#allocation2 + $0xb8] sm:$0xff] %v4825
        %4858 = vst [vmem:[#allocation2 + $0xc0] sm:$0xff] %v4826
        %4859 = vst [vmem:[#allocation2 + $0xc8] sm:$0xff] %v4827
        %4860 = vst [vmem:[#allocation2 + $0xd0] sm:$0xff] %v4828
        %4861 = vst [vmem:[#allocation2 + $0xd8] sm:$0xff] %v4829
        %4862 = vst [vmem:[#allocation2 + $0xe0] sm:$0xff] %v4830
        %4863 = vst [vmem:[#allocation2 + $0xe8] sm:$0xff] %v4831
        %4864 = vst [vmem:[#allocation2 + $0xf0] sm:$0xff] %v4832
        %4865 = vst [vmem:[#allocation2 + $0xf8] sm:$0xff] %v4833
        %v4866 = vld [vmem:[#allocation2] sm:$0xff]
        %v4867 = vld [vmem:[#allocation2 + $0x8] sm:$0xff]
        %v4868 = vld [vmem:[#allocation2 + $0x10] sm:$0xff]
        %v4869 = vld [vmem:[#allocation2 + $0x18] sm:$0xff]
        %v4870 = vld [vmem:[#allocation2 + $0x20] sm:$0xff]
        %v4871 = vld [vmem:[#allocation2 + $0x28] sm:$0xff]
        %v4872 = vld [vmem:[#allocation2 + $0x30] sm:$0xff]
        %v4873 = vld [vmem:[#allocation2 + $0x38] sm:$0xff]
        %v4874 = vld [vmem:[#allocation2 + $0x40] sm:$0xff]
        %v4875 = vld [vmem:[#allocation2 + $0x48] sm:$0xff]
        %v4876 = vld [vmem:[#allocation2 + $0x50] sm:$0xff]
        %v4877 = vld [vmem:[#allocation2 + $0x58] sm:$0xff]
        %v4878 = vld [vmem:[#allocation2 + $0x60] sm:$0xff]
        %v4879 = vld [vmem:[#allocation2 + $0x68] sm:$0xff]
        %v4880 = vld [vmem:[#allocation2 + $0x70] sm:$0xff]
        %v4881 = vld [vmem:[#allocation2 + $0x78] sm:$0xff]
        %v4882 = vld [vmem:[#allocation2 + $0x80] sm:$0xff]
        %v4883 = vld [vmem:[#allocation2 + $0x88] sm:$0xff]
        %v4884 = vld [vmem:[#allocation2 + $0x90] sm:$0xff]
        %v4885 = vld [vmem:[#allocation2 + $0x98] sm:$0xff]
        %v4886 = vld [vmem:[#allocation2 + $0xa0] sm:$0xff]
        %v4887 = vld [vmem:[#allocation2 + $0xa8] sm:$0xff]
        %v4888 = vld [vmem:[#allocation2 + $0xb0] sm:$0xff]
        %v4889 = vld [vmem:[#allocation2 + $0xb8] sm:$0xff]
        %v4890 = vld [vmem:[#allocation2 + $0xc0] sm:$0xff]
        %v4891 = vld [vmem:[#allocation2 + $0xc8] sm:$0xff]
        %v4892 = vld [vmem:[#allocation2 + $0xd0] sm:$0xff]
        %v4893 = vld [vmem:[#allocation2 + $0xd8] sm:$0xff]
        %v4894 = vld [vmem:[#allocation2 + $0xe0] sm:$0xff]
        %v4895 = vld [vmem:[#allocation2 + $0xe8] sm:$0xff]
        %v4896 = vld [vmem:[#allocation2 + $0xf0] sm:$0xff]
        %v4897 = vld [vmem:[#allocation2 + $0xf8] sm:$0xff]
        %v4898 = vld [vmem:[%s222] sm:$0x1]
        %v4900 = vperm.slane %v4898, 0
        %v4902 = vadd.f32 %v4866, %v4900
        %v4903 = vadd.f32 %v4867, %v4900
        %v4904 = vadd.f32 %v4868, %v4900
        %v4905 = vadd.f32 %v4869, %v4900
        %v4906 = vadd.f32 %v4870, %v4900
        %v4907 = vadd.f32 %v4871, %v4900
        %v4908 = vadd.f32 %v4872, %v4900
        %v4909 = vadd.f32 %v4873, %v4900
        %v4910 = vadd.f32 %v4874, %v4900
        %v4911 = vadd.f32 %v4875, %v4900
        %v4912 = vadd.f32 %v4876, %v4900
        %v4913 = vadd.f32 %v4877, %v4900
        %v4914 = vadd.f32 %v4878, %v4900
        %v4915 = vadd.f32 %v4879, %v4900
        %v4916 = vadd.f32 %v4880, %v4900
        %v4917 = vadd.f32 %v4881, %v4900
        %v4918 = vadd.f32 %v4882, %v4900
        %v4919 = vadd.f32 %v4883, %v4900
        %v4920 = vadd.f32 %v4884, %v4900
        %v4921 = vadd.f32 %v4885, %v4900
        %v4922 = vadd.f32 %v4886, %v4900
        %v4923 = vadd.f32 %v4887, %v4900
        %v4924 = vadd.f32 %v4888, %v4900
        %v4925 = vadd.f32 %v4889, %v4900
        %v4926 = vadd.f32 %v4890, %v4900
        %v4927 = vadd.f32 %v4891, %v4900
        %v4928 = vadd.f32 %v4892, %v4900
        %v4929 = vadd.f32 %v4893, %v4900
        %v4930 = vadd.f32 %v4894, %v4900
        %v4931 = vadd.f32 %v4895, %v4900
        %v4932 = vadd.f32 %v4896, %v4900
        %v4933 = vadd.f32 %v4897, %v4900
        %v4934 = vxor.u32 %v4902, 2147483648
        %v4935 = vxor.u32 %v4903, 2147483648
        %v4936 = vxor.u32 %v4904, 2147483648
        %v4937 = vxor.u32 %v4905, 2147483648
        %v4938 = vxor.u32 %v4906, 2147483648
        %v4939 = vxor.u32 %v4907, 2147483648
        %v4940 = vxor.u32 %v4908, 2147483648
        %v4941 = vxor.u32 %v4909, 2147483648
        %v4942 = vxor.u32 %v4910, 2147483648
        %v4943 = vxor.u32 %v4911, 2147483648
        %v4944 = vxor.u32 %v4912, 2147483648
        %v4945 = vxor.u32 %v4913, 2147483648
        %v4946 = vxor.u32 %v4914, 2147483648
        %v4947 = vxor.u32 %v4915, 2147483648
        %v4948 = vxor.u32 %v4916, 2147483648
        %v4949 = vxor.u32 %v4917, 2147483648
        %v4950 = vxor.u32 %v4918, 2147483648
        %v4951 = vxor.u32 %v4919, 2147483648
        %v4952 = vxor.u32 %v4920, 2147483648
        %v4953 = vxor.u32 %v4921, 2147483648
        %v4954 = vxor.u32 %v4922, 2147483648
        %v4955 = vxor.u32 %v4923, 2147483648
        %v4956 = vxor.u32 %v4924, 2147483648
        %v4957 = vxor.u32 %v4925, 2147483648
        %v4958 = vxor.u32 %v4926, 2147483648
        %v4959 = vxor.u32 %v4927, 2147483648
        %v4960 = vxor.u32 %v4928, 2147483648
        %v4961 = vxor.u32 %v4929, 2147483648
        %v4962 = vxor.u32 %v4930, 2147483648
        %v4963 = vxor.u32 %v4931, 2147483648
        %v4964 = vxor.u32 %v4932, 2147483648
        %v4965 = vxor.u32 %v4933, 2147483648
        %v4966 = vmul.f32 %v4934, 1.442695
        %v4967 = vpow.pop %v4966
        %v4968 = vmul.f32 %v4935, 1.442695
        %v4969 = vpow.pop %v4968
        %v4970 = vmul.f32 %v4936, 1.442695
        %v4971 = vpow.pop %v4970
        %v4972 = vmul.f32 %v4937, 1.442695
        %v4973 = vpow.pop %v4972
        %v4974 = vmul.f32 %v4938, 1.442695
        %v4975 = vpow.pop %v4974
        %v4976 = vmul.f32 %v4939, 1.442695
        %v4977 = vpow.pop %v4976
        %v4978 = vmul.f32 %v4940, 1.442695
        %v4979 = vpow.pop %v4978
        %v4980 = vmul.f32 %v4941, 1.442695
        %v4981 = vpow.pop %v4980
        %v4982 = vmul.f32 %v4942, 1.442695
        %v4983 = vpow.pop %v4982
        %v4984 = vmul.f32 %v4943, 1.442695
        %v4985 = vpow.pop %v4984
        %v4986 = vmul.f32 %v4944, 1.442695
        %v4987 = vpow.pop %v4986
        %v4988 = vmul.f32 %v4945, 1.442695
        %v4989 = vpow.pop %v4988
        %v4990 = vmul.f32 %v4946, 1.442695
        %v4991 = vpow.pop %v4990
        %v4992 = vmul.f32 %v4947, 1.442695
        %v4993 = vpow.pop %v4992
        %v4994 = vmul.f32 %v4948, 1.442695
        %v4995 = vpow.pop %v4994
        %v4996 = vmul.f32 %v4949, 1.442695
        %v4997 = vpow.pop %v4996
        %v4998 = vmul.f32 %v4950, 1.442695
        %v4999 = vpow.pop %v4998
        %v5000 = vmul.f32 %v4951, 1.442695
        %v5001 = vpow.pop %v5000
        %v5002 = vmul.f32 %v4952, 1.442695
        %v5003 = vpow.pop %v5002
        %v5004 = vmul.f32 %v4953, 1.442695
        %v5005 = vpow.pop %v5004
        %v5006 = vmul.f32 %v4954, 1.442695
        %v5007 = vpow.pop %v5006
        %v5008 = vmul.f32 %v4955, 1.442695
        %v5009 = vpow.pop %v5008
        %v5010 = vmul.f32 %v4956, 1.442695
        %v5011 = vpow.pop %v5010
        %v5012 = vmul.f32 %v4957, 1.442695
        %v5013 = vpow.pop %v5012
        %v5014 = vmul.f32 %v4958, 1.442695
        %v5015 = vpow.pop %v5014
        %v5016 = vmul.f32 %v4959, 1.442695
        %v5017 = vpow.pop %v5016
        %v5018 = vmul.f32 %v4960, 1.442695
        %v5019 = vpow.pop %v5018
        %v5020 = vmul.f32 %v4961, 1.442695
        %v5021 = vpow.pop %v5020
        %v5022 = vmul.f32 %v4962, 1.442695
        %v5023 = vpow.pop %v5022
        %v5024 = vmul.f32 %v4963, 1.442695
        %v5025 = vpow.pop %v5024
        %v5026 = vmul.f32 %v4964, 1.442695
        %v5027 = vpow.pop %v5026
        %v5028 = vmul.f32 %v4965, 1.442695
        %v5029 = vpow.pop %v5028
        %v5030 = vadd.f32 %v4967, 1.0
        %v5031 = vadd.f32 %v4969, 1.0
        %v5032 = vadd.f32 %v4971, 1.0
        %v5033 = vadd.f32 %v4973, 1.0
        %v5034 = vadd.f32 %v4975, 1.0
        %v5035 = vadd.f32 %v4977, 1.0
        %v5036 = vadd.f32 %v4979, 1.0
        %v5037 = vadd.f32 %v4981, 1.0
        %v5038 = vadd.f32 %v4983, 1.0
        %v5039 = vadd.f32 %v4985, 1.0
        %v5040 = vadd.f32 %v4987, 1.0
        %v5041 = vadd.f32 %v4989, 1.0
        %v5042 = vadd.f32 %v4991, 1.0
        %v5043 = vadd.f32 %v4993, 1.0
        %v5044 = vadd.f32 %v4995, 1.0
        %v5045 = vadd.f32 %v4997, 1.0
        %v5046 = vadd.f32 %v4999, 1.0
        %v5047 = vadd.f32 %v5001, 1.0
        %v5048 = vadd.f32 %v5003, 1.0
        %v5049 = vadd.f32 %v5005, 1.0
        %v5050 = vadd.f32 %v5007, 1.0
        %v5051 = vadd.f32 %v5009, 1.0
        %v5052 = vadd.f32 %v5011, 1.0
        %v5053 = vadd.f32 %v5013, 1.0
        %v5054 = vadd.f32 %v5015, 1.0
        %v5055 = vadd.f32 %v5017, 1.0
        %v5056 = vadd.f32 %v5019, 1.0
        %v5057 = vadd.f32 %v5021, 1.0
        %v5058 = vadd.f32 %v5023, 1.0
        %v5059 = vadd.f32 %v5025, 1.0
        %v5060 = vadd.f32 %v5027, 1.0
        %v5061 = vadd.f32 %v5029, 1.0
        %v5062 = vrcp.pop %v5030
        %v5063 = vmul.f32 %v5030, %v5062
        %v5064 = vsub.f32 1.0, %v5063
        %v5065 = vmul.f32 %v5062, %v5064
        %v5066 = vadd.f32 %v5062, %v5065
        %vm5067 = vweird.f32 %v5030
        %vm5068 = vweird.f32 %v5062
        %vm5069 = vmor %vm5067, %vm5068
        %v5070 = vsel %vm5069, %v5062, %v5066
        %v5071 = vand.u32 2147483647, %v5030
        %vm5072 = vcmp.eq.f32.partialorder %v5071, 8.507059e+37
        %v5073 = vand.u32 %v5030, 2147483648
        %v5074 = vor.u32 1.1754944e-38, %v5073
        %v5075 = vsel %vm5072, %v5074, %v5070
        %v5076 = vmul.f32 1.0, %v5075
        %v5077 = vrcp.pop %v5031
        %v5078 = vmul.f32 %v5031, %v5077
        %v5079 = vsub.f32 1.0, %v5078
        %v5080 = vmul.f32 %v5077, %v5079
        %v5081 = vadd.f32 %v5077, %v5080
        %vm5082 = vweird.f32 %v5031
        %vm5083 = vweird.f32 %v5077
        %vm5084 = vmor %vm5082, %vm5083
        %v5085 = vsel %vm5084, %v5077, %v5081
        %v5086 = vand.u32 2147483647, %v5031
        %vm5087 = vcmp.eq.f32.partialorder %v5086, 8.507059e+37
        %v5088 = vand.u32 %v5031, 2147483648
        %v5089 = vor.u32 1.1754944e-38, %v5088
        %v5090 = vsel %vm5087, %v5089, %v5085
        %v5091 = vmul.f32 1.0, %v5090
        %v5092 = vrcp.pop %v5032
        %v5093 = vmul.f32 %v5032, %v5092
        %v5094 = vsub.f32 1.0, %v5093
        %v5095 = vmul.f32 %v5092, %v5094
        %v5096 = vadd.f32 %v5092, %v5095
        %vm5097 = vweird.f32 %v5032
        %vm5098 = vweird.f32 %v5092
        %vm5099 = vmor %vm5097, %vm5098
        %v5100 = vsel %vm5099, %v5092, %v5096
        %v5101 = vand.u32 2147483647, %v5032
        %vm5102 = vcmp.eq.f32.partialorder %v5101, 8.507059e+37
        %v5103 = vand.u32 %v5032, 2147483648
        %v5104 = vor.u32 1.1754944e-38, %v5103
        %v5105 = vsel %vm5102, %v5104, %v5100
        %v5106 = vmul.f32 1.0, %v5105
        %v5107 = vrcp.pop %v5033
        %v5108 = vmul.f32 %v5033, %v5107
        %v5109 = vsub.f32 1.0, %v5108
        %v5110 = vmul.f32 %v5107, %v5109
        %v5111 = vadd.f32 %v5107, %v5110
        %vm5112 = vweird.f32 %v5033
        %vm5113 = vweird.f32 %v5107
        %vm5114 = vmor %vm5112, %vm5113
        %v5115 = vsel %vm5114, %v5107, %v5111
        %v5116 = vand.u32 2147483647, %v5033
        %vm5117 = vcmp.eq.f32.partialorder %v5116, 8.507059e+37
        %v5118 = vand.u32 %v5033, 2147483648
        %v5119 = vor.u32 1.1754944e-38, %v5118
        %v5120 = vsel %vm5117, %v5119, %v5115
        %v5121 = vmul.f32 1.0, %v5120
        %v5122 = vrcp.pop %v5034
        %v5123 = vmul.f32 %v5034, %v5122
        %v5124 = vsub.f32 1.0, %v5123
        %v5125 = vmul.f32 %v5122, %v5124
        %v5126 = vadd.f32 %v5122, %v5125
        %vm5127 = vweird.f32 %v5034
        %vm5128 = vweird.f32 %v5122
        %vm5129 = vmor %vm5127, %vm5128
        %v5130 = vsel %vm5129, %v5122, %v5126
        %v5131 = vand.u32 2147483647, %v5034
        %vm5132 = vcmp.eq.f32.partialorder %v5131, 8.507059e+37
        %v5133 = vand.u32 %v5034, 2147483648
        %v5134 = vor.u32 1.1754944e-38, %v5133
        %v5135 = vsel %vm5132, %v5134, %v5130
        %v5136 = vmul.f32 1.0, %v5135
        %v5137 = vrcp.pop %v5035
        %v5138 = vmul.f32 %v5035, %v5137
        %v5139 = vsub.f32 1.0, %v5138
        %v5140 = vmul.f32 %v5137, %v5139
        %v5141 = vadd.f32 %v5137, %v5140
        %vm5142 = vweird.f32 %v5035
        %vm5143 = vweird.f32 %v5137
        %vm5144 = vmor %vm5142, %vm5143
        %v5145 = vsel %vm5144, %v5137, %v5141
        %v5146 = vand.u32 2147483647, %v5035
        %vm5147 = vcmp.eq.f32.partialorder %v5146, 8.507059e+37
        %v5148 = vand.u32 %v5035, 2147483648
        %v5149 = vor.u32 1.1754944e-38, %v5148
        %v5150 = vsel %vm5147, %v5149, %v5145
        %v5151 = vmul.f32 1.0, %v5150
        %v5152 = vrcp.pop %v5036
        %v5153 = vmul.f32 %v5036, %v5152
        %v5154 = vsub.f32 1.0, %v5153
        %v5155 = vmul.f32 %v5152, %v5154
        %v5156 = vadd.f32 %v5152, %v5155
        %vm5157 = vweird.f32 %v5036
        %vm5158 = vweird.f32 %v5152
        %vm5159 = vmor %vm5157, %vm5158
        %v5160 = vsel %vm5159, %v5152, %v5156
        %v5161 = vand.u32 2147483647, %v5036
        %vm5162 = vcmp.eq.f32.partialorder %v5161, 8.507059e+37
        %v5163 = vand.u32 %v5036, 2147483648
        %v5164 = vor.u32 1.1754944e-38, %v5163
        %v5165 = vsel %vm5162, %v5164, %v5160
        %v5166 = vmul.f32 1.0, %v5165
        %v5167 = vrcp.pop %v5037
        %v5168 = vmul.f32 %v5037, %v5167
        %v5169 = vsub.f32 1.0, %v5168
        %v5170 = vmul.f32 %v5167, %v5169
        %v5171 = vadd.f32 %v5167, %v5170
        %vm5172 = vweird.f32 %v5037
        %vm5173 = vweird.f32 %v5167
        %vm5174 = vmor %vm5172, %vm5173
        %v5175 = vsel %vm5174, %v5167, %v5171
        %v5176 = vand.u32 2147483647, %v5037
        %vm5177 = vcmp.eq.f32.partialorder %v5176, 8.507059e+37
        %v5178 = vand.u32 %v5037, 2147483648
        %v5179 = vor.u32 1.1754944e-38, %v5178
        %v5180 = vsel %vm5177, %v5179, %v5175
        %v5181 = vmul.f32 1.0, %v5180
        %v5182 = vrcp.pop %v5038
        %v5183 = vmul.f32 %v5038, %v5182
        %v5184 = vsub.f32 1.0, %v5183
        %v5185 = vmul.f32 %v5182, %v5184
        %v5186 = vadd.f32 %v5182, %v5185
        %vm5187 = vweird.f32 %v5038
        %vm5188 = vweird.f32 %v5182
        %vm5189 = vmor %vm5187, %vm5188
        %v5190 = vsel %vm5189, %v5182, %v5186
        %v5191 = vand.u32 2147483647, %v5038
        %vm5192 = vcmp.eq.f32.partialorder %v5191, 8.507059e+37
        %v5193 = vand.u32 %v5038, 2147483648
        %v5194 = vor.u32 1.1754944e-38, %v5193
        %v5195 = vsel %vm5192, %v5194, %v5190
        %v5196 = vmul.f32 1.0, %v5195
        %v5197 = vrcp.pop %v5039
        %v5198 = vmul.f32 %v5039, %v5197
        %v5199 = vsub.f32 1.0, %v5198
        %v5200 = vmul.f32 %v5197, %v5199
        %v5201 = vadd.f32 %v5197, %v5200
        %vm5202 = vweird.f32 %v5039
        %vm5203 = vweird.f32 %v5197
        %vm5204 = vmor %vm5202, %vm5203
        %v5205 = vsel %vm5204, %v5197, %v5201
        %v5206 = vand.u32 2147483647, %v5039
        %vm5207 = vcmp.eq.f32.partialorder %v5206, 8.507059e+37
        %v5208 = vand.u32 %v5039, 2147483648
        %v5209 = vor.u32 1.1754944e-38, %v5208
        %v5210 = vsel %vm5207, %v5209, %v5205
        %v5211 = vmul.f32 1.0, %v5210
        %v5212 = vrcp.pop %v5040
        %v5213 = vmul.f32 %v5040, %v5212
        %v5214 = vsub.f32 1.0, %v5213
        %v5215 = vmul.f32 %v5212, %v5214
        %v5216 = vadd.f32 %v5212, %v5215
        %vm5217 = vweird.f32 %v5040
        %vm5218 = vweird.f32 %v5212
        %vm5219 = vmor %vm5217, %vm5218
        %v5220 = vsel %vm5219, %v5212, %v5216
        %v5221 = vand.u32 2147483647, %v5040
        %vm5222 = vcmp.eq.f32.partialorder %v5221, 8.507059e+37
        %v5223 = vand.u32 %v5040, 2147483648
        %v5224 = vor.u32 1.1754944e-38, %v5223
        %v5225 = vsel %vm5222, %v5224, %v5220
        %v5226 = vmul.f32 1.0, %v5225
        %v5227 = vrcp.pop %v5041
        %v5228 = vmul.f32 %v5041, %v5227
        %v5229 = vsub.f32 1.0, %v5228
        %v5230 = vmul.f32 %v5227, %v5229
        %v5231 = vadd.f32 %v5227, %v5230
        %vm5232 = vweird.f32 %v5041
        %vm5233 = vweird.f32 %v5227
        %vm5234 = vmor %vm5232, %vm5233
        %v5235 = vsel %vm5234, %v5227, %v5231
        %v5236 = vand.u32 2147483647, %v5041
        %vm5237 = vcmp.eq.f32.partialorder %v5236, 8.507059e+37
        %v5238 = vand.u32 %v5041, 2147483648
        %v5239 = vor.u32 1.1754944e-38, %v5238
        %v5240 = vsel %vm5237, %v5239, %v5235
        %v5241 = vmul.f32 1.0, %v5240
        %v5242 = vrcp.pop %v5042
        %v5243 = vmul.f32 %v5042, %v5242
        %v5244 = vsub.f32 1.0, %v5243
        %v5245 = vmul.f32 %v5242, %v5244
        %v5246 = vadd.f32 %v5242, %v5245
        %vm5247 = vweird.f32 %v5042
        %vm5248 = vweird.f32 %v5242
        %vm5249 = vmor %vm5247, %vm5248
        %v5250 = vsel %vm5249, %v5242, %v5246
        %v5251 = vand.u32 2147483647, %v5042
        %vm5252 = vcmp.eq.f32.partialorder %v5251, 8.507059e+37
        %v5253 = vand.u32 %v5042, 2147483648
        %v5254 = vor.u32 1.1754944e-38, %v5253
        %v5255 = vsel %vm5252, %v5254, %v5250
        %v5256 = vmul.f32 1.0, %v5255
        %v5257 = vrcp.pop %v5043
        %v5258 = vmul.f32 %v5043, %v5257
        %v5259 = vsub.f32 1.0, %v5258
        %v5260 = vmul.f32 %v5257, %v5259
        %v5261 = vadd.f32 %v5257, %v5260
        %vm5262 = vweird.f32 %v5043
        %vm5263 = vweird.f32 %v5257
        %vm5264 = vmor %vm5262, %vm5263
        %v5265 = vsel %vm5264, %v5257, %v5261
        %v5266 = vand.u32 2147483647, %v5043
        %vm5267 = vcmp.eq.f32.partialorder %v5266, 8.507059e+37
        %v5268 = vand.u32 %v5043, 2147483648
        %v5269 = vor.u32 1.1754944e-38, %v5268
        %v5270 = vsel %vm5267, %v5269, %v5265
        %v5271 = vmul.f32 1.0, %v5270
        %v5272 = vrcp.pop %v5044
        %v5273 = vmul.f32 %v5044, %v5272
        %v5274 = vsub.f32 1.0, %v5273
        %v5275 = vmul.f32 %v5272, %v5274
        %v5276 = vadd.f32 %v5272, %v5275
        %vm5277 = vweird.f32 %v5044
        %vm5278 = vweird.f32 %v5272
        %vm5279 = vmor %vm5277, %vm5278
        %v5280 = vsel %vm5279, %v5272, %v5276
        %v5281 = vand.u32 2147483647, %v5044
        %vm5282 = vcmp.eq.f32.partialorder %v5281, 8.507059e+37
        %v5283 = vand.u32 %v5044, 2147483648
        %v5284 = vor.u32 1.1754944e-38, %v5283
        %v5285 = vsel %vm5282, %v5284, %v5280
        %v5286 = vmul.f32 1.0, %v5285
        %v5287 = vrcp.pop %v5045
        %v5288 = vmul.f32 %v5045, %v5287
        %v5289 = vsub.f32 1.0, %v5288
        %v5290 = vmul.f32 %v5287, %v5289
        %v5291 = vadd.f32 %v5287, %v5290
        %vm5292 = vweird.f32 %v5045
        %vm5293 = vweird.f32 %v5287
        %vm5294 = vmor %vm5292, %vm5293
        %v5295 = vsel %vm5294, %v5287, %v5291
        %v5296 = vand.u32 2147483647, %v5045
        %vm5297 = vcmp.eq.f32.partialorder %v5296, 8.507059e+37
        %v5298 = vand.u32 %v5045, 2147483648
        %v5299 = vor.u32 1.1754944e-38, %v5298
        %v5300 = vsel %vm5297, %v5299, %v5295
        %v5301 = vmul.f32 1.0, %v5300
        %v5302 = vrcp.pop %v5046
        %v5303 = vmul.f32 %v5046, %v5302
        %v5304 = vsub.f32 1.0, %v5303
        %v5305 = vmul.f32 %v5302, %v5304
        %v5306 = vadd.f32 %v5302, %v5305
        %vm5307 = vweird.f32 %v5046
        %vm5308 = vweird.f32 %v5302
        %vm5309 = vmor %vm5307, %vm5308
        %v5310 = vsel %vm5309, %v5302, %v5306
        %v5311 = vand.u32 2147483647, %v5046
        %vm5312 = vcmp.eq.f32.partialorder %v5311, 8.507059e+37
        %v5313 = vand.u32 %v5046, 2147483648
        %v5314 = vor.u32 1.1754944e-38, %v5313
        %v5315 = vsel %vm5312, %v5314, %v5310
        %v5316 = vmul.f32 1.0, %v5315
        %v5317 = vrcp.pop %v5047
        %v5318 = vmul.f32 %v5047, %v5317
        %v5319 = vsub.f32 1.0, %v5318
        %v5320 = vmul.f32 %v5317, %v5319
        %v5321 = vadd.f32 %v5317, %v5320
        %vm5322 = vweird.f32 %v5047
        %vm5323 = vweird.f32 %v5317
        %vm5324 = vmor %vm5322, %vm5323
        %v5325 = vsel %vm5324, %v5317, %v5321
        %v5326 = vand.u32 2147483647, %v5047
        %vm5327 = vcmp.eq.f32.partialorder %v5326, 8.507059e+37
        %v5328 = vand.u32 %v5047, 2147483648
        %v5329 = vor.u32 1.1754944e-38, %v5328
        %v5330 = vsel %vm5327, %v5329, %v5325
        %v5331 = vmul.f32 1.0, %v5330
        %v5332 = vrcp.pop %v5048
        %v5333 = vmul.f32 %v5048, %v5332
        %v5334 = vsub.f32 1.0, %v5333
        %v5335 = vmul.f32 %v5332, %v5334
        %v5336 = vadd.f32 %v5332, %v5335
        %vm5337 = vweird.f32 %v5048
        %vm5338 = vweird.f32 %v5332
        %vm5339 = vmor %vm5337, %vm5338
        %v5340 = vsel %vm5339, %v5332, %v5336
        %v5341 = vand.u32 2147483647, %v5048
        %vm5342 = vcmp.eq.f32.partialorder %v5341, 8.507059e+37
        %v5343 = vand.u32 %v5048, 2147483648
        %v5344 = vor.u32 1.1754944e-38, %v5343
        %v5345 = vsel %vm5342, %v5344, %v5340
        %v5346 = vmul.f32 1.0, %v5345
        %v5347 = vrcp.pop %v5049
        %v5348 = vmul.f32 %v5049, %v5347
        %v5349 = vsub.f32 1.0, %v5348
        %v5350 = vmul.f32 %v5347, %v5349
        %v5351 = vadd.f32 %v5347, %v5350
        %vm5352 = vweird.f32 %v5049
        %vm5353 = vweird.f32 %v5347
        %vm5354 = vmor %vm5352, %vm5353
        %v5355 = vsel %vm5354, %v5347, %v5351
        %v5356 = vand.u32 2147483647, %v5049
        %vm5357 = vcmp.eq.f32.partialorder %v5356, 8.507059e+37
        %v5358 = vand.u32 %v5049, 2147483648
        %v5359 = vor.u32 1.1754944e-38, %v5358
        %v5360 = vsel %vm5357, %v5359, %v5355
        %v5361 = vmul.f32 1.0, %v5360
        %v5362 = vrcp.pop %v5050
        %v5363 = vmul.f32 %v5050, %v5362
        %v5364 = vsub.f32 1.0, %v5363
        %v5365 = vmul.f32 %v5362, %v5364
        %v5366 = vadd.f32 %v5362, %v5365
        %vm5367 = vweird.f32 %v5050
        %vm5368 = vweird.f32 %v5362
        %vm5369 = vmor %vm5367, %vm5368
        %v5370 = vsel %vm5369, %v5362, %v5366
        %v5371 = vand.u32 2147483647, %v5050
        %vm5372 = vcmp.eq.f32.partialorder %v5371, 8.507059e+37
        %v5373 = vand.u32 %v5050, 2147483648
        %v5374 = vor.u32 1.1754944e-38, %v5373
        %v5375 = vsel %vm5372, %v5374, %v5370
        %v5376 = vmul.f32 1.0, %v5375
        %v5377 = vrcp.pop %v5051
        %v5378 = vmul.f32 %v5051, %v5377
        %v5379 = vsub.f32 1.0, %v5378
        %v5380 = vmul.f32 %v5377, %v5379
        %v5381 = vadd.f32 %v5377, %v5380
        %vm5382 = vweird.f32 %v5051
        %vm5383 = vweird.f32 %v5377
        %vm5384 = vmor %vm5382, %vm5383
        %v5385 = vsel %vm5384, %v5377, %v5381
        %v5386 = vand.u32 2147483647, %v5051
        %vm5387 = vcmp.eq.f32.partialorder %v5386, 8.507059e+37
        %v5388 = vand.u32 %v5051, 2147483648
        %v5389 = vor.u32 1.1754944e-38, %v5388
        %v5390 = vsel %vm5387, %v5389, %v5385
        %v5391 = vmul.f32 1.0, %v5390
        %v5392 = vrcp.pop %v5052
        %v5393 = vmul.f32 %v5052, %v5392
        %v5394 = vsub.f32 1.0, %v5393
        %v5395 = vmul.f32 %v5392, %v5394
        %v5396 = vadd.f32 %v5392, %v5395
        %vm5397 = vweird.f32 %v5052
        %vm5398 = vweird.f32 %v5392
        %vm5399 = vmor %vm5397, %vm5398
        %v5400 = vsel %vm5399, %v5392, %v5396
        %v5401 = vand.u32 2147483647, %v5052
        %vm5402 = vcmp.eq.f32.partialorder %v5401, 8.507059e+37
        %v5403 = vand.u32 %v5052, 2147483648
        %v5404 = vor.u32 1.1754944e-38, %v5403
        %v5405 = vsel %vm5402, %v5404, %v5400
        %v5406 = vmul.f32 1.0, %v5405
        %v5407 = vrcp.pop %v5053
        %v5408 = vmul.f32 %v5053, %v5407
        %v5409 = vsub.f32 1.0, %v5408
        %v5410 = vmul.f32 %v5407, %v5409
        %v5411 = vadd.f32 %v5407, %v5410
        %vm5412 = vweird.f32 %v5053
        %vm5413 = vweird.f32 %v5407
        %vm5414 = vmor %vm5412, %vm5413
        %v5415 = vsel %vm5414, %v5407, %v5411
        %v5416 = vand.u32 2147483647, %v5053
        %vm5417 = vcmp.eq.f32.partialorder %v5416, 8.507059e+37
        %v5418 = vand.u32 %v5053, 2147483648
        %v5419 = vor.u32 1.1754944e-38, %v5418
        %v5420 = vsel %vm5417, %v5419, %v5415
        %v5421 = vmul.f32 1.0, %v5420
        %v5422 = vrcp.pop %v5054
        %v5423 = vmul.f32 %v5054, %v5422
        %v5424 = vsub.f32 1.0, %v5423
        %v5425 = vmul.f32 %v5422, %v5424
        %v5426 = vadd.f32 %v5422, %v5425
        %vm5427 = vweird.f32 %v5054
        %vm5428 = vweird.f32 %v5422
        %vm5429 = vmor %vm5427, %vm5428
        %v5430 = vsel %vm5429, %v5422, %v5426
        %v5431 = vand.u32 2147483647, %v5054
        %vm5432 = vcmp.eq.f32.partialorder %v5431, 8.507059e+37
        %v5433 = vand.u32 %v5054, 2147483648
        %v5434 = vor.u32 1.1754944e-38, %v5433
        %v5435 = vsel %vm5432, %v5434, %v5430
        %v5436 = vmul.f32 1.0, %v5435
        %v5437 = vrcp.pop %v5055
        %v5438 = vmul.f32 %v5055, %v5437
        %v5439 = vsub.f32 1.0, %v5438
        %v5440 = vmul.f32 %v5437, %v5439
        %v5441 = vadd.f32 %v5437, %v5440
        %vm5442 = vweird.f32 %v5055
        %vm5443 = vweird.f32 %v5437
        %vm5444 = vmor %vm5442, %vm5443
        %v5445 = vsel %vm5444, %v5437, %v5441
        %v5446 = vand.u32 2147483647, %v5055
        %vm5447 = vcmp.eq.f32.partialorder %v5446, 8.507059e+37
        %v5448 = vand.u32 %v5055, 2147483648
        %v5449 = vor.u32 1.1754944e-38, %v5448
        %v5450 = vsel %vm5447, %v5449, %v5445
        %v5451 = vmul.f32 1.0, %v5450
        %v5452 = vrcp.pop %v5056
        %v5453 = vmul.f32 %v5056, %v5452
        %v5454 = vsub.f32 1.0, %v5453
        %v5455 = vmul.f32 %v5452, %v5454
        %v5456 = vadd.f32 %v5452, %v5455
        %vm5457 = vweird.f32 %v5056
        %vm5458 = vweird.f32 %v5452
        %vm5459 = vmor %vm5457, %vm5458
        %v5460 = vsel %vm5459, %v5452, %v5456
        %v5461 = vand.u32 2147483647, %v5056
        %vm5462 = vcmp.eq.f32.partialorder %v5461, 8.507059e+37
        %v5463 = vand.u32 %v5056, 2147483648
        %v5464 = vor.u32 1.1754944e-38, %v5463
        %v5465 = vsel %vm5462, %v5464, %v5460
        %v5466 = vmul.f32 1.0, %v5465
        %v5467 = vrcp.pop %v5057
        %v5468 = vmul.f32 %v5057, %v5467
        %v5469 = vsub.f32 1.0, %v5468
        %v5470 = vmul.f32 %v5467, %v5469
        %v5471 = vadd.f32 %v5467, %v5470
        %vm5472 = vweird.f32 %v5057
        %vm5473 = vweird.f32 %v5467
        %vm5474 = vmor %vm5472, %vm5473
        %v5475 = vsel %vm5474, %v5467, %v5471
        %v5476 = vand.u32 2147483647, %v5057
        %vm5477 = vcmp.eq.f32.partialorder %v5476, 8.507059e+37
        %v5478 = vand.u32 %v5057, 2147483648
        %v5479 = vor.u32 1.1754944e-38, %v5478
        %v5480 = vsel %vm5477, %v5479, %v5475
        %v5481 = vmul.f32 1.0, %v5480
        %v5482 = vrcp.pop %v5058
        %v5483 = vmul.f32 %v5058, %v5482
        %v5484 = vsub.f32 1.0, %v5483
        %v5485 = vmul.f32 %v5482, %v5484
        %v5486 = vadd.f32 %v5482, %v5485
        %vm5487 = vweird.f32 %v5058
        %vm5488 = vweird.f32 %v5482
        %vm5489 = vmor %vm5487, %vm5488
        %v5490 = vsel %vm5489, %v5482, %v5486
        %v5491 = vand.u32 2147483647, %v5058
        %vm5492 = vcmp.eq.f32.partialorder %v5491, 8.507059e+37
        %v5493 = vand.u32 %v5058, 2147483648
        %v5494 = vor.u32 1.1754944e-38, %v5493
        %v5495 = vsel %vm5492, %v5494, %v5490
        %v5496 = vmul.f32 1.0, %v5495
        %v5497 = vrcp.pop %v5059
        %v5498 = vmul.f32 %v5059, %v5497
        %v5499 = vsub.f32 1.0, %v5498
        %v5500 = vmul.f32 %v5497, %v5499
        %v5501 = vadd.f32 %v5497, %v5500
        %vm5502 = vweird.f32 %v5059
        %vm5503 = vweird.f32 %v5497
        %vm5504 = vmor %vm5502, %vm5503
        %v5505 = vsel %vm5504, %v5497, %v5501
        %v5506 = vand.u32 2147483647, %v5059
        %vm5507 = vcmp.eq.f32.partialorder %v5506, 8.507059e+37
        %v5508 = vand.u32 %v5059, 2147483648
        %v5509 = vor.u32 1.1754944e-38, %v5508
        %v5510 = vsel %vm5507, %v5509, %v5505
        %v5511 = vmul.f32 1.0, %v5510
        %v5512 = vrcp.pop %v5060
        %v5513 = vmul.f32 %v5060, %v5512
        %v5514 = vsub.f32 1.0, %v5513
        %v5515 = vmul.f32 %v5512, %v5514
        %v5516 = vadd.f32 %v5512, %v5515
        %vm5517 = vweird.f32 %v5060
        %vm5518 = vweird.f32 %v5512
        %vm5519 = vmor %vm5517, %vm5518
        %v5520 = vsel %vm5519, %v5512, %v5516
        %v5521 = vand.u32 2147483647, %v5060
        %vm5522 = vcmp.eq.f32.partialorder %v5521, 8.507059e+37
        %v5523 = vand.u32 %v5060, 2147483648
        %v5524 = vor.u32 1.1754944e-38, %v5523
        %v5525 = vsel %vm5522, %v5524, %v5520
        %v5526 = vmul.f32 1.0, %v5525
        %v5527 = vrcp.pop %v5061
        %v5528 = vmul.f32 %v5061, %v5527
        %v5529 = vsub.f32 1.0, %v5528
        %v5530 = vmul.f32 %v5527, %v5529
        %v5531 = vadd.f32 %v5527, %v5530
        %vm5532 = vweird.f32 %v5061
        %vm5533 = vweird.f32 %v5527
        %vm5534 = vmor %vm5532, %vm5533
        %v5535 = vsel %vm5534, %v5527, %v5531
        %v5536 = vand.u32 2147483647, %v5061
        %vm5537 = vcmp.eq.f32.partialorder %v5536, 8.507059e+37
        %v5538 = vand.u32 %v5061, 2147483648
        %v5539 = vor.u32 1.1754944e-38, %v5538
        %v5540 = vsel %vm5537, %v5539, %v5535
        %v5541 = vmul.f32 1.0, %v5540
        %v5542 = vmul.f32 %v4902, %v5076
        %v5543 = vmul.f32 %v4903, %v5091
        %v5544 = vmul.f32 %v4904, %v5106
        %v5545 = vmul.f32 %v4905, %v5121
        %v5546 = vmul.f32 %v4906, %v5136
        %v5547 = vmul.f32 %v4907, %v5151
        %v5548 = vmul.f32 %v4908, %v5166
        %v5549 = vmul.f32 %v4909, %v5181
        %v5550 = vmul.f32 %v4910, %v5196
        %v5551 = vmul.f32 %v4911, %v5211
        %v5552 = vmul.f32 %v4912, %v5226
        %v5553 = vmul.f32 %v4913, %v5241
        %v5554 = vmul.f32 %v4914, %v5256
        %v5555 = vmul.f32 %v4915, %v5271
        %v5556 = vmul.f32 %v4916, %v5286
        %v5557 = vmul.f32 %v4917, %v5301
        %v5558 = vmul.f32 %v4918, %v5316
        %v5559 = vmul.f32 %v4919, %v5331
        %v5560 = vmul.f32 %v4920, %v5346
        %v5561 = vmul.f32 %v4921, %v5361
        %v5562 = vmul.f32 %v4922, %v5376
        %v5563 = vmul.f32 %v4923, %v5391
        %v5564 = vmul.f32 %v4924, %v5406
        %v5565 = vmul.f32 %v4925, %v5421
        %v5566 = vmul.f32 %v4926, %v5436
        %v5567 = vmul.f32 %v4927, %v5451
        %v5568 = vmul.f32 %v4928, %v5466
        %v5569 = vmul.f32 %v4929, %v5481
        %v5570 = vmul.f32 %v4930, %v5496
        %v5571 = vmul.f32 %v4931, %v5511
        %v5572 = vmul.f32 %v4932, %v5526
        %v5573 = vmul.f32 %v4933, %v5541
        %5574 = vst [vmem:[%s210] sm:$0xff] %v5542
        %5575 = vst [vmem:[%s210 + $0x8] sm:$0xff] %v5543
        %5576 = vst [vmem:[%s210 + $0x10] sm:$0xff] %v5544
        %5577 = vst [vmem:[%s210 + $0x18] sm:$0xff] %v5545
        %5578 = vst [vmem:[%s210 + $0x20] sm:$0xff] %v5546
        %5579 = vst [vmem:[%s210 + $0x28] sm:$0xff] %v5547
        %5580 = vst [vmem:[%s210 + $0x30] sm:$0xff] %v5548
        %5581 = vst [vmem:[%s210 + $0x38] sm:$0xff] %v5549
        %5582 = vst [vmem:[%s210 + $0x40] sm:$0xff] %v5550
        %5583 = vst [vmem:[%s210 + $0x48] sm:$0xff] %v5551
        %5584 = vst [vmem:[%s210 + $0x50] sm:$0xff] %v5552
        %5585 = vst [vmem:[%s210 + $0x58] sm:$0xff] %v5553
        %5586 = vst [vmem:[%s210 + $0x60] sm:$0xff] %v5554
        %5587 = vst [vmem:[%s210 + $0x68] sm:$0xff] %v5555
        %5588 = vst [vmem:[%s210 + $0x70] sm:$0xff] %v5556
        %5589 = vst [vmem:[%s210 + $0x78] sm:$0xff] %v5557
        %5590 = vst [vmem:[%s210 + $0x80] sm:$0xff] %v5558
        %5591 = vst [vmem:[%s210 + $0x88] sm:$0xff] %v5559
        %5592 = vst [vmem:[%s210 + $0x90] sm:$0xff] %v5560
        %5593 = vst [vmem:[%s210 + $0x98] sm:$0xff] %v5561
        %5594 = vst [vmem:[%s210 + $0xa0] sm:$0xff] %v5562
        %5595 = vst [vmem:[%s210 + $0xa8] sm:$0xff] %v5563
        %5596 = vst [vmem:[%s210 + $0xb0] sm:$0xff] %v5564
        %5597 = vst [vmem:[%s210 + $0xb8] sm:$0xff] %v5565
        %5598 = vst [vmem:[%s210 + $0xc0] sm:$0xff] %v5566
        %5599 = vst [vmem:[%s210 + $0xc8] sm:$0xff] %v5567
        %5600 = vst [vmem:[%s210 + $0xd0] sm:$0xff] %v5568
        %5601 = vst [vmem:[%s210 + $0xd8] sm:$0xff] %v5569
        %5602 = vst [vmem:[%s210 + $0xe0] sm:$0xff] %v5570
        %5603 = vst [vmem:[%s210 + $0xe8] sm:$0xff] %v5571
        %5604 = vst [vmem:[%s210 + $0xf0] sm:$0xff] %v5572
        %5605 = vst [vmem:[%s210 + $0xf8] sm:$0xff] %v5573
        %s5606 = sand.u32 %s126, 1
        %s5607 = scalar_lea.sflag [#allocation4], %s5606
        %s5608 = sand.u32 %s126, 1
        %s5609 = smul.addr %s5608, 256
        %s5610 = scalar_lea.vmem [#allocation3], %s5609
        // Predicated region
        $region33: #{tpu_custom_call.1} parent=31 // pred_check
          %p5611 = pneg %p136
        $region34: #{tpu_custom_call.1} parent=31 // pred_check_branch
          %5613 = sbr.rel (%p5611) target = $region36
        $region35: #{tpu_custom_call.1} parent=31 // pred_region
          %s5614 = smul.u32 16, %s23
          %5616 = vsyncadd %s5607, 0
          %s5617 = smul.addr %s5614, 2
          %s5618 = sadd.s32 %s24, %s5617
          %s5619 = smul.addr %s22, 32
          %s5620 = sadd.s32 %s5618, %s5619
          %s5621 = smul.addr %s5620, 8
          %s5622 = scalar_lea.hbm %s3, %s5621
          %s5623 = sshll.u32 %s5610, 4
          %s5624 = int_to_ptr.vmem [resolvable:$true] %s5623
          %s5625 = sshll.u32 %s5622, 4
          %s5626 = int_to_ptr.hbm [resolvable:$true] %s5625
          %5631 = dma.vmem_to_hbm [thread:$0]  %s5624, 4096, %s5626, %s5607, 128, 128, 8
        $region36: #{tpu_custom_call.1} parent=31 // pred_fallthru
          _
      $region32: #{tpu_custom_call.1} parent=5 // pred_fallthru
        _
      %p5632 = scmp.le.s32.totalorder 2, %s12
      // Predicated region
      $region37: #{tpu_custom_call.1} parent=5 // pred_check
        %p5633 = pneg %p5632
      $region38: #{tpu_custom_call.1} parent=5 // pred_check_branch
        %5635 = sbr.rel (%p5633) target = $region40
      $region39: #{tpu_custom_call.1} parent=5 // pred_region
        %s5636 = ssub.s32 %s12, 2
        // Predicated region
        $region41: #{tpu_custom_call.1} parent=39 // pred_check
          %p5637 = pneg %p142
        $region42: #{tpu_custom_call.1} parent=39 // pred_check_branch
          %5639 = sbr.rel (%p5637) target = $region44
        $region43: #{tpu_custom_call.1} parent=39 // pred_region
          %s5640 = sand.u32 %s127, 1
          %s5641 = scalar_lea.sflag [#allocation4], %s5640
          %s5642 = sand.u32 %s127, 1
          %s5643 = smul.addr %s5642, 256
          %s5644 = scalar_lea.vmem [#allocation3], %s5643
          %5646 = dma.done %s5641, 4096
        $region44: #{tpu_custom_call.1} parent=39 // pred_fallthru
          _
      $region40: #{tpu_custom_call.1} parent=5 // pred_fallthru
        _
    $region6: #{tpu_custom_call.1} parent=1 // loop_footer
      %s16 = sadd.s32 1, %s12
    $region7: #{tpu_custom_call.1} parent=1 // loop_footer_branch
      %11 = sbr.rel target = $region3
    $region8: #{tpu_custom_call.1} parent=1 // loop_exit
      _
    %5647 = vsyncpa [#allocation4], 1
    %s5648 = scalar_lea.sflag [#allocation4], 1
    %5649 = vsyncpa %s5648, 1

</llo_original>
